<compile_context>
chip_gen: v5e
topology: v5e:2x2
jax: 0.10.0
libtpu: 0.0.40
codegen_flags: <defaults>
</compile_context>

<pallas_src>
import functools

import jax
import jax.numpy as jnp
from jax.experimental import pallas as pl
from jax.experimental.pallas import tpu as pltpu

EPS = 1e-5
KSZ = 8          # unfold kernel / ConvTranspose1d kernel size
NUM_LAYERS = 4   # SRU layers (bidirectional)


def _pick_tile(n, cap=64):
    """N-tile: full N if small, else a divisor of N that is a multiple of 8."""
    if n <= cap:
        return n
    for t in range(cap, 7, -1):
        if n % t == 0 and t % 8 == 0:
            return t
    return n


# --------------------------- 1) ChannelNorm ---------------------------------

def _channel_norm_kernel(x_ref, g_ref, b_ref, o_ref):
    # x_ref: (bn, C, F); normalize over C for every (n, f) position.
    x = x_ref[...].astype(jnp.float32)
    mean = jnp.mean(x, axis=1, keepdims=True)                 # (bn, 1, F)
    var = jnp.mean((x - mean) ** 2, axis=1, keepdims=True)    # biased, as torch
    xhat = (x - mean) * jax.lax.rsqrt(var + EPS)
    o_ref[...] = (xhat * g_ref[...][None] + b_ref[...][None]).astype(o_ref.dtype)


def channel_norm(x_ncf, gamma_f, beta_f, bn):
    N, C, F = x_ncf.shape
    return pl.pallas_call(
        _channel_norm_kernel,
        out_shape=jax.ShapeDtypeStruct((N, C, F), jnp.float32),
        grid=(N // bn,),
        in_specs=[
            pl.BlockSpec((bn, C, F), lambda n: (n, 0, 0)),
            pl.BlockSpec((C, F), lambda n: (0, 0)),
            pl.BlockSpec((C, F), lambda n: (0, 0)),
        ],
        out_specs=pl.BlockSpec((bn, C, F), lambda n: (n, 0, 0)),
        compiler_params=pltpu.CompilerParams(dimension_semantics=("parallel",)),
    )(x_ncf, gamma_f, beta_f)


# ---------------------- 2) fused bidirectional SRU --------------------------

def _sru_bidir_recurrence(u_f_scr, u_b_scr, v_ref, b_ref, hf_ref, hb_ref,
                          L, bn, hdim):
    # v_ref/b_ref rows: [f_fwd, r_fwd, f_bwd, r_bwd]; cell state is a carry.
    v = v_ref[...]
    bb = b_ref[...]
    vf_f, vr_f, vf_b, vr_b = v[0:1], v[1:2], v[2:3], v[3:4]
    bf_f, br_f, bf_b, br_b = bb[0:1], bb[1:2], bb[2:3], bb[3:4]

    def step(t, carry):
        c_f, c_b = carry
        # forward direction, time index t
        u = u_f_scr[t]                                   # (bn, 4h) f32, contiguous
        z = u[:, 0 * hdim:1 * hdim]
        fp = u[:, 1 * hdim:2 * hdim]
        rp = u[:, 2 * hdim:3 * hdim]
        hw = u[:, 3 * hdim:4 * hdim]
        f = jax.nn.sigmoid(fp + vf_f * c_f + bf_f)
        r = jax.nn.sigmoid(rp + vr_f * c_f + br_f)
        c_f = f * c_f + (1.0 - f) * z
        hf_ref[t] = (r * c_f + (1.0 - r) * hw).astype(hf_ref.dtype)
        # backward direction, time index L-1-t (no wrapper-level reversal)
        s = L - 1 - t
        u = u_b_scr[s]
        z = u[:, 0 * hdim:1 * hdim]
        fp = u[:, 1 * hdim:2 * hdim]
        rp = u[:, 2 * hdim:3 * hdim]
        hw = u[:, 3 * hdim:4 * hdim]
        f = jax.nn.sigmoid(fp + vf_b * c_b + bf_b)
        r = jax.nn.sigmoid(rp + vr_b * c_b + br_b)
        c_b = f * c_b + (1.0 - f) * z
        hb_ref[s] = (r * c_b + (1.0 - r) * hw).astype(hb_ref.dtype)
        return (c_f, c_b)

    c0 = jnp.zeros((bn, hdim), jnp.float32)
    jax.lax.fori_loop(0, L, step, (c0, c0))


def _sru_first_kernel(xn_ref, wf_ref, wb_ref, v_ref, b_ref,
                      hf_ref, hb_ref, xt_scr, uf_scr, ub_scr):
    # Layer 1: fused nn.Unfold + bidirectional SRU.
    #   xn_ref: (bn, C, F) f32   wf/wb: (K*C, 4h) bf16 (rows ordered k*C + c)
    #   hf/hb:  (L, bn, h) bf16  xt_scr: (F, bn, C)   uf/ub: (L, bn, 4h)
    bn, C, F = xn_ref.shape
    L, _, hdim = hf_ref.shape

    # One in-VMEM transpose (bn*C, F) -> (F, bn*C), then per-n lane slices into
    # a (F, bn, C) scratch: this is the unfold feed, never materialized in HBM.
    xt_big = jnp.transpose(xn_ref[...].reshape(bn * C, F))     # (F, bn*C)
    for n in range(bn):                                        # bn is small/static
        xt_scr[:, n:n + 1, :] = xt_big[:, n * C:(n + 1) * C][:, None, :]
    xt = xt_scr[...]                                           # (F, bn, C)

    # unfold rows (l, n), cols k*C + c
    xrows = jnp.concatenate([xt[k:k + L] for k in range(KSZ)], axis=-1)
    xrows = xrows.reshape(L * bn, KSZ * C).astype(jnp.bfloat16)

    uf_scr[...] = jnp.dot(xrows, wf_ref[...],
                          preferred_element_type=jnp.float32).reshape(L, bn, 4 * hdim)
    ub_scr[...] = jnp.dot(xrows, wb_ref[...],
                          preferred_element_type=jnp.float32).reshape(L, bn, 4 * hdim)
    _sru_bidir_recurrence(uf_scr, ub_scr, v_ref, b_ref, hf_ref, hb_ref, L, bn, hdim)


def sru_first(xn, wf, wb, v, b, hdim, bn):
    N, C, F = xn.shape
    L = F - KSZ + 1
    wspec = pl.BlockSpec((KSZ * C, 4 * hdim), lambda n: (0, 0))
    pspec = pl.BlockSpec((4, hdim), lambda n: (0, 0))
    hspec = pl.BlockSpec((L, bn, hdim), lambda n: (0, n, 0))
    return pl.pallas_call(
        _sru_first_kernel,
        out_shape=(jax.ShapeDtypeStruct((L, N, hdim), jnp.bfloat16),
                   jax.ShapeDtypeStruct((L, N, hdim), jnp.bfloat16)),
        grid=(N // bn,),
        in_specs=[pl.BlockSpec((bn, C, F), lambda n: (n, 0, 0)),
                  wspec, wspec, pspec, pspec],
        out_specs=[hspec, hspec],
        scratch_shapes=[pltpu.VMEM((F, bn, C), jnp.float32),
                        pltpu.VMEM((L, bn, 4 * hdim), jnp.float32),
                        pltpu.VMEM((L, bn, 4 * hdim), jnp.float32)],
        compiler_params=pltpu.CompilerParams(dimension_semantics=("parallel",)),
    )(xn, wf, wb, v, b)


def _sru_mid_kernel(xa_ref, xb_ref, waf_ref, wbf_ref, wab_ref, wbb_ref,
                    v_ref, b_ref, hf_ref, hb_ref, uf_scr, ub_scr):
    # Layers 2..4: inputs are the previous layer's fwd/bwd streams (no concat);
    # the 2h-wide weight is row-split so x never has to be concatenated.
    L, bn, hdim = hf_ref.shape
    xa = xa_ref[...].reshape(L * bn, hdim)                 # bf16, (L*bn, h)
    xb = xb_ref[...].reshape(L * bn, hdim)
    uf = (jnp.dot(xa, waf_ref[...], preferred_element_type=jnp.float32)
          + jnp.dot(xb, wbf_ref[...], preferred_element_type=jnp.float32))
    ub = (jnp.dot(xa, wab_ref[...], preferred_element_type=jnp.float32)
          + jnp.dot(xb, wbb_ref[...], preferred_element_type=jnp.float32))
    uf_scr[...] = uf.reshape(L, bn, 4 * hdim)
    ub_scr[...] = ub.reshape(L, bn, 4 * hdim)
    _sru_bidir_recurrence(uf_scr, ub_scr, v_ref, b_ref, hf_ref, hb_ref, L, bn, hdim)


def sru_mid(hf, hb, waf, wbf, wab, wbb, v, b, hdim, bn):
    L, N, _ = hf.shape
    hspec = pl.BlockSpec((L, bn, hdim), lambda n: (0, n, 0))
    wspec = pl.BlockSpec((hdim, 4 * hdim), lambda n: (0, 0))
    pspec = pl.BlockSpec((4, hdim), lambda n: (0, 0))
    return pl.pallas_call(
        _sru_mid_kernel,
        out_shape=(jax.ShapeDtypeStruct((L, N, hdim), jnp.bfloat16),
                   jax.ShapeDtypeStruct((L, N, hdim), jnp.bfloat16)),
        grid=(N // bn,),
        in_specs=[hspec, hspec, wspec, wspec, wspec, wspec, pspec, pspec],
        out_specs=[hspec, hspec],
        scratch_shapes=[pltpu.VMEM((L, bn, 4 * hdim), jnp.float32),
                        pltpu.VMEM((L, bn, 4 * hdim), jnp.float32)],
        compiler_params=pltpu.CompilerParams(dimension_semantics=("parallel",)),
    )(hf, hb, waf, wbf, wab, wbb, v, b)


# ------------------ 3) ConvTranspose1d + bias + residual --------------------

def _conv_residual_kernel(hf_ref, hb_ref, wf_ref, wb_ref, bias_ref, res_ref, o_ref):
    #   hf/hb: (bn, L, h) bf16      wf/wb: (K*C, h) bf16 (row = k*C + c)
    #   bias:  (C, F) f32           res/o: (bn, C, F) f32  (lane-dense F)
    bn, L, hdim = hf_ref.shape
    C, F = bias_ref.shape
    KC = KSZ * C

    wf = jnp.broadcast_to(wf_ref[...][None], (bn, KC, hdim))
    wb = jnp.broadcast_to(wb_ref[...][None], (bn, KC, hdim))
    q = (jnp.einsum('nkd,nld->nkl', wf, hf_ref[...],
                    preferred_element_type=jnp.float32)
         + jnp.einsum('nkd,nld->nkl', wb, hb_ref[...],
                      preferred_element_type=jnp.float32))      # (bn, KC, L) f32

    # col2im fold accumulated in registers; o_ref written exactly once.
    acc = res_ref[...] + bias_ref[...][None]                    # (bn, C, F)
    for k in range(KSZ):
        qk = q[:, k * C:(k + 1) * C, :]                         # (bn, C, L)
        parts = []
        if k > 0:
            parts.append(jnp.zeros((bn, C, k), jnp.float32))
        parts.append(qk)
        if F - L - k > 0:
            parts.append(jnp.zeros((bn, C, F - L - k), jnp.float32))
        acc = acc + jnp.concatenate(parts, axis=-1)
    o_ref[...] = acc.astype(o_ref.dtype)


def conv_transpose_residual(hfT, hbT, wfT, wbT, bias_cf, res, bn):
    N, L, hdim = hfT.shape
    C, F = bias_cf.shape
    hspec = pl.BlockSpec((bn, L, hdim), lambda n: (n, 0, 0))
    wspec = pl.BlockSpec((KSZ * C, hdim), lambda n: (0, 0))
    return pl.pallas_call(
        _conv_residual_kernel,
        out_shape=jax.ShapeDtypeStruct((N, C, F), jnp.float32),
        grid=(N // bn,),
        in_specs=[hspec, hspec, wspec, wspec,
                  pl.BlockSpec((C, F), lambda n: (0, 0)),
                  pl.BlockSpec((bn, C, F), lambda n: (n, 0, 0))],
        out_specs=pl.BlockSpec((bn, C, F), lambda n: (n, 0, 0)),
        compiler_params=pltpu.CompilerParams(dimension_semantics=("parallel",)),
    )(hfT, hbT, wfT, wbT, bias_cf, res)


# ------------------------------ module glue ---------------------------------

def init_params(key, C, hidden):
    keys = jax.random.split(key, 64)
    it = iter(keys)

    def rnd(shape, scale):
        return scale * jax.random.normal(next(it), shape, dtype=jnp.float32)

    params = {
        "gamma": jnp.ones((C, 1), jnp.float32) + rnd((C, 1), 0.05),
        "beta": rnd((C, 1), 0.05),
        "sru": [],
        # PyTorch ConvTranspose1d weight layout: (in_channels, out_channels, K)
        "conv_w": rnd((2 * hidden, C, KSZ), 0.1),
        "conv_b": rnd((C,), 0.05),
    }
    d_in = C * KSZ
    for _ in range(NUM_LAYERS):
        layer = []
        for _direction in range(2):
            layer.append({
                "w": rnd((d_in, 4 * hidden), float(1.0 / (d_in ** 0.5))),
                "v": rnd((2, hidden), 0.1),
                "b": rnd((2, hidden), 0.05),
            })
        params["sru"].append(layer)
        d_in = 2 * hidden
    return params


def dprnn_block_forward(x, params, *, hidden):
    B, C, T, F = x.shape
    N = B * T
    h = hidden
    bn = _pick_tile(N)

    # (B, C, T, F) -> (N, C, F) with N = B*T (leading-dim reshuffle only).
    x_ncf = jnp.transpose(x, (0, 2, 1, 3)).reshape(N, C, F)

    # 1) ChannelNorm (batched over an N tile, lane-dense affine params).
    gamma_f = jnp.broadcast_to(params["gamma"], (C, F)).astype(jnp.float32)
    beta_f = jnp.broadcast_to(params["beta"], (C, F)).astype(jnp.float32)
    xn = channel_norm(x_ncf, gamma_f, beta_f, bn)               # (N, C, F) f32

    # 2+3) first SRU layer with the unfold fused in-kernel.
    pf, pb = params["sru"][0]

    def perm_unfold_rows(w):
        # torch unfold feature ordering is c*K + k; kernel expects k*C + c.
        return jnp.transpose(w.reshape(C, KSZ, 4 * h), (1, 0, 2)).reshape(KSZ * C, 4 * h)

    wf1 = perm_unfold_rows(pf["w"]).astype(jnp.bfloat16)
    wb1 = perm_unfold_rows(pb["w"]).astype(jnp.bfloat16)
    v1 = jnp.concatenate([pf["v"], pb["v"]], axis=0)            # (4, h)
    b1 = jnp.concatenate([pf["b"], pb["b"]], axis=0)
    hf, hb = sru_first(xn, wf1, wb1, v1, b1, h, bn)             # (L, N, h) x2

    # remaining bidirectional SRU layers (no concat / no reversal in wrapper).
    for layer in range(1, NUM_LAYERS):
        pf, pb = params["sru"][layer]
        waf = pf["w"][:h].astype(jnp.bfloat16)
        wbf = pf["w"][h:].astype(jnp.bfloat16)
        wab = pb["w"][:h].astype(jnp.bfloat16)
        wbb = pb["w"][h:].astype(jnp.bfloat16)
        v = jnp.concatenate([pf["v"], pb["v"]], axis=0)
        bparam = jnp.concatenate([pf["b"], pb["b"]], axis=0)
        hf, hb = sru_mid(hf, hb, waf, wbf, wab, wbb, v, bparam, h, bn)

    # 4) ConvTranspose1d(2h -> C, K=8) + bias + residual, lane-dense output.
    hfT = jnp.transpose(hf, (1, 0, 2))                          # (N, L, h)
    hbT = jnp.transpose(hb, (1, 0, 2))
    wflat = jnp.transpose(params["conv_w"], (2, 1, 0)).reshape(KSZ * C, 2 * h)
    wfT = wflat[:, :h].astype(jnp.bfloat16)                     # (K*C, h)
    wbT = wflat[:, h:].astype(jnp.bfloat16)
    bias_cf = jnp.broadcast_to(params["conv_b"][:, None], (C, F)).astype(jnp.float32)
    out_ncf = conv_transpose_residual(hfT, hbT, wfT, wbT, bias_cf, xn, bn)

    # back to PyTorch layout (B, C, T, F)
    return jnp.transpose(out_ncf.reshape(B, T, C, F), (0, 2, 1, 3))


if __name__ == "__main__":
    B, C, T, F = 2, 4, 8, 16
    hidden = 16

    key = jax.random.PRNGKey(0)
    kx, kp = jax.random.split(key)
    x = jax.random.normal(kx, (B, C, T, F), dtype=jnp.float32)
    params = init_params(kp, C, hidden)

    fwd = jax.jit(functools.partial(dprnn_block_forward, hidden=hidden))
    out = jax.block_until_ready(fwd(x, params))

    assert out.shape == (B, C, T, F), out.shape
    assert bool(jnp.all(jnp.isfinite(out)))
    print("KERNEL_OK")
</pallas_src>

<mosaic_0001>
module attributes {stable_mosaic.version = 11 : i64} {
  func.func @_channel_norm_kernel(%arg0: i32, %arg1: memref<16x4x16xf32, #tpu.memory_space<vmem>>, %arg2: memref<4x16xf32, #tpu.memory_space<vmem>>, %arg3: memref<4x16xf32, #tpu.memory_space<vmem>>, %arg4: memref<16x4x16xf32, #tpu.memory_space<vmem>>) attributes {dimension_semantics = [#tpu.dimension_semantics<parallel>], iteration_bounds = array<i64: 1>, scalar_prefetch = 0 : i64, scratch_operands = 0 : i64, tpu.core_type = #tpu.core_type<tc>, window_params = [{transform_indices = @transform_0, window_bounds = array<i64: 16, 4, 16>}, {pipeline_mode = #tpu.pipeline_mode<synchronous>, transform_indices = @transform_1, window_bounds = array<i64: 4, 16>}, {pipeline_mode = #tpu.pipeline_mode<synchronous>, transform_indices = @transform_2, window_bounds = array<i64: 4, 16>}, {transform_indices = @transform_3, window_bounds = array<i64: 16, 4, 16>}]} {
    %c0 = arith.constant 0 : index
    %c0_0 = arith.constant 0 : index
    %c0_1 = arith.constant 0 : index
    %0 = vector.load %arg1[%c0, %c0_0, %c0_1] : memref<16x4x16xf32, #tpu.memory_space<vmem>>, vector<16x4x16xf32>
    %cst = arith.constant dense<0.000000e+00> : vector<16x16xf32>
    %1 = vector.multi_reduction <add>, %0, %cst [1] : vector<16x4x16xf32> to vector<16x16xf32>
    %2 = vector.shape_cast %1 : vector<16x16xf32> to vector<16x1x16xf32>
    %cst_2 = arith.constant 4.000000e+00 : f32
    %3 = vector.broadcast %cst_2 : f32 to vector<16x1x16xf32>
    %4 = arith.divf %2, %3 : vector<16x1x16xf32>
    %5 = vector.broadcast %4 : vector<16x1x16xf32> to vector<16x4x16xf32>
    %6 = arith.subf %0, %5 : vector<16x4x16xf32>
    %7 = arith.mulf %6, %6 : vector<16x4x16xf32>
    %cst_3 = arith.constant dense<0.000000e+00> : vector<16x16xf32>
    %8 = vector.multi_reduction <add>, %7, %cst_3 [1] : vector<16x4x16xf32> to vector<16x16xf32>
    %9 = vector.shape_cast %8 : vector<16x16xf32> to vector<16x1x16xf32>
    %cst_4 = arith.constant 4.000000e+00 : f32
    %10 = vector.broadcast %cst_4 : f32 to vector<16x1x16xf32>
    %11 = arith.divf %9, %10 : vector<16x1x16xf32>
    %12 = vector.broadcast %4 : vector<16x1x16xf32> to vector<16x4x16xf32>
    %13 = arith.subf %0, %12 : vector<16x4x16xf32>
    %cst_5 = arith.constant 9.99999974E-6 : f32
    %14 = vector.broadcast %cst_5 : f32 to vector<16x1x16xf32>
    %15 = arith.addf %11, %14 : vector<16x1x16xf32>
    %16 = math.rsqrt %15 : vector<16x1x16xf32>
    %17 = vector.broadcast %16 : vector<16x1x16xf32> to vector<16x4x16xf32>
    %18 = arith.mulf %13, %17 : vector<16x4x16xf32>
    %c0_6 = arith.constant 0 : index
    %c0_7 = arith.constant 0 : index
    %19 = vector.load %arg2[%c0_6, %c0_7] : memref<4x16xf32, #tpu.memory_space<vmem>>, vector<4x16xf32>
    %20 = vector.shape_cast %19 : vector<4x16xf32> to vector<1x4x16xf32>
    %21 = vector.broadcast %20 : vector<1x4x16xf32> to vector<16x4x16xf32>
    %22 = arith.mulf %18, %21 : vector<16x4x16xf32>
    %c0_8 = arith.constant 0 : index
    %c0_9 = arith.constant 0 : index
    %23 = vector.load %arg3[%c0_8, %c0_9] : memref<4x16xf32, #tpu.memory_space<vmem>>, vector<4x16xf32>
    %24 = vector.shape_cast %23 : vector<4x16xf32> to vector<1x4x16xf32>
    %25 = vector.broadcast %24 : vector<1x4x16xf32> to vector<16x4x16xf32>
    %26 = arith.addf %22, %25 : vector<16x4x16xf32>
    %c0_10 = arith.constant 0 : index
    %c0_11 = arith.constant 0 : index
    %c0_12 = arith.constant 0 : index
    %27 = vector.load %arg4[%c0_10, %c0_11, %c0_12] : memref<16x4x16xf32, #tpu.memory_space<vmem>>, vector<16x4x16xf32>
    tpu.vector_store %arg4[%c0_10, %c0_11, %c0_12], %26 {strides = array<i32>} : memref<16x4x16xf32, #tpu.memory_space<vmem>>, vector<16x4x16xf32>,
    return
  }
  func.func @transform_0(%arg0: i32) -> (i32, i32, i32) {
    %c0_i32 = arith.constant 0 : i32
    %c0_i32_0 = arith.constant 0 : i32
    %c0_i32_1 = arith.constant 0 : i32
    return %arg0, %c0_i32, %c0_i32_0 : i32, i32, i32
  }
  func.func @transform_1(%arg0: i32) -> (i32, i32) {
    %c0_i32 = arith.constant 0 : i32
    %c0_i32_0 = arith.constant 0 : i32
    %c0_i32_1 = arith.constant 0 : i32
    return %c0_i32, %c0_i32_0 : i32, i32
  }
  func.func @transform_2(%arg0: i32) -> (i32, i32) {
    %c0_i32 = arith.constant 0 : i32
    %c0_i32_0 = arith.constant 0 : i32
    %c0_i32_1 = arith.constant 0 : i32
    return %c0_i32, %c0_i32_0 : i32, i32
  }
  func.func @transform_3(%arg0: i32) -> (i32, i32, i32) {
    %c0_i32 = arith.constant 0 : i32
    %c0_i32_0 = arith.constant 0 : i32
    %c0_i32_1 = arith.constant 0 : i32
    return %arg0, %c0_i32, %c0_i32_0 : i32, i32, i32
  }
}

module attributes {stable_mosaic.version = 11 : i64} {
  func.func @_sru_first_kernel(%arg0: i32, %arg1: memref<16x4x16xf32, #tpu.memory_space<vmem>>, %arg2: memref<32x64xbf16, #tpu.memory_space<vmem>>, %arg3: memref<32x64xbf16, #tpu.memory_space<vmem>>, %arg4: memref<4x16xf32, #tpu.memory_space<vmem>>, %arg5: memref<4x16xf32, #tpu.memory_space<vmem>>, %arg6: memref<9x16x16xbf16, #tpu.memory_space<vmem>>, %arg7: memref<9x16x16xbf16, #tpu.memory_space<vmem>>, %arg8: memref<16x16x4xf32, #tpu.memory_space<vmem>>, %arg9: memref<9x16x64xf32, #tpu.memory_space<vmem>>, %arg10: memref<9x16x64xf32, #tpu.memory_space<vmem>>) attributes {dimension_semantics = [#tpu.dimension_semantics<parallel>], iteration_bounds = array<i64: 1>, scalar_prefetch = 0 : i64, scratch_operands = 3 : i64, tpu.core_type = #tpu.core_type<tc>, window_params = [{transform_indices = @transform_0, window_bounds = array<i64: 16, 4, 16>}, {pipeline_mode = #tpu.pipeline_mode<synchronous>, transform_indices = @transform_1, window_bounds = array<i64: 32, 64>}, {pipeline_mode = #tpu.pipeline_mode<synchronous>, transform_indices = @transform_2, window_bounds = array<i64: 32, 64>}, {pipeline_mode = #tpu.pipeline_mode<synchronous>, transform_indices = @transform_3, window_bounds = array<i64: 4, 16>}, {pipeline_mode = #tpu.pipeline_mode<synchronous>, transform_indices = @transform_4, window_bounds = array<i64: 4, 16>}, {transform_indices = @transform_5, window_bounds = array<i64: 9, 16, 16>}, {transform_indices = @transform_6, window_bounds = array<i64: 9, 16, 16>}]} {
    %c0 = arith.constant 0 : index
    %c0_0 = arith.constant 0 : index
    %c0_1 = arith.constant 0 : index
    %0 = vector.load %arg1[%c0, %c0_0, %c0_1] : memref<16x4x16xf32, #tpu.memory_space<vmem>>, vector<16x4x16xf32>
    %1 = vector.shape_cast %0 : vector<16x4x16xf32> to vector<64x16xf32>
    %2 = tpu.transpose %1, [1, 0] : vector<64x16xf32> -> vector<16x64xf32>
    %3 = vector.extract_strided_slice %2 {offsets = [0, 0], sizes = [16, 4], strides = [1, 1]} : vector<16x64xf32> to vector<16x4xf32>
    %4 = vector.shape_cast %3 : vector<16x4xf32> to vector<16x1x4xf32>
    %c0_2 = arith.constant 0 : index
    %c0_3 = arith.constant 0 : index
    %c0_4 = arith.constant 0 : index
    %5 = vector.load %arg8[%c0_2, %c0_3, %c0_4] : memref<16x16x4xf32, #tpu.memory_space<vmem>>, vector<16x1x4xf32>
    tpu.vector_store %arg8[%c0_2, %c0_3, %c0_4], %4 {strides = array<i32>} : memref<16x16x4xf32, #tpu.memory_space<vmem>>, vector<16x1x4xf32>,
    %6 = vector.extract_strided_slice %2 {offsets = [0, 4], sizes = [16, 4], strides = [1, 1]} : vector<16x64xf32> to vector<16x4xf32>
    %7 = vector.shape_cast %6 : vector<16x4xf32> to vector<16x1x4xf32>
    %c0_5 = arith.constant 0 : index
    %c1 = arith.constant 1 : index
    %c0_6 = arith.constant 0 : index
    %8 = vector.load %arg8[%c0_5, %c1, %c0_6] : memref<16x16x4xf32, #tpu.memory_space<vmem>>, vector<16x1x4xf32>
    tpu.vector_store %arg8[%c0_5, %c1, %c0_6], %7 {strides = array<i32>} : memref<16x16x4xf32, #tpu.memory_space<vmem>>, vector<16x1x4xf32>,
    %9 = vector.extract_strided_slice %2 {offsets = [0, 8], sizes = [16, 4], strides = [1, 1]} : vector<16x64xf32> to vector<16x4xf32>
    %10 = vector.shape_cast %9 : vector<16x4xf32> to vector<16x1x4xf32>
    %c0_7 = arith.constant 0 : index
    %c2 = arith.constant 2 : index
    %c0_8 = arith.constant 0 : index
    %11 = vector.load %arg8[%c0_7, %c2, %c0_8] : memref<16x16x4xf32, #tpu.memory_space<vmem>>, vector<16x1x4xf32>
    tpu.vector_store %arg8[%c0_7, %c2, %c0_8], %10 {strides = array<i32>} : memref<16x16x4xf32, #tpu.memory_space<vmem>>, vector<16x1x4xf32>,
    %12 = vector.extract_strided_slice %2 {offsets = [0, 12], sizes = [16, 4], strides = [1, 1]} : vector<16x64xf32> to vector<16x4xf32>
    %13 = vector.shape_cast %12 : vector<16x4xf32> to vector<16x1x4xf32>
    %c0_9 = arith.constant 0 : index
    %c3 = arith.constant 3 : index
    %c0_10 = arith.constant 0 : index
    %14 = vector.load %arg8[%c0_9, %c3, %c0_10] : memref<16x16x4xf32, #tpu.memory_space<vmem>>, vector<16x1x4xf32>
    tpu.vector_store %arg8[%c0_9, %c3, %c0_10], %13 {strides = array<i32>} : memref<16x16x4xf32, #tpu.memory_space<vmem>>, vector<16x1x4xf32>,
    %15 = vector.extract_strided_slice %2 {offsets = [0, 16], sizes = [16, 4], strides = [1, 1]} : vector<16x64xf32> to vector<16x4xf32>
    %16 = vector.shape_cast %15 : vector<16x4xf32> to vector<16x1x4xf32>
    %c0_11 = arith.constant 0 : index
    %c4 = arith.constant 4 : index
    %c0_12 = arith.constant 0 : index
    %17 = vector.load %arg8[%c0_11, %c4, %c0_12] : memref<16x16x4xf32, #tpu.memory_space<vmem>>, vector<16x1x4xf32>
    tpu.vector_store %arg8[%c0_11, %c4, %c0_12], %16 {strides = array<i32>} : memref<16x16x4xf32, #tpu.memory_space<vmem>>, vector<16x1x4xf32>,
    %18 = vector.extract_strided_slice %2 {offsets = [0, 20], sizes = [16, 4], strides = [1, 1]} : vector<16x64xf32> to vector<16x4xf32>
    %19 = vector.shape_cast %18 : vector<16x4xf32> to vector<16x1x4xf32>
    %c0_13 = arith.constant 0 : index
    %c5 = arith.constant 5 : index
    %c0_14 = arith.constant 0 : index
    %20 = vector.load %arg8[%c0_13, %c5, %c0_14] : memref<16x16x4xf32, #tpu.memory_space<vmem>>, vector<16x1x4xf32>
    tpu.vector_store %arg8[%c0_13, %c5, %c0_14], %19 {strides = array<i32>} : memref<16x16x4xf32, #tpu.memory_space<vmem>>, vector<16x1x4xf32>,
    %21 = vector.extract_strided_slice %2 {offsets = [0, 24], sizes = [16, 4], strides = [1, 1]} : vector<16x64xf32> to vector<16x4xf32>
    %22 = vector.shape_cast %21 : vector<16x4xf32> to vector<16x1x4xf32>
    %c0_15 = arith.constant 0 : index
    %c6 = arith.constant 6 : index
    %c0_16 = arith.constant 0 : index
    %23 = vector.load %arg8[%c0_15, %c6, %c0_16] : memref<16x16x4xf32, #tpu.memory_space<vmem>>, vector<16x1x4xf32>
    tpu.vector_store %arg8[%c0_15, %c6, %c0_16], %22 {strides = array<i32>} : memref<16x16x4xf32, #tpu.memory_space<vmem>>, vector<16x1x4xf32>,
    %24 = vector.extract_strided_slice %2 {offsets = [0, 28], sizes = [16, 4], strides = [1, 1]} : vector<16x64xf32> to vector<16x4xf32>
    %25 = vector.shape_cast %24 : vector<16x4xf32> to vector<16x1x4xf32>
    %c0_17 = arith.constant 0 : index
    %c7 = arith.constant 7 : index
    %c0_18 = arith.constant 0 : index
    %26 = vector.load %arg8[%c0_17, %c7, %c0_18] : memref<16x16x4xf32, #tpu.memory_space<vmem>>, vector<16x1x4xf32>
    tpu.vector_store %arg8[%c0_17, %c7, %c0_18], %25 {strides = array<i32>} : memref<16x16x4xf32, #tpu.memory_space<vmem>>, vector<16x1x4xf32>,
    %27 = vector.extract_strided_slice %2 {offsets = [0, 32], sizes = [16, 4], strides = [1, 1]} : vector<16x64xf32> to vector<16x4xf32>
    %28 = vector.shape_cast %27 : vector<16x4xf32> to vector<16x1x4xf32>
    %c0_19 = arith.constant 0 : index
    %c8 = arith.constant 8 : index
    %c0_20 = arith.constant 0 : index
    %29 = vector.load %arg8[%c0_19, %c8, %c0_20] : memref<16x16x4xf32, #tpu.memory_space<vmem>>, vector<16x1x4xf32>
    tpu.vector_store %arg8[%c0_19, %c8, %c0_20], %28 {strides = array<i32>} : memref<16x16x4xf32, #tpu.memory_space<vmem>>, vector<16x1x4xf32>,
    %30 = vector.extract_strided_slice %2 {offsets = [0, 36], sizes = [16, 4], strides = [1, 1]} : vector<16x64xf32> to vector<16x4xf32>
    %31 = vector.shape_cast %30 : vector<16x4xf32> to vector<16x1x4xf32>
    %c0_21 = arith.constant 0 : index
    %c9 = arith.constant 9 : index
    %c0_22 = arith.constant 0 : index
    %32 = vector.load %arg8[%c0_21, %c9, %c0_22] : memref<16x16x4xf32, #tpu.memory_space<vmem>>, vector<16x1x4xf32>
    tpu.vector_store %arg8[%c0_21, %c9, %c0_22], %31 {strides = array<i32>} : memref<16x16x4xf32, #tpu.memory_space<vmem>>, vector<16x1x4xf32>,
    %33 = vector.extract_strided_slice %2 {offsets = [0, 40], sizes = [16, 4], strides = [1, 1]} : vector<16x64xf32> to vector<16x4xf32>
    %34 = vector.shape_cast %33 : vector<16x4xf32> to vector<16x1x4xf32>
    %c0_23 = arith.constant 0 : index
    %c10 = arith.constant 10 : index
    %c0_24 = arith.constant 0 : index
    %35 = vector.load %arg8[%c0_23, %c10, %c0_24] : memref<16x16x4xf32, #tpu.memory_space<vmem>>, vector<16x1x4xf32>
    tpu.vector_store %arg8[%c0_23, %c10, %c0_24], %34 {strides = array<i32>} : memref<16x16x4xf32, #tpu.memory_space<vmem>>, vector<16x1x4xf32>,
    %36 = vector.extract_strided_slice %2 {offsets = [0, 44], sizes = [16, 4], strides = [1, 1]} : vector<16x64xf32> to vector<16x4xf32>
    %37 = vector.shape_cast %36 : vector<16x4xf32> to vector<16x1x4xf32>
    %c0_25 = arith.constant 0 : index
    %c11 = arith.constant 11 : index
    %c0_26 = arith.constant 0 : index
    %38 = vector.load %arg8[%c0_25, %c11, %c0_26] : memref<16x16x4xf32, #tpu.memory_space<vmem>>, vector<16x1x4xf32>
    tpu.vector_store %arg8[%c0_25, %c11, %c0_26], %37 {strides = array<i32>} : memref<16x16x4xf32, #tpu.memory_space<vmem>>, vector<16x1x4xf32>,
    %39 = vector.extract_strided_slice %2 {offsets = [0, 48], sizes = [16, 4], strides = [1, 1]} : vector<16x64xf32> to vector<16x4xf32>
    %40 = vector.shape_cast %39 : vector<16x4xf32> to vector<16x1x4xf32>
    %c0_27 = arith.constant 0 : index
    %c12 = arith.constant 12 : index
    %c0_28 = arith.constant 0 : index
    %41 = vector.load %arg8[%c0_27, %c12, %c0_28] : memref<16x16x4xf32, #tpu.memory_space<vmem>>, vector<16x1x4xf32>
    tpu.vector_store %arg8[%c0_27, %c12, %c0_28], %40 {strides = array<i32>} : memref<16x16x4xf32, #tpu.memory_space<vmem>>, vector<16x1x4xf32>,
    %42 = vector.extract_strided_slice %2 {offsets = [0, 52], sizes = [16, 4], strides = [1, 1]} : vector<16x64xf32> to vector<16x4xf32>
    %43 = vector.shape_cast %42 : vector<16x4xf32> to vector<16x1x4xf32>
    %c0_29 = arith.constant 0 : index
    %c13 = arith.constant 13 : index
    %c0_30 = arith.constant 0 : index
    %44 = vector.load %arg8[%c0_29, %c13, %c0_30] : memref<16x16x4xf32, #tpu.memory_space<vmem>>, vector<16x1x4xf32>
    tpu.vector_store %arg8[%c0_29, %c13, %c0_30], %43 {strides = array<i32>} : memref<16x16x4xf32, #tpu.memory_space<vmem>>, vector<16x1x4xf32>,
    %45 = vector.extract_strided_slice %2 {offsets = [0, 56], sizes = [16, 4], strides = [1, 1]} : vector<16x64xf32> to vector<16x4xf32>
    %46 = vector.shape_cast %45 : vector<16x4xf32> to vector<16x1x4xf32>
    %c0_31 = arith.constant 0 : index
    %c14 = arith.constant 14 : index
    %c0_32 = arith.constant 0 : index
    %47 = vector.load %arg8[%c0_31, %c14, %c0_32] : memref<16x16x4xf32, #tpu.memory_space<vmem>>, vector<16x1x4xf32>
    tpu.vector_store %arg8[%c0_31, %c14, %c0_32], %46 {strides = array<i32>} : memref<16x16x4xf32, #tpu.memory_space<vmem>>, vector<16x1x4xf32>,
    %48 = vector.extract_strided_slice %2 {offsets = [0, 60], sizes = [16, 4], strides = [1, 1]} : vector<16x64xf32> to vector<16x4xf32>
    %49 = vector.shape_cast %48 : vector<16x4xf32> to vector<16x1x4xf32>
    %c0_33 = arith.constant 0 : index
    %c15 = arith.constant 15 : index
    %c0_34 = arith.constant 0 : index
    %50 = vector.load %arg8[%c0_33, %c15, %c0_34] : memref<16x16x4xf32, #tpu.memory_space<vmem>>, vector<16x1x4xf32>
    tpu.vector_store %arg8[%c0_33, %c15, %c0_34], %49 {strides = array<i32>} : memref<16x16x4xf32, #tpu.memory_space<vmem>>, vector<16x1x4xf32>,
    %c0_35 = arith.constant 0 : index
    %c0_36 = arith.constant 0 : index
    %c0_37 = arith.constant 0 : index
    %51 = vector.load %arg8[%c0_35, %c0_36, %c0_37] : memref<16x16x4xf32, #tpu.memory_space<vmem>>, vector<16x16x4xf32>
    %52 = vector.extract_strided_slice %51 {offsets = [0, 0, 0], sizes = [9, 16, 4], strides = [1, 1, 1]} : vector<16x16x4xf32> to vector<9x16x4xf32>
    %53 = vector.extract_strided_slice %51 {offsets = [1, 0, 0], sizes = [9, 16, 4], strides = [1, 1, 1]} : vector<16x16x4xf32> to vector<9x16x4xf32>
    %54 = vector.extract_strided_slice %51 {offsets = [2, 0, 0], sizes = [9, 16, 4], strides = [1, 1, 1]} : vector<16x16x4xf32> to vector<9x16x4xf32>
    %55 = vector.extract_strided_slice %51 {offsets = [3, 0, 0], sizes = [9, 16, 4], strides = [1, 1, 1]} : vector<16x16x4xf32> to vector<9x16x4xf32>
    %56 = vector.extract_strided_slice %51 {offsets = [4, 0, 0], sizes = [9, 16, 4], strides = [1, 1, 1]} : vector<16x16x4xf32> to vector<9x16x4xf32>
    %57 = vector.extract_strided_slice %51 {offsets = [5, 0, 0], sizes = [9, 16, 4], strides = [1, 1, 1]} : vector<16x16x4xf32> to vector<9x16x4xf32>
    %58 = vector.extract_strided_slice %51 {offsets = [6, 0, 0], sizes = [9, 16, 4], strides = [1, 1, 1]} : vector<16x16x4xf32> to vector<9x16x4xf32>
    %59 = vector.extract_strided_slice %51 {offsets = [7, 0, 0], sizes = [9, 16, 4], strides = [1, 1, 1]} : vector<16x16x4xf32> to vector<9x16x4xf32>
    %60 = tpu.concatenate %52, %53, %54, %55, %56, %57, %58, %59 in 2 : vector<9x16x4xf32>, vector<9x16x4xf32>, vector<9x16x4xf32>, vector<9x16x4xf32>, vector<9x16x4xf32>, vector<9x16x4xf32>, vector<9x16x4xf32>, vector<9x16x4xf32> -> vector<9x16x32xf32>
    %61 = vector.shape_cast %60 : vector<9x16x32xf32> to vector<144x32xf32>
    %62 = arith.truncf %61 : vector<144x32xf32> to vector<144x32xbf16>
    %c0_38 = arith.constant 0 : index
    %c0_39 = arith.constant 0 : index
    %63 = vector.load %arg2[%c0_38, %c0_39] : memref<32x64xbf16, #tpu.memory_space<vmem>>, vector<32x64xbf16>
    %cst = arith.constant dense<0.000000e+00> : vector<144x64xf32>
    %64 = tpu.matmul %62, %63, %cst {dimension_numbers = #tpu.dot_dimension_numbers<[1], [0], [0], [1], [0, 0, 1, 1], [], []>} : vector<144x32xbf16>, vector<32x64xbf16>, vector<144x64xf32> -> vector<144x64xf32>
    %65 = vector.shape_cast %64 : vector<144x64xf32> to vector<9x16x64xf32>
    %c0_40 = arith.constant 0 : index
    %c0_41 = arith.constant 0 : index
    %c0_42 = arith.constant 0 : index
    %66 = vector.load %arg9[%c0_40, %c0_41, %c0_42] : memref<9x16x64xf32, #tpu.memory_space<vmem>>, vector<9x16x64xf32>
    tpu.vector_store %arg9[%c0_40, %c0_41, %c0_42], %65 {strides = array<i32>} : memref<9x16x64xf32, #tpu.memory_space<vmem>>, vector<9x16x64xf32>,
    %c0_43 = arith.constant 0 : index
    %c0_44 = arith.constant 0 : index
    %67 = vector.load %arg3[%c0_43, %c0_44] : memref<32x64xbf16, #tpu.memory_space<vmem>>, vector<32x64xbf16>
    %cst_45 = arith.constant dense<0.000000e+00> : vector<144x64xf32>
    %68 = tpu.matmul %62, %67, %cst_45 {dimension_numbers = #tpu.dot_dimension_numbers<[1], [0], [0], [1], [0, 0, 1, 1], [], []>} : vector<144x32xbf16>, vector<32x64xbf16>, vector<144x64xf32> -> vector<144x64xf32>
    %69 = vector.shape_cast %68 : vector<144x64xf32> to vector<9x16x64xf32>
    %c0_46 = arith.constant 0 : index
    %c0_47 = arith.constant 0 : index
    %c0_48 = arith.constant 0 : index
    %70 = vector.load %arg10[%c0_46, %c0_47, %c0_48] : memref<9x16x64xf32, #tpu.memory_space<vmem>>, vector<9x16x64xf32>
    tpu.vector_store %arg10[%c0_46, %c0_47, %c0_48], %69 {strides = array<i32>} : memref<9x16x64xf32, #tpu.memory_space<vmem>>, vector<9x16x64xf32>,
    %c0_49 = arith.constant 0 : index
    %c0_50 = arith.constant 0 : index
    %71 = vector.load %arg4[%c0_49, %c0_50] : memref<4x16xf32, #tpu.memory_space<vmem>>, vector<4x16xf32>
    %c0_51 = arith.constant 0 : index
    %c0_52 = arith.constant 0 : index
    %72 = vector.load %arg5[%c0_51, %c0_52] : memref<4x16xf32, #tpu.memory_space<vmem>>, vector<4x16xf32>
    %73 = vector.extract_strided_slice %71 {offsets = [0, 0], sizes = [1, 16], strides = [1, 1]} : vector<4x16xf32> to vector<1x16xf32>
    %74 = vector.extract_strided_slice %71 {offsets = [1, 0], sizes = [1, 16], strides = [1, 1]} : vector<4x16xf32> to vector<1x16xf32>
    %75 = vector.extract_strided_slice %71 {offsets = [2, 0], sizes = [1, 16], strides = [1, 1]} : vector<4x16xf32> to vector<1x16xf32>
    %76 = vector.extract_strided_slice %71 {offsets = [3, 0], sizes = [1, 16], strides = [1, 1]} : vector<4x16xf32> to vector<1x16xf32>
    %77 = vector.extract_strided_slice %72 {offsets = [0, 0], sizes = [1, 16], strides = [1, 1]} : vector<4x16xf32> to vector<1x16xf32>
    %78 = vector.extract_strided_slice %72 {offsets = [1, 0], sizes = [1, 16], strides = [1, 1]} : vector<4x16xf32> to vector<1x16xf32>
    %79 = vector.extract_strided_slice %72 {offsets = [2, 0], sizes = [1, 16], strides = [1, 1]} : vector<4x16xf32> to vector<1x16xf32>
    %80 = vector.extract_strided_slice %72 {offsets = [3, 0], sizes = [1, 16], strides = [1, 1]} : vector<4x16xf32> to vector<1x16xf32>
    %cst_53 = arith.constant 0.000000e+00 : f32
    %81 = vector.broadcast %cst_53 : f32 to vector<16x16xf32>
    %c0_i32 = arith.constant 0 : i32
    %c9_i32 = arith.constant 9 : i32
    %82 = arith.addi %c0_i32, %c9_i32 : i32
    %c1_i32 = arith.constant 1 : i32
    %83:2 = scf.for %arg11 = %c0_i32 to %82 step %c1_i32 iter_args(%arg12 = %81, %arg13 = %81) -> (vector<16x16xf32>, vector<16x16xf32>)  : i32 {
      %84 = arith.index_cast %arg11 : i32 to index
      %c0_55 = arith.constant 0 : index
      %c0_56 = arith.constant 0 : index
      %85 = vector.load %arg9[%84, %c0_55, %c0_56] : memref<9x16x64xf32, #tpu.memory_space<vmem>>, vector<1x16x64xf32>
      %86 = vector.shape_cast %85 : vector<1x16x64xf32> to vector<16x64xf32>
      %87 = vector.extract_strided_slice %86 {offsets = [0, 0], sizes = [16, 16], strides = [1, 1]} : vector<16x64xf32> to vector<16x16xf32>
      %88 = vector.extract_strided_slice %86 {offsets = [0, 16], sizes = [16, 16], strides = [1, 1]} : vector<16x64xf32> to vector<16x16xf32>
      %89 = vector.extract_strided_slice %86 {offsets = [0, 32], sizes = [16, 16], strides = [1, 1]} : vector<16x64xf32> to vector<16x16xf32>
      %90 = vector.extract_strided_slice %86 {offsets = [0, 48], sizes = [16, 16], strides = [1, 1]} : vector<16x64xf32> to vector<16x16xf32>
      %91 = vector.broadcast %73 : vector<1x16xf32> to vector<16x16xf32>
      %92 = arith.mulf %91, %arg12 : vector<16x16xf32>
      %93 = arith.addf %88, %92 : vector<16x16xf32>
      %94 = vector.broadcast %77 : vector<1x16xf32> to vector<16x16xf32>
      %95 = arith.addf %93, %94 : vector<16x16xf32>
      %96 = arith.negf %95 : vector<16x16xf32>
      %97 = math.exp %96 : vector<16x16xf32>
      %cst_57 = arith.constant 1.000000e+00 : f32
      %98 = vector.broadcast %cst_57 : f32 to vector<16x16xf32>
      %99 = arith.addf %98, %97 : vector<16x16xf32>
      %100 = arith.divf %98, %99 : vector<16x16xf32>
      %101 = vector.broadcast %74 : vector<1x16xf32> to vector<16x16xf32>
      %102 = arith.mulf %101, %arg12 : vector<16x16xf32>
      %103 = arith.addf %89, %102 : vector<16x16xf32>
      %104 = vector.broadcast %78 : vector<1x16xf32> to vector<16x16xf32>
      %105 = arith.addf %103, %104 : vector<16x16xf32>
      %106 = arith.negf %105 : vector<16x16xf32>
      %107 = math.exp %106 : vector<16x16xf32>
      %cst_58 = arith.constant 1.000000e+00 : f32
      %108 = vector.broadcast %cst_58 : f32 to vector<16x16xf32>
      %109 = arith.addf %108, %107 : vector<16x16xf32>
      %110 = arith.divf %108, %109 : vector<16x16xf32>
      %111 = arith.mulf %100, %arg12 : vector<16x16xf32>
      %cst_59 = arith.constant 1.000000e+00 : f32
      %112 = vector.broadcast %cst_59 : f32 to vector<16x16xf32>
      %113 = arith.subf %112, %100 : vector<16x16xf32>
      %114 = arith.mulf %113, %87 : vector<16x16xf32>
      %115 = arith.addf %111, %114 : vector<16x16xf32>
      %116 = arith.mulf %110, %115 : vector<16x16xf32>
      %cst_60 = arith.constant 1.000000e+00 : f32
      %117 = vector.broadcast %cst_60 : f32 to vector<16x16xf32>
      %118 = arith.subf %117, %110 : vector<16x16xf32>
      %119 = arith.mulf %118, %90 : vector<16x16xf32>
      %120 = arith.addf %116, %119 : vector<16x16xf32>
      %121 = arith.truncf %120 : vector<16x16xf32> to vector<16x16xbf16>
      %122 = arith.index_cast %arg11 : i32 to index
      %c0_61 = arith.constant 0 : index
      %c0_62 = arith.constant 0 : index
      %123 = vector.load %arg6[%122, %c0_61, %c0_62] : memref<9x16x16xbf16, #tpu.memory_space<vmem>>, vector<1x16x16xbf16>
      %124 = vector.shape_cast %123 : vector<1x16x16xbf16> to vector<16x16xbf16>
      %125 = vector.shape_cast %121 : vector<16x16xbf16> to vector<1x16x16xbf16>
      tpu.vector_store %arg6[%122, %c0_61, %c0_62], %125 {strides = array<i32>} : memref<9x16x16xbf16, #tpu.memory_space<vmem>>, vector<1x16x16xbf16>,
      %c8_i32 = arith.constant 8 : i32
      %126 = arith.subi %c8_i32, %arg11 : i32
      %127 = arith.index_cast %126 : i32 to index
      %c0_63 = arith.constant 0 : index
      %c0_64 = arith.constant 0 : index
      %128 = vector.load %arg10[%127, %c0_63, %c0_64] : memref<9x16x64xf32, #tpu.memory_space<vmem>>, vector<1x16x64xf32>
      %129 = vector.shape_cast %128 : vector<1x16x64xf32> to vector<16x64xf32>
      %130 = vector.extract_strided_slice %129 {offsets = [0, 0], sizes = [16, 16], strides = [1, 1]} : vector<16x64xf32> to vector<16x16xf32>
      %131 = vector.extract_strided_slice %129 {offsets = [0, 16], sizes = [16, 16], strides = [1, 1]} : vector<16x64xf32> to vector<16x16xf32>
      %132 = vector.extract_strided_slice %129 {offsets = [0, 32], sizes = [16, 16], strides = [1, 1]} : vector<16x64xf32> to vector<16x16xf32>
      %133 = vector.extract_strided_slice %129 {offsets = [0, 48], sizes = [16, 16], strides = [1, 1]} : vector<16x64xf32> to vector<16x16xf32>
      %134 = vector.broadcast %75 : vector<1x16xf32> to vector<16x16xf32>
      %135 = arith.mulf %134, %arg13 : vector<16x16xf32>
      %136 = arith.addf %131, %135 : vector<16x16xf32>
      %137 = vector.broadcast %79 : vector<1x16xf32> to vector<16x16xf32>
      %138 = arith.addf %136, %137 : vector<16x16xf32>
      %139 = arith.negf %138 : vector<16x16xf32>
      %140 = math.exp %139 : vector<16x16xf32>
      %cst_65 = arith.constant 1.000000e+00 : f32
      %141 = vector.broadcast %cst_65 : f32 to vector<16x16xf32>
      %142 = arith.addf %141, %140 : vector<16x16xf32>
      %143 = arith.divf %141, %142 : vector<16x16xf32>
      %144 = vector.broadcast %76 : vector<1x16xf32> to vector<16x16xf32>
      %145 = arith.mulf %144, %arg13 : vector<16x16xf32>
      %146 = arith.addf %132, %145 : vector<16x16xf32>
      %147 = vector.broadcast %80 : vector<1x16xf32> to vector<16x16xf32>
      %148 = arith.addf %146, %147 : vector<16x16xf32>
      %149 = arith.negf %148 : vector<16x16xf32>
      %150 = math.exp %149 : vector<16x16xf32>
      %cst_66 = arith.constant 1.000000e+00 : f32
      %151 = vector.broadcast %cst_66 : f32 to vector<16x16xf32>
      %152 = arith.addf %151, %150 : vector<16x16xf32>
      %153 = arith.divf %151, %152 : vector<16x16xf32>
      %154 = arith.mulf %143, %arg13 : vector<16x16xf32>
      %cst_67 = arith.constant 1.000000e+00 : f32
      %155 = vector.broadcast %cst_67 : f32 to vector<16x16xf32>
      %156 = arith.subf %155, %143 : vector<16x16xf32>
      %157 = arith.mulf %156, %130 : vector<16x16xf32>
      %158 = arith.addf %154, %157 : vector<16x16xf32>
      %159 = arith.mulf %153, %158 : vector<16x16xf32>
      %cst_68 = arith.constant 1.000000e+00 : f32
      %160 = vector.broadcast %cst_68 : f32 to vector<16x16xf32>
      %161 = arith.subf %160, %153 : vector<16x16xf32>
      %162 = arith.mulf %161, %133 : vector<16x16xf32>
      %163 = arith.addf %159, %162 : vector<16x16xf32>
      %164 = arith.truncf %163 : vector<16x16xf32> to vector<16x16xbf16>
      %165 = arith.index_cast %126 : i32 to index
      %c0_69 = arith.constant 0 : index
      %c0_70 = arith.constant 0 : index
      %166 = vector.load %arg7[%165, %c0_69, %c0_70] : memref<9x16x16xbf16, #tpu.memory_space<vmem>>, vector<1x16x16xbf16>
      %167 = vector.shape_cast %166 : vector<1x16x16xbf16> to vector<16x16xbf16>
      %168 = vector.shape_cast %164 : vector<16x16xbf16> to vector<1x16x16xbf16>
      tpu.vector_store %arg7[%165, %c0_69, %c0_70], %168 {strides = array<i32>} : memref<9x16x16xbf16, #tpu.memory_space<vmem>>, vector<1x16x16xbf16>,
      scf.yield %115, %158 : vector<16x16xf32>, vector<16x16xf32>
    }
    %c9_i32_54 = arith.constant 9 : i32
    return
  }
  func.func @transform_0(%arg0: i32) -> (i32, i32, i32) {
    %c0_i32 = arith.constant 0 : i32
    %c0_i32_0 = arith.constant 0 : i32
    %c0_i32_1 = arith.constant 0 : i32
    return %arg0, %c0_i32, %c0_i32_0 : i32, i32, i32
  }
  func.func @transform_1(%arg0: i32) -> (i32, i32) {
    %c0_i32 = arith.constant 0 : i32
    %c0_i32_0 = arith.constant 0 : i32
    %c0_i32_1 = arith.constant 0 : i32
    return %c0_i32, %c0_i32_0 : i32, i32
  }
  func.func @transform_2(%arg0: i32) -> (i32, i32) {
    %c0_i32 = arith.constant 0 : i32
    %c0_i32_0 = arith.constant 0 : i32
    %c0_i32_1 = arith.constant 0 : i32
    return %c0_i32, %c0_i32_0 : i32, i32
  }
  func.func @transform_3(%arg0: i32) -> (i32, i32) {
    %c0_i32 = arith.constant 0 : i32
    %c0_i32_0 = arith.constant 0 : i32
    %c0_i32_1 = arith.constant 0 : i32
    return %c0_i32, %c0_i32_0 : i32, i32
  }
  func.func @transform_4(%arg0: i32) -> (i32, i32) {
    %c0_i32 = arith.constant 0 : i32
    %c0_i32_0 = arith.constant 0 : i32
    %c0_i32_1 = arith.constant 0 : i32
    return %c0_i32, %c0_i32_0 : i32, i32
  }
  func.func @transform_5(%arg0: i32) -> (i32, i32, i32) {
    %c0_i32 = arith.constant 0 : i32
    %c0_i32_0 = arith.constant 0 : i32
    %c0_i32_1 = arith.constant 0 : i32
    return %c0_i32, %arg0, %c0_i32_0 : i32, i32, i32
  }
  func.func @transform_6(%arg0: i32) -> (i32, i32, i32) {
    %c0_i32 = arith.constant 0 : i32
    %c0_i32_0 = arith.constant 0 : i32
    %c0_i32_1 = arith.constant 0 : i32
    return %c0_i32, %arg0, %c0_i32_0 : i32, i32, i32
  }
}

module attributes {stable_mosaic.version = 11 : i64} {
  func.func @_sru_mid_kernel(%arg0: i32, %arg1: memref<9x16x16xbf16, #tpu.memory_space<vmem>>, %arg2: memref<9x16x16xbf16, #tpu.memory_space<vmem>>, %arg3: memref<16x64xbf16, #tpu.memory_space<vmem>>, %arg4: memref<16x64xbf16, #tpu.memory_space<vmem>>, %arg5: memref<16x64xbf16, #tpu.memory_space<vmem>>, %arg6: memref<16x64xbf16, #tpu.memory_space<vmem>>, %arg7: memref<4x16xf32, #tpu.memory_space<vmem>>, %arg8: memref<4x16xf32, #tpu.memory_space<vmem>>, %arg9: memref<9x16x16xbf16, #tpu.memory_space<vmem>>, %arg10: memref<9x16x16xbf16, #tpu.memory_space<vmem>>, %arg11: memref<9x16x64xf32, #tpu.memory_space<vmem>>, %arg12: memref<9x16x64xf32, #tpu.memory_space<vmem>>) attributes {dimension_semantics = [#tpu.dimension_semantics<parallel>], iteration_bounds = array<i64: 1>, scalar_prefetch = 0 : i64, scratch_operands = 2 : i64, tpu.core_type = #tpu.core_type<tc>, window_params = [{transform_indices = @transform_0, window_bounds = array<i64: 9, 16, 16>}, {transform_indices = @transform_1, window_bounds = array<i64: 9, 16, 16>}, {pipeline_mode = #tpu.pipeline_mode<synchronous>, transform_indices = @transform_2, window_bounds = array<i64: 16, 64>}, {pipeline_mode = #tpu.pipeline_mode<synchronous>, transform_indices = @transform_3, window_bounds = array<i64: 16, 64>}, {pipeline_mode = #tpu.pipeline_mode<synchronous>, transform_indices = @transform_4, window_bounds = array<i64: 16, 64>}, {pipeline_mode = #tpu.pipeline_mode<synchronous>, transform_indices = @transform_5, window_bounds = array<i64: 16, 64>}, {pipeline_mode = #tpu.pipeline_mode<synchronous>, transform_indices = @transform_6, window_bounds = array<i64: 4, 16>}, {pipeline_mode = #tpu.pipeline_mode<synchronous>, transform_indices = @transform_7, window_bounds = array<i64: 4, 16>}, {transform_indices = @transform_8, window_bounds = array<i64: 9, 16, 16>}, {transform_indices = @transform_9, window_bounds = array<i64: 9, 16, 16>}]} {
    %c0 = arith.constant 0 : index
    %c0_0 = arith.constant 0 : index
    %c0_1 = arith.constant 0 : index
    %0 = vector.load %arg1[%c0, %c0_0, %c0_1] : memref<9x16x16xbf16, #tpu.memory_space<vmem>>, vector<9x16x16xbf16>
    %1 = vector.shape_cast %0 : vector<9x16x16xbf16> to vector<144x16xbf16>
    %c0_2 = arith.constant 0 : index
    %c0_3 = arith.constant 0 : index
    %c0_4 = arith.constant 0 : index
    %2 = vector.load %arg2[%c0_2, %c0_3, %c0_4] : memref<9x16x16xbf16, #tpu.memory_space<vmem>>, vector<9x16x16xbf16>
    %3 = vector.shape_cast %2 : vector<9x16x16xbf16> to vector<144x16xbf16>
    %c0_5 = arith.constant 0 : index
    %c0_6 = arith.constant 0 : index
    %4 = vector.load %arg3[%c0_5, %c0_6] : memref<16x64xbf16, #tpu.memory_space<vmem>>, vector<16x64xbf16>
    %cst = arith.constant dense<0.000000e+00> : vector<144x64xf32>
    %5 = tpu.matmul %1, %4, %cst {dimension_numbers = #tpu.dot_dimension_numbers<[1], [0], [0], [1], [0, 0, 1, 1], [], []>} : vector<144x16xbf16>, vector<16x64xbf16>, vector<144x64xf32> -> vector<144x64xf32>
    %c0_7 = arith.constant 0 : index
    %c0_8 = arith.constant 0 : index
    %6 = vector.load %arg4[%c0_7, %c0_8] : memref<16x64xbf16, #tpu.memory_space<vmem>>, vector<16x64xbf16>
    %cst_9 = arith.constant dense<0.000000e+00> : vector<144x64xf32>
    %7 = tpu.matmul %3, %6, %cst_9 {dimension_numbers = #tpu.dot_dimension_numbers<[1], [0], [0], [1], [0, 0, 1, 1], [], []>} : vector<144x16xbf16>, vector<16x64xbf16>, vector<144x64xf32> -> vector<144x64xf32>
    %8 = arith.addf %5, %7 : vector<144x64xf32>
    %c0_10 = arith.constant 0 : index
    %c0_11 = arith.constant 0 : index
    %9 = vector.load %arg5[%c0_10, %c0_11] : memref<16x64xbf16, #tpu.memory_space<vmem>>, vector<16x64xbf16>
    %cst_12 = arith.constant dense<0.000000e+00> : vector<144x64xf32>
    %10 = tpu.matmul %1, %9, %cst_12 {dimension_numbers = #tpu.dot_dimension_numbers<[1], [0], [0], [1], [0, 0, 1, 1], [], []>} : vector<144x16xbf16>, vector<16x64xbf16>, vector<144x64xf32> -> vector<144x64xf32>
    %c0_13 = arith.constant 0 : index
    %c0_14 = arith.constant 0 : index
    %11 = vector.load %arg6[%c0_13, %c0_14] : memref<16x64xbf16, #tpu.memory_space<vmem>>, vector<16x64xbf16>
    %cst_15 = arith.constant dense<0.000000e+00> : vector<144x64xf32>
    %12 = tpu.matmul %3, %11, %cst_15 {dimension_numbers = #tpu.dot_dimension_numbers<[1], [0], [0], [1], [0, 0, 1, 1], [], []>} : vector<144x16xbf16>, vector<16x64xbf16>, vector<144x64xf32> -> vector<144x64xf32>
    %13 = arith.addf %10, %12 : vector<144x64xf32>
    %14 = vector.shape_cast %8 : vector<144x64xf32> to vector<9x16x64xf32>
    %c0_16 = arith.constant 0 : index
    %c0_17 = arith.constant 0 : index
    %c0_18 = arith.constant 0 : index
    %15 = vector.load %arg11[%c0_16, %c0_17, %c0_18] : memref<9x16x64xf32, #tpu.memory_space<vmem>>, vector<9x16x64xf32>
    tpu.vector_store %arg11[%c0_16, %c0_17, %c0_18], %14 {strides = array<i32>} : memref<9x16x64xf32, #tpu.memory_space<vmem>>, vector<9x16x64xf32>,
    %16 = vector.shape_cast %13 : vector<144x64xf32> to vector<9x16x64xf32>
    %c0_19 = arith.constant 0 : index
    %c0_20 = arith.constant 0 : index
    %c0_21 = arith.constant 0 : index
    %17 = vector.load %arg12[%c0_19, %c0_20, %c0_21] : memref<9x16x64xf32, #tpu.memory_space<vmem>>, vector<9x16x64xf32>
    tpu.vector_store %arg12[%c0_19, %c0_20, %c0_21], %16 {strides = array<i32>} : memref<9x16x64xf32, #tpu.memory_space<vmem>>, vector<9x16x64xf32>,
    %c0_22 = arith.constant 0 : index
    %c0_23 = arith.constant 0 : index
    %18 = vector.load %arg7[%c0_22, %c0_23] : memref<4x16xf32, #tpu.memory_space<vmem>>, vector<4x16xf32>
    %c0_24 = arith.constant 0 : index
    %c0_25 = arith.constant 0 : index
    %19 = vector.load %arg8[%c0_24, %c0_25] : memref<4x16xf32, #tpu.memory_space<vmem>>, vector<4x16xf32>
    %20 = vector.extract_strided_slice %18 {offsets = [0, 0], sizes = [1, 16], strides = [1, 1]} : vector<4x16xf32> to vector<1x16xf32>
    %21 = vector.extract_strided_slice %18 {offsets = [1, 0], sizes = [1, 16], strides = [1, 1]} : vector<4x16xf32> to vector<1x16xf32>
    %22 = vector.extract_strided_slice %18 {offsets = [2, 0], sizes = [1, 16], strides = [1, 1]} : vector<4x16xf32> to vector<1x16xf32>
    %23 = vector.extract_strided_slice %18 {offsets = [3, 0], sizes = [1, 16], strides = [1, 1]} : vector<4x16xf32> to vector<1x16xf32>
    %24 = vector.extract_strided_slice %19 {offsets = [0, 0], sizes = [1, 16], strides = [1, 1]} : vector<4x16xf32> to vector<1x16xf32>
    %25 = vector.extract_strided_slice %19 {offsets = [1, 0], sizes = [1, 16], strides = [1, 1]} : vector<4x16xf32> to vector<1x16xf32>
    %26 = vector.extract_strided_slice %19 {offsets = [2, 0], sizes = [1, 16], strides = [1, 1]} : vector<4x16xf32> to vector<1x16xf32>
    %27 = vector.extract_strided_slice %19 {offsets = [3, 0], sizes = [1, 16], strides = [1, 1]} : vector<4x16xf32> to vector<1x16xf32>
    %cst_26 = arith.constant 0.000000e+00 : f32
    %28 = vector.broadcast %cst_26 : f32 to vector<16x16xf32>
    %c0_i32 = arith.constant 0 : i32
    %c9_i32 = arith.constant 9 : i32
    %29 = arith.addi %c0_i32, %c9_i32 : i32
    %c1_i32 = arith.constant 1 : i32
    %30:2 = scf.for %arg13 = %c0_i32 to %29 step %c1_i32 iter_args(%arg14 = %28, %arg15 = %28) -> (vector<16x16xf32>, vector<16x16xf32>)  : i32 {
      %31 = arith.index_cast %arg13 : i32 to index
      %c0_28 = arith.constant 0 : index
      %c0_29 = arith.constant 0 : index
      %32 = vector.load %arg11[%31, %c0_28, %c0_29] : memref<9x16x64xf32, #tpu.memory_space<vmem>>, vector<1x16x64xf32>
      %33 = vector.shape_cast %32 : vector<1x16x64xf32> to vector<16x64xf32>
      %34 = vector.extract_strided_slice %33 {offsets = [0, 0], sizes = [16, 16], strides = [1, 1]} : vector<16x64xf32> to vector<16x16xf32>
      %35 = vector.extract_strided_slice %33 {offsets = [0, 16], sizes = [16, 16], strides = [1, 1]} : vector<16x64xf32> to vector<16x16xf32>
      %36 = vector.extract_strided_slice %33 {offsets = [0, 32], sizes = [16, 16], strides = [1, 1]} : vector<16x64xf32> to vector<16x16xf32>
      %37 = vector.extract_strided_slice %33 {offsets = [0, 48], sizes = [16, 16], strides = [1, 1]} : vector<16x64xf32> to vector<16x16xf32>
      %38 = vector.broadcast %20 : vector<1x16xf32> to vector<16x16xf32>
      %39 = arith.mulf %38, %arg14 : vector<16x16xf32>
      %40 = arith.addf %35, %39 : vector<16x16xf32>
      %41 = vector.broadcast %24 : vector<1x16xf32> to vector<16x16xf32>
      %42 = arith.addf %40, %41 : vector<16x16xf32>
      %43 = arith.negf %42 : vector<16x16xf32>
      %44 = math.exp %43 : vector<16x16xf32>
      %cst_30 = arith.constant 1.000000e+00 : f32
      %45 = vector.broadcast %cst_30 : f32 to vector<16x16xf32>
      %46 = arith.addf %45, %44 : vector<16x16xf32>
      %47 = arith.divf %45, %46 : vector<16x16xf32>
      %48 = vector.broadcast %21 : vector<1x16xf32> to vector<16x16xf32>
      %49 = arith.mulf %48, %arg14 : vector<16x16xf32>
      %50 = arith.addf %36, %49 : vector<16x16xf32>
      %51 = vector.broadcast %25 : vector<1x16xf32> to vector<16x16xf32>
      %52 = arith.addf %50, %51 : vector<16x16xf32>
      %53 = arith.negf %52 : vector<16x16xf32>
      %54 = math.exp %53 : vector<16x16xf32>
      %cst_31 = arith.constant 1.000000e+00 : f32
      %55 = vector.broadcast %cst_31 : f32 to vector<16x16xf32>
      %56 = arith.addf %55, %54 : vector<16x16xf32>
      %57 = arith.divf %55, %56 : vector<16x16xf32>
      %58 = arith.mulf %47, %arg14 : vector<16x16xf32>
      %cst_32 = arith.constant 1.000000e+00 : f32
      %59 = vector.broadcast %cst_32 : f32 to vector<16x16xf32>
      %60 = arith.subf %59, %47 : vector<16x16xf32>
      %61 = arith.mulf %60, %34 : vector<16x16xf32>
      %62 = arith.addf %58, %61 : vector<16x16xf32>
      %63 = arith.mulf %57, %62 : vector<16x16xf32>
      %cst_33 = arith.constant 1.000000e+00 : f32
      %64 = vector.broadcast %cst_33 : f32 to vector<16x16xf32>
      %65 = arith.subf %64, %57 : vector<16x16xf32>
      %66 = arith.mulf %65, %37 : vector<16x16xf32>
      %67 = arith.addf %63, %66 : vector<16x16xf32>
      %68 = arith.truncf %67 : vector<16x16xf32> to vector<16x16xbf16>
      %69 = arith.index_cast %arg13 : i32 to index
      %c0_34 = arith.constant 0 : index
      %c0_35 = arith.constant 0 : index
      %70 = vector.load %arg9[%69, %c0_34, %c0_35] : memref<9x16x16xbf16, #tpu.memory_space<vmem>>, vector<1x16x16xbf16>
      %71 = vector.shape_cast %70 : vector<1x16x16xbf16> to vector<16x16xbf16>
      %72 = vector.shape_cast %68 : vector<16x16xbf16> to vector<1x16x16xbf16>
      tpu.vector_store %arg9[%69, %c0_34, %c0_35], %72 {strides = array<i32>} : memref<9x16x16xbf16, #tpu.memory_space<vmem>>, vector<1x16x16xbf16>,
      %c8_i32 = arith.constant 8 : i32
      %73 = arith.subi %c8_i32, %arg13 : i32
      %74 = arith.index_cast %73 : i32 to index
      %c0_36 = arith.constant 0 : index
      %c0_37 = arith.constant 0 : index
      %75 = vector.load %arg12[%74, %c0_36, %c0_37] : memref<9x16x64xf32, #tpu.memory_space<vmem>>, vector<1x16x64xf32>
      %76 = vector.shape_cast %75 : vector<1x16x64xf32> to vector<16x64xf32>
      %77 = vector.extract_strided_slice %76 {offsets = [0, 0], sizes = [16, 16], strides = [1, 1]} : vector<16x64xf32> to vector<16x16xf32>
      %78 = vector.extract_strided_slice %76 {offsets = [0, 16], sizes = [16, 16], strides = [1, 1]} : vector<16x64xf32> to vector<16x16xf32>
      %79 = vector.extract_strided_slice %76 {offsets = [0, 32], sizes = [16, 16], strides = [1, 1]} : vector<16x64xf32> to vector<16x16xf32>
      %80 = vector.extract_strided_slice %76 {offsets = [0, 48], sizes = [16, 16], strides = [1, 1]} : vector<16x64xf32> to vector<16x16xf32>
      %81 = vector.broadcast %22 : vector<1x16xf32> to vector<16x16xf32>
      %82 = arith.mulf %81, %arg15 : vector<16x16xf32>
      %83 = arith.addf %78, %82 : vector<16x16xf32>
      %84 = vector.broadcast %26 : vector<1x16xf32> to vector<16x16xf32>
      %85 = arith.addf %83, %84 : vector<16x16xf32>
      %86 = arith.negf %85 : vector<16x16xf32>
      %87 = math.exp %86 : vector<16x16xf32>
      %cst_38 = arith.constant 1.000000e+00 : f32
      %88 = vector.broadcast %cst_38 : f32 to vector<16x16xf32>
      %89 = arith.addf %88, %87 : vector<16x16xf32>
      %90 = arith.divf %88, %89 : vector<16x16xf32>
      %91 = vector.broadcast %23 : vector<1x16xf32> to vector<16x16xf32>
      %92 = arith.mulf %91, %arg15 : vector<16x16xf32>
      %93 = arith.addf %79, %92 : vector<16x16xf32>
      %94 = vector.broadcast %27 : vector<1x16xf32> to vector<16x16xf32>
      %95 = arith.addf %93, %94 : vector<16x16xf32>
      %96 = arith.negf %95 : vector<16x16xf32>
      %97 = math.exp %96 : vector<16x16xf32>
      %cst_39 = arith.constant 1.000000e+00 : f32
      %98 = vector.broadcast %cst_39 : f32 to vector<16x16xf32>
      %99 = arith.addf %98, %97 : vector<16x16xf32>
      %100 = arith.divf %98, %99 : vector<16x16xf32>
      %101 = arith.mulf %90, %arg15 : vector<16x16xf32>
      %cst_40 = arith.constant 1.000000e+00 : f32
      %102 = vector.broadcast %cst_40 : f32 to vector<16x16xf32>
      %103 = arith.subf %102, %90 : vector<16x16xf32>
      %104 = arith.mulf %103, %77 : vector<16x16xf32>
      %105 = arith.addf %101, %104 : vector<16x16xf32>
      %106 = arith.mulf %100, %105 : vector<16x16xf32>
      %cst_41 = arith.constant 1.000000e+00 : f32
      %107 = vector.broadcast %cst_41 : f32 to vector<16x16xf32>
      %108 = arith.subf %107, %100 : vector<16x16xf32>
      %109 = arith.mulf %108, %80 : vector<16x16xf32>
      %110 = arith.addf %106, %109 : vector<16x16xf32>
      %111 = arith.truncf %110 : vector<16x16xf32> to vector<16x16xbf16>
      %112 = arith.index_cast %73 : i32 to index
      %c0_42 = arith.constant 0 : index
      %c0_43 = arith.constant 0 : index
      %113 = vector.load %arg10[%112, %c0_42, %c0_43] : memref<9x16x16xbf16, #tpu.memory_space<vmem>>, vector<1x16x16xbf16>
      %114 = vector.shape_cast %113 : vector<1x16x16xbf16> to vector<16x16xbf16>
      %115 = vector.shape_cast %111 : vector<16x16xbf16> to vector<1x16x16xbf16>
      tpu.vector_store %arg10[%112, %c0_42, %c0_43], %115 {strides = array<i32>} : memref<9x16x16xbf16, #tpu.memory_space<vmem>>, vector<1x16x16xbf16>,
      scf.yield %62, %105 : vector<16x16xf32>, vector<16x16xf32>
    }
    %c9_i32_27 = arith.constant 9 : i32
    return
  }
  func.func @transform_0(%arg0: i32) -> (i32, i32, i32) {
    %c0_i32 = arith.constant 0 : i32
    %c0_i32_0 = arith.constant 0 : i32
    %c0_i32_1 = arith.constant 0 : i32
    return %c0_i32, %arg0, %c0_i32_0 : i32, i32, i32
  }
  func.func @transform_1(%arg0: i32) -> (i32, i32, i32) {
    %c0_i32 = arith.constant 0 : i32
    %c0_i32_0 = arith.constant 0 : i32
    %c0_i32_1 = arith.constant 0 : i32
    return %c0_i32, %arg0, %c0_i32_0 : i32, i32, i32
  }
  func.func @transform_2(%arg0: i32) -> (i32, i32) {
    %c0_i32 = arith.constant 0 : i32
    %c0_i32_0 = arith.constant 0 : i32
    %c0_i32_1 = arith.constant 0 : i32
    return %c0_i32, %c0_i32_0 : i32, i32
  }
  func.func @transform_3(%arg0: i32) -> (i32, i32) {
    %c0_i32 = arith.constant 0 : i32
    %c0_i32_0 = arith.constant 0 : i32
    %c0_i32_1 = arith.constant 0 : i32
    return %c0_i32, %c0_i32_0 : i32, i32
  }
  func.func @transform_4(%arg0: i32) -> (i32, i32) {
    %c0_i32 = arith.constant 0 : i32
    %c0_i32_0 = arith.constant 0 : i32
    %c0_i32_1 = arith.constant 0 : i32
    return %c0_i32, %c0_i32_0 : i32, i32
  }
  func.func @transform_5(%arg0: i32) -> (i32, i32) {
    %c0_i32 = arith.constant 0 : i32
    %c0_i32_0 = arith.constant 0 : i32
    %c0_i32_1 = arith.constant 0 : i32
    return %c0_i32, %c0_i32_0 : i32, i32
  }
  func.func @transform_6(%arg0: i32) -> (i32, i32) {
    %c0_i32 = arith.constant 0 : i32
    %c0_i32_0 = arith.constant 0 : i32
    %c0_i32_1 = arith.constant 0 : i32
    return %c0_i32, %c0_i32_0 : i32, i32
  }
  func.func @transform_7(%arg0: i32) -> (i32, i32) {
    %c0_i32 = arith.constant 0 : i32
    %c0_i32_0 = arith.constant 0 : i32
    %c0_i32_1 = arith.constant 0 : i32
    return %c0_i32, %c0_i32_0 : i32, i32
  }
  func.func @transform_8(%arg0: i32) -> (i32, i32, i32) {
    %c0_i32 = arith.constant 0 : i32
    %c0_i32_0 = arith.constant 0 : i32
    %c0_i32_1 = arith.constant 0 : i32
    return %c0_i32, %arg0, %c0_i32_0 : i32, i32, i32
  }
  func.func @transform_9(%arg0: i32) -> (i32, i32, i32) {
    %c0_i32 = arith.constant 0 : i32
    %c0_i32_0 = arith.constant 0 : i32
    %c0_i32_1 = arith.constant 0 : i32
    return %c0_i32, %arg0, %c0_i32_0 : i32, i32, i32
  }
}

module attributes {stable_mosaic.version = 11 : i64} {
  func.func @_conv_residual_kernel(%arg0: i32, %arg1: memref<16x9x16xbf16, #tpu.memory_space<vmem>>, %arg2: memref<16x9x16xbf16, #tpu.memory_space<vmem>>, %arg3: memref<32x16xbf16, #tpu.memory_space<vmem>>, %arg4: memref<32x16xbf16, #tpu.memory_space<vmem>>, %arg5: memref<4x16xf32, #tpu.memory_space<vmem>>, %arg6: memref<16x4x16xf32, #tpu.memory_space<vmem>>, %arg7: memref<16x4x16xf32, #tpu.memory_space<vmem>>) attributes {dimension_semantics = [#tpu.dimension_semantics<parallel>], iteration_bounds = array<i64: 1>, scalar_prefetch = 0 : i64, scratch_operands = 0 : i64, tpu.core_type = #tpu.core_type<tc>, window_params = [{transform_indices = @transform_0, window_bounds = array<i64: 16, 9, 16>}, {transform_indices = @transform_1, window_bounds = array<i64: 16, 9, 16>}, {pipeline_mode = #tpu.pipeline_mode<synchronous>, transform_indices = @transform_2, window_bounds = array<i64: 32, 16>}, {pipeline_mode = #tpu.pipeline_mode<synchronous>, transform_indices = @transform_3, window_bounds = array<i64: 32, 16>}, {pipeline_mode = #tpu.pipeline_mode<synchronous>, transform_indices = @transform_4, window_bounds = array<i64: 4, 16>}, {transform_indices = @transform_5, window_bounds = array<i64: 16, 4, 16>}, {transform_indices = @transform_6, window_bounds = array<i64: 16, 4, 16>}]} {
    %c0 = arith.constant 0 : index
    %c0_0 = arith.constant 0 : index
    %0 = vector.load %arg3[%c0, %c0_0] : memref<32x16xbf16, #tpu.memory_space<vmem>>, vector<32x16xbf16>
    %1 = vector.shape_cast %0 : vector<32x16xbf16> to vector<1x32x16xbf16>
    %2 = vector.shape_cast %1 : vector<1x32x16xbf16> to vector<1x32x16xbf16>
    %3 = vector.broadcast %2 : vector<1x32x16xbf16> to vector<16x32x16xbf16>
    %c0_1 = arith.constant 0 : index
    %c0_2 = arith.constant 0 : index
    %4 = vector.load %arg4[%c0_1, %c0_2] : memref<32x16xbf16, #tpu.memory_space<vmem>>, vector<32x16xbf16>
    %5 = vector.shape_cast %4 : vector<32x16xbf16> to vector<1x32x16xbf16>
    %6 = vector.shape_cast %5 : vector<1x32x16xbf16> to vector<1x32x16xbf16>
    %7 = vector.broadcast %6 : vector<1x32x16xbf16> to vector<16x32x16xbf16>
    %c0_3 = arith.constant 0 : index
    %c0_4 = arith.constant 0 : index
    %c0_5 = arith.constant 0 : index
    %8 = vector.load %arg1[%c0_3, %c0_4, %c0_5] : memref<16x9x16xbf16, #tpu.memory_space<vmem>>, vector<16x9x16xbf16>
    "tpu.trace_start"() <{level = 10 : i32, message = "nkd,nld->nkl"}> : () -> ()
    %cst = arith.constant dense<0.000000e+00> : vector<16x32x9xf32>
    %9 = tpu.matmul %3, %8, %cst {dimension_numbers = #tpu.dot_dimension_numbers<[2], [2], [1], [1], [0, 0, 0, 1, 1, 1], [0], [0]>} : vector<16x32x16xbf16>, vector<16x9x16xbf16>, vector<16x32x9xf32> -> vector<16x32x9xf32>
    "tpu.trace_stop"() : () -> ()
    %c0_6 = arith.constant 0 : index
    %c0_7 = arith.constant 0 : index
    %c0_8 = arith.constant 0 : index
    %10 = vector.load %arg2[%c0_6, %c0_7, %c0_8] : memref<16x9x16xbf16, #tpu.memory_space<vmem>>, vector<16x9x16xbf16>
    "tpu.trace_start"() <{level = 10 : i32, message = "nkd,nld->nkl"}> : () -> ()
    %cst_9 = arith.constant dense<0.000000e+00> : vector<16x32x9xf32>
    %11 = tpu.matmul %7, %10, %cst_9 {dimension_numbers = #tpu.dot_dimension_numbers<[2], [2], [1], [1], [0, 0, 0, 1, 1, 1], [0], [0]>} : vector<16x32x16xbf16>, vector<16x9x16xbf16>, vector<16x32x9xf32> -> vector<16x32x9xf32>
    "tpu.trace_stop"() : () -> ()
    %12 = arith.addf %9, %11 : vector<16x32x9xf32>
    %c0_10 = arith.constant 0 : index
    %c0_11 = arith.constant 0 : index
    %c0_12 = arith.constant 0 : index
    %13 = vector.load %arg6[%c0_10, %c0_11, %c0_12] : memref<16x4x16xf32, #tpu.memory_space<vmem>>, vector<16x4x16xf32>
    %c0_13 = arith.constant 0 : index
    %c0_14 = arith.constant 0 : index
    %14 = vector.load %arg5[%c0_13, %c0_14] : memref<4x16xf32, #tpu.memory_space<vmem>>, vector<4x16xf32>
    %15 = vector.shape_cast %14 : vector<4x16xf32> to vector<1x4x16xf32>
    %16 = vector.broadcast %15 : vector<1x4x16xf32> to vector<16x4x16xf32>
    %17 = arith.addf %13, %16 : vector<16x4x16xf32>
    %18 = vector.extract_strided_slice %12 {offsets = [0, 0, 0], sizes = [16, 4, 9], strides = [1, 1, 1]} : vector<16x32x9xf32> to vector<16x4x9xf32>
    %cst_15 = arith.constant 0.000000e+00 : f32
    %19 = vector.broadcast %cst_15 : f32 to vector<16x4x7xf32>
    %20 = tpu.concatenate %18, %19 in 2 : vector<16x4x9xf32>, vector<16x4x7xf32> -> vector<16x4x16xf32>
    %21 = arith.addf %17, %20 : vector<16x4x16xf32>
    %22 = vector.extract_strided_slice %12 {offsets = [0, 4, 0], sizes = [16, 4, 9], strides = [1, 1, 1]} : vector<16x32x9xf32> to vector<16x4x9xf32>
    %cst_16 = arith.constant 0.000000e+00 : f32
    %23 = vector.broadcast %cst_16 : f32 to vector<16x4x1xf32>
    %cst_17 = arith.constant 0.000000e+00 : f32
    %24 = vector.broadcast %cst_17 : f32 to vector<16x4x6xf32>
    %25 = tpu.concatenate %23, %22, %24 in 2 : vector<16x4x1xf32>, vector<16x4x9xf32>, vector<16x4x6xf32> -> vector<16x4x16xf32>
    %26 = arith.addf %21, %25 : vector<16x4x16xf32>
    %27 = vector.extract_strided_slice %12 {offsets = [0, 8, 0], sizes = [16, 4, 9], strides = [1, 1, 1]} : vector<16x32x9xf32> to vector<16x4x9xf32>
    %cst_18 = arith.constant 0.000000e+00 : f32
    %28 = vector.broadcast %cst_18 : f32 to vector<16x4x2xf32>
    %cst_19 = arith.constant 0.000000e+00 : f32
    %29 = vector.broadcast %cst_19 : f32 to vector<16x4x5xf32>
    %30 = tpu.concatenate %28, %27, %29 in 2 : vector<16x4x2xf32>, vector<16x4x9xf32>, vector<16x4x5xf32> -> vector<16x4x16xf32>
    %31 = arith.addf %26, %30 : vector<16x4x16xf32>
    %32 = vector.extract_strided_slice %12 {offsets = [0, 12, 0], sizes = [16, 4, 9], strides = [1, 1, 1]} : vector<16x32x9xf32> to vector<16x4x9xf32>
    %cst_20 = arith.constant 0.000000e+00 : f32
    %33 = vector.broadcast %cst_20 : f32 to vector<16x4x3xf32>
    %cst_21 = arith.constant 0.000000e+00 : f32
    %34 = vector.broadcast %cst_21 : f32 to vector<16x4x4xf32>
    %35 = tpu.concatenate %33, %32, %34 in 2 : vector<16x4x3xf32>, vector<16x4x9xf32>, vector<16x4x4xf32> -> vector<16x4x16xf32>
    %36 = arith.addf %31, %35 : vector<16x4x16xf32>
    %37 = vector.extract_strided_slice %12 {offsets = [0, 16, 0], sizes = [16, 4, 9], strides = [1, 1, 1]} : vector<16x32x9xf32> to vector<16x4x9xf32>
    %cst_22 = arith.constant 0.000000e+00 : f32
    %38 = vector.broadcast %cst_22 : f32 to vector<16x4x4xf32>
    %cst_23 = arith.constant 0.000000e+00 : f32
    %39 = vector.broadcast %cst_23 : f32 to vector<16x4x3xf32>
    %40 = tpu.concatenate %38, %37, %39 in 2 : vector<16x4x4xf32>, vector<16x4x9xf32>, vector<16x4x3xf32> -> vector<16x4x16xf32>
    %41 = arith.addf %36, %40 : vector<16x4x16xf32>
    %42 = vector.extract_strided_slice %12 {offsets = [0, 20, 0], sizes = [16, 4, 9], strides = [1, 1, 1]} : vector<16x32x9xf32> to vector<16x4x9xf32>
    %cst_24 = arith.constant 0.000000e+00 : f32
    %43 = vector.broadcast %cst_24 : f32 to vector<16x4x5xf32>
    %cst_25 = arith.constant 0.000000e+00 : f32
    %44 = vector.broadcast %cst_25 : f32 to vector<16x4x2xf32>
    %45 = tpu.concatenate %43, %42, %44 in 2 : vector<16x4x5xf32>, vector<16x4x9xf32>, vector<16x4x2xf32> -> vector<16x4x16xf32>
    %46 = arith.addf %41, %45 : vector<16x4x16xf32>
    %47 = vector.extract_strided_slice %12 {offsets = [0, 24, 0], sizes = [16, 4, 9], strides = [1, 1, 1]} : vector<16x32x9xf32> to vector<16x4x9xf32>
    %cst_26 = arith.constant 0.000000e+00 : f32
    %48 = vector.broadcast %cst_26 : f32 to vector<16x4x6xf32>
    %cst_27 = arith.constant 0.000000e+00 : f32
    %49 = vector.broadcast %cst_27 : f32 to vector<16x4x1xf32>
    %50 = tpu.concatenate %48, %47, %49 in 2 : vector<16x4x6xf32>, vector<16x4x9xf32>, vector<16x4x1xf32> -> vector<16x4x16xf32>
    %51 = arith.addf %46, %50 : vector<16x4x16xf32>
    %52 = vector.extract_strided_slice %12 {offsets = [0, 28, 0], sizes = [16, 4, 9], strides = [1, 1, 1]} : vector<16x32x9xf32> to vector<16x4x9xf32>
    %cst_28 = arith.constant 0.000000e+00 : f32
    %53 = vector.broadcast %cst_28 : f32 to vector<16x4x7xf32>
    %54 = tpu.concatenate %53, %52 in 2 : vector<16x4x7xf32>, vector<16x4x9xf32> -> vector<16x4x16xf32>
    %55 = arith.addf %51, %54 : vector<16x4x16xf32>
    %c0_29 = arith.constant 0 : index
    %c0_30 = arith.constant 0 : index
    %c0_31 = arith.constant 0 : index
    %56 = vector.load %arg7[%c0_29, %c0_30, %c0_31] : memref<16x4x16xf32, #tpu.memory_space<vmem>>, vector<16x4x16xf32>
    tpu.vector_store %arg7[%c0_29, %c0_30, %c0_31], %55 {strides = array<i32>} : memref<16x4x16xf32, #tpu.memory_space<vmem>>, vector<16x4x16xf32>,
    return
  }
  func.func @transform_0(%arg0: i32) -> (i32, i32, i32) {
    %c0_i32 = arith.constant 0 : i32
    %c0_i32_0 = arith.constant 0 : i32
    %c0_i32_1 = arith.constant 0 : i32
    return %arg0, %c0_i32, %c0_i32_0 : i32, i32, i32
  }
  func.func @transform_1(%arg0: i32) -> (i32, i32, i32) {
    %c0_i32 = arith.constant 0 : i32
    %c0_i32_0 = arith.constant 0 : i32
    %c0_i32_1 = arith.constant 0 : i32
    return %arg0, %c0_i32, %c0_i32_0 : i32, i32, i32
  }
  func.func @transform_2(%arg0: i32) -> (i32, i32) {
    %c0_i32 = arith.constant 0 : i32
    %c0_i32_0 = arith.constant 0 : i32
    %c0_i32_1 = arith.constant 0 : i32
    return %c0_i32, %c0_i32_0 : i32, i32
  }
  func.func @transform_3(%arg0: i32) -> (i32, i32) {
    %c0_i32 = arith.constant 0 : i32
    %c0_i32_0 = arith.constant 0 : i32
    %c0_i32_1 = arith.constant 0 : i32
    return %c0_i32, %c0_i32_0 : i32, i32
  }
  func.func @transform_4(%arg0: i32) -> (i32, i32) {
    %c0_i32 = arith.constant 0 : i32
    %c0_i32_0 = arith.constant 0 : i32
    %c0_i32_1 = arith.constant 0 : i32
    return %c0_i32, %c0_i32_0 : i32, i32
  }
  func.func @transform_5(%arg0: i32) -> (i32, i32, i32) {
    %c0_i32 = arith.constant 0 : i32
    %c0_i32_0 = arith.constant 0 : i32
    %c0_i32_1 = arith.constant 0 : i32
    return %arg0, %c0_i32, %c0_i32_0 : i32, i32, i32
  }
  func.func @transform_6(%arg0: i32) -> (i32, i32, i32) {
    %c0_i32 = arith.constant 0 : i32
    %c0_i32_0 = arith.constant 0 : i32
    %c0_i32_1 = arith.constant 0 : i32
    return %arg0, %c0_i32, %c0_i32_0 : i32, i32, i32
  }
}

</mosaic_0001>

<llo_original>
// kernel: dprnn_block_forward.6
$region0: #{dprnn_block_forward.6}
  #allocation0 [shape = 'u32[]', space=smem, size = 0x4, offset = 0x4, fixed_abs, tag = 'smem constant byte address 0x4 - core index']
  #allocation1 [shape = 'u32[72,128]{1,0:T(1,128)}', space=vmem, size = 0x9000, scoped, tag = 'internal scratch']
  %s0 = inlined_call_operand.vmem [shape: f32[16,4,16], index: 0, kind: input, shape index: {}]
  %s1 = inlined_call_operand.vmem [shape: f32[4,16], index: 1, kind: input, shape index: {}]
  %s2 = inlined_call_operand.vmem [shape: f32[4,16], index: 2, kind: input, shape index: {}]
  %s3 = inlined_call_operand.vmem [shape: f32[16,4,16], index: 3, kind: output, shape index: {}]
  %s4 = sld [smem:[#allocation0]]
  $region22: #{dprnn_block_forward.6} parent=0
    _
  %s6 = ssub.s32 1, %s4
  %s7 = scalar_select 0, %s6, %s4
  // Predicated region
  $region2: #{dprnn_block_forward.6} parent=0 // pred_check
    _
  $region3: #{dprnn_block_forward.6} parent=0 // pred_check_branch
    %9 = sbr.rel (0) target = $region5
  $region4: #{dprnn_block_forward.6} parent=0 // pred_region
    _
  $region5: #{dprnn_block_forward.6} parent=0 // pred_fallthru
    _
  // Predicated region
  $region6: #{dprnn_block_forward.6} parent=0 // pred_check
    _
  $region7: #{dprnn_block_forward.6} parent=0 // pred_check_branch
    %11 = sbr.rel (0) target = $region9
  $region8: #{dprnn_block_forward.6} parent=0 // pred_region
    _
  $region9: #{dprnn_block_forward.6} parent=0 // pred_fallthru
    _
  // Predicated region
  $region10: #{dprnn_block_forward.6} parent=0 // pred_check
    _
  $region11: #{dprnn_block_forward.6} parent=0 // pred_check_branch
    %13 = sbr.rel (0) target = $region13
  $region12: #{dprnn_block_forward.6} parent=0 // pred_region
    _
  $region13: #{dprnn_block_forward.6} parent=0 // pred_fallthru
    _
  %v14 = vld [vmem:[%s0] sm:$0xf]
  %v15 = vld [vmem:[%s0 + $0x4] sm:$0xf]
  %v16 = vld [vmem:[%s0 + $0x8] sm:$0xf]
  %v17 = vld [vmem:[%s0 + $0xc] sm:$0xf]
  %v18 = vld [vmem:[%s0 + $0x10] sm:$0xf]
  %v19 = vld [vmem:[%s0 + $0x14] sm:$0xf]
  %v20 = vld [vmem:[%s0 + $0x18] sm:$0xf]
  %v21 = vld [vmem:[%s0 + $0x1c] sm:$0xf]
  %v22 = vld [vmem:[%s0 + $0x20] sm:$0xf]
  %v23 = vld [vmem:[%s0 + $0x24] sm:$0xf]
  %v24 = vld [vmem:[%s0 + $0x28] sm:$0xf]
  %v25 = vld [vmem:[%s0 + $0x2c] sm:$0xf]
  %v26 = vld [vmem:[%s0 + $0x30] sm:$0xf]
  %v27 = vld [vmem:[%s0 + $0x34] sm:$0xf]
  %v28 = vld [vmem:[%s0 + $0x38] sm:$0xf]
  %v29 = vld [vmem:[%s0 + $0x3c] sm:$0xf]
  %vm30 = vcmask 125952
  %v31 = vsel %vm30, %v14, 0.0
  %v32 = vrot.slane %v31, 4
  %v33 = vadd.f32 %v31, %v32
  %v34 = vrot.slane %v33, 2
  %v35 = vadd.f32 %v33, %v34
  %v36 = vrot.slane %v35, 1
  %v37 = vadd.f32 %v35, %v36
  %v38 = vsel %vm30, %v15, 0.0
  %v39 = vrot.slane %v38, 4
  %v40 = vadd.f32 %v38, %v39
  %v41 = vrot.slane %v40, 2
  %v42 = vadd.f32 %v40, %v41
  %v43 = vrot.slane %v42, 1
  %v44 = vadd.f32 %v42, %v43
  %v45 = vsel %vm30, %v16, 0.0
  %v46 = vrot.slane %v45, 4
  %v47 = vadd.f32 %v45, %v46
  %v48 = vrot.slane %v47, 2
  %v49 = vadd.f32 %v47, %v48
  %v50 = vrot.slane %v49, 1
  %v51 = vadd.f32 %v49, %v50
  %v52 = vsel %vm30, %v17, 0.0
  %v53 = vrot.slane %v52, 4
  %v54 = vadd.f32 %v52, %v53
  %v55 = vrot.slane %v54, 2
  %v56 = vadd.f32 %v54, %v55
  %v57 = vrot.slane %v56, 1
  %v58 = vadd.f32 %v56, %v57
  %v59 = vsel %vm30, %v18, 0.0
  %v60 = vrot.slane %v59, 4
  %v61 = vadd.f32 %v59, %v60
  %v62 = vrot.slane %v61, 2
  %v63 = vadd.f32 %v61, %v62
  %v64 = vrot.slane %v63, 1
  %v65 = vadd.f32 %v63, %v64
  %v66 = vsel %vm30, %v19, 0.0
  %v67 = vrot.slane %v66, 4
  %v68 = vadd.f32 %v66, %v67
  %v69 = vrot.slane %v68, 2
  %v70 = vadd.f32 %v68, %v69
  %v71 = vrot.slane %v70, 1
  %v72 = vadd.f32 %v70, %v71
  %v73 = vsel %vm30, %v20, 0.0
  %v74 = vrot.slane %v73, 4
  %v75 = vadd.f32 %v73, %v74
  %v76 = vrot.slane %v75, 2
  %v77 = vadd.f32 %v75, %v76
  %v78 = vrot.slane %v77, 1
  %v79 = vadd.f32 %v77, %v78
  %v80 = vsel %vm30, %v21, 0.0
  %v81 = vrot.slane %v80, 4
  %v82 = vadd.f32 %v80, %v81
  %v83 = vrot.slane %v82, 2
  %v84 = vadd.f32 %v82, %v83
  %v85 = vrot.slane %v84, 1
  %v86 = vadd.f32 %v84, %v85
  %v87 = vsel %vm30, %v22, 0.0
  %v88 = vrot.slane %v87, 4
  %v89 = vadd.f32 %v87, %v88
  %v90 = vrot.slane %v89, 2
  %v91 = vadd.f32 %v89, %v90
  %v92 = vrot.slane %v91, 1
  %v93 = vadd.f32 %v91, %v92
  %v94 = vsel %vm30, %v23, 0.0
  %v95 = vrot.slane %v94, 4
  %v96 = vadd.f32 %v94, %v95
  %v97 = vrot.slane %v96, 2
  %v98 = vadd.f32 %v96, %v97
  %v99 = vrot.slane %v98, 1
  %v100 = vadd.f32 %v98, %v99
  %v101 = vsel %vm30, %v24, 0.0
  %v102 = vrot.slane %v101, 4
  %v103 = vadd.f32 %v101, %v102
  %v104 = vrot.slane %v103, 2
  %v105 = vadd.f32 %v103, %v104
  %v106 = vrot.slane %v105, 1
  %v107 = vadd.f32 %v105, %v106
  %v108 = vsel %vm30, %v25, 0.0
  %v109 = vrot.slane %v108, 4
  %v110 = vadd.f32 %v108, %v109
  %v111 = vrot.slane %v110, 2
  %v112 = vadd.f32 %v110, %v111
  %v113 = vrot.slane %v112, 1
  %v114 = vadd.f32 %v112, %v113
  %v115 = vsel %vm30, %v26, 0.0
  %v116 = vrot.slane %v115, 4
  %v117 = vadd.f32 %v115, %v116
  %v118 = vrot.slane %v117, 2
  %v119 = vadd.f32 %v117, %v118
  %v120 = vrot.slane %v119, 1
  %v121 = vadd.f32 %v119, %v120
  %v122 = vsel %vm30, %v27, 0.0
  %v123 = vrot.slane %v122, 4
  %v124 = vadd.f32 %v122, %v123
  %v125 = vrot.slane %v124, 2
  %v126 = vadd.f32 %v124, %v125
  %v127 = vrot.slane %v126, 1
  %v128 = vadd.f32 %v126, %v127
  %v129 = vsel %vm30, %v28, 0.0
  %v130 = vrot.slane %v129, 4
  %v131 = vadd.f32 %v129, %v130
  %v132 = vrot.slane %v131, 2
  %v133 = vadd.f32 %v131, %v132
  %v134 = vrot.slane %v133, 1
  %v135 = vadd.f32 %v133, %v134
  %v136 = vsel %vm30, %v29, 0.0
  %v137 = vrot.slane %v136, 4
  %v138 = vadd.f32 %v136, %v137
  %v139 = vrot.slane %v138, 2
  %v140 = vadd.f32 %v138, %v139
  %v141 = vrot.slane %v140, 1
  %v142 = vadd.f32 %v140, %v141
  %v143 = vrcp.pop 4.0
  %v144 = vmul.f32 4.0, %v143
  %v145 = vsub.f32 1.0, %v144
  %v146 = vmul.f32 %v143, %v145
  %v147 = vadd.f32 %v143, %v146
  %vm148 = vweird.f32 %v143
  %v149 = vsel %vm148, %v143, %v147
  %v150 = vmul.f32 %v37, %v149
  %v151 = vmul.f32 %v44, %v149
  %v152 = vmul.f32 %v51, %v149
  %v153 = vmul.f32 %v58, %v149
  %v154 = vmul.f32 %v65, %v149
  %v155 = vmul.f32 %v72, %v149
  %v156 = vmul.f32 %v79, %v149
  %v157 = vmul.f32 %v86, %v149
  %v158 = vmul.f32 %v93, %v149
  %v159 = vmul.f32 %v100, %v149
  %v160 = vmul.f32 %v107, %v149
  %v161 = vmul.f32 %v114, %v149
  %v162 = vmul.f32 %v121, %v149
  %v163 = vmul.f32 %v128, %v149
  %v164 = vmul.f32 %v135, %v149
  %v165 = vmul.f32 %v142, %v149
  %v166 = vsub.f32 %v14, %v150
  %v167 = vsub.f32 %v15, %v151
  %v168 = vsub.f32 %v16, %v152
  %v169 = vsub.f32 %v17, %v153
  %v170 = vsub.f32 %v18, %v154
  %v171 = vsub.f32 %v19, %v155
  %v172 = vsub.f32 %v20, %v156
  %v173 = vsub.f32 %v21, %v157
  %v174 = vsub.f32 %v22, %v158
  %v175 = vsub.f32 %v23, %v159
  %v176 = vsub.f32 %v24, %v160
  %v177 = vsub.f32 %v25, %v161
  %v178 = vsub.f32 %v26, %v162
  %v179 = vsub.f32 %v27, %v163
  %v180 = vsub.f32 %v28, %v164
  %v181 = vsub.f32 %v29, %v165
  %v182 = vmul.f32 %v166, %v166
  %v183 = vmul.f32 %v167, %v167
  %v184 = vmul.f32 %v168, %v168
  %v185 = vmul.f32 %v169, %v169
  %v186 = vmul.f32 %v170, %v170
  %v187 = vmul.f32 %v171, %v171
  %v188 = vmul.f32 %v172, %v172
  %v189 = vmul.f32 %v173, %v173
  %v190 = vmul.f32 %v174, %v174
  %v191 = vmul.f32 %v175, %v175
  %v192 = vmul.f32 %v176, %v176
  %v193 = vmul.f32 %v177, %v177
  %v194 = vmul.f32 %v178, %v178
  %v195 = vmul.f32 %v179, %v179
  %v196 = vmul.f32 %v180, %v180
  %v197 = vmul.f32 %v181, %v181
  %v198 = vsel %vm30, %v182, 0.0
  %v199 = vrot.slane %v198, 4
  %v200 = vadd.f32 %v198, %v199
  %v201 = vrot.slane %v200, 2
  %v202 = vadd.f32 %v200, %v201
  %v203 = vrot.slane %v202, 1
  %v204 = vadd.f32 %v202, %v203
  %v205 = vsel %vm30, %v183, 0.0
  %v206 = vrot.slane %v205, 4
  %v207 = vadd.f32 %v205, %v206
  %v208 = vrot.slane %v207, 2
  %v209 = vadd.f32 %v207, %v208
  %v210 = vrot.slane %v209, 1
  %v211 = vadd.f32 %v209, %v210
  %v212 = vsel %vm30, %v184, 0.0
  %v213 = vrot.slane %v212, 4
  %v214 = vadd.f32 %v212, %v213
  %v215 = vrot.slane %v214, 2
  %v216 = vadd.f32 %v214, %v215
  %v217 = vrot.slane %v216, 1
  %v218 = vadd.f32 %v216, %v217
  %v219 = vsel %vm30, %v185, 0.0
  %v220 = vrot.slane %v219, 4
  %v221 = vadd.f32 %v219, %v220
  %v222 = vrot.slane %v221, 2
  %v223 = vadd.f32 %v221, %v222
  %v224 = vrot.slane %v223, 1
  %v225 = vadd.f32 %v223, %v224
  %v226 = vsel %vm30, %v186, 0.0
  %v227 = vrot.slane %v226, 4
  %v228 = vadd.f32 %v226, %v227
  %v229 = vrot.slane %v228, 2
  %v230 = vadd.f32 %v228, %v229
  %v231 = vrot.slane %v230, 1
  %v232 = vadd.f32 %v230, %v231
  %v233 = vsel %vm30, %v187, 0.0
  %v234 = vrot.slane %v233, 4
  %v235 = vadd.f32 %v233, %v234
  %v236 = vrot.slane %v235, 2
  %v237 = vadd.f32 %v235, %v236
  %v238 = vrot.slane %v237, 1
  %v239 = vadd.f32 %v237, %v238
  %v240 = vsel %vm30, %v188, 0.0
  %v241 = vrot.slane %v240, 4
  %v242 = vadd.f32 %v240, %v241
  %v243 = vrot.slane %v242, 2
  %v244 = vadd.f32 %v242, %v243
  %v245 = vrot.slane %v244, 1
  %v246 = vadd.f32 %v244, %v245
  %v247 = vsel %vm30, %v189, 0.0
  %v248 = vrot.slane %v247, 4
  %v249 = vadd.f32 %v247, %v248
  %v250 = vrot.slane %v249, 2
  %v251 = vadd.f32 %v249, %v250
  %v252 = vrot.slane %v251, 1
  %v253 = vadd.f32 %v251, %v252
  %v254 = vsel %vm30, %v190, 0.0
  %v255 = vrot.slane %v254, 4
  %v256 = vadd.f32 %v254, %v255
  %v257 = vrot.slane %v256, 2
  %v258 = vadd.f32 %v256, %v257
  %v259 = vrot.slane %v258, 1
  %v260 = vadd.f32 %v258, %v259
  %v261 = vsel %vm30, %v191, 0.0
  %v262 = vrot.slane %v261, 4
  %v263 = vadd.f32 %v261, %v262
  %v264 = vrot.slane %v263, 2
  %v265 = vadd.f32 %v263, %v264
  %v266 = vrot.slane %v265, 1
  %v267 = vadd.f32 %v265, %v266
  %v268 = vsel %vm30, %v192, 0.0
  %v269 = vrot.slane %v268, 4
  %v270 = vadd.f32 %v268, %v269
  %v271 = vrot.slane %v270, 2
  %v272 = vadd.f32 %v270, %v271
  %v273 = vrot.slane %v272, 1
  %v274 = vadd.f32 %v272, %v273
  %v275 = vsel %vm30, %v193, 0.0
  %v276 = vrot.slane %v275, 4
  %v277 = vadd.f32 %v275, %v276
  %v278 = vrot.slane %v277, 2
  %v279 = vadd.f32 %v277, %v278
  %v280 = vrot.slane %v279, 1
  %v281 = vadd.f32 %v279, %v280
  %v282 = vsel %vm30, %v194, 0.0
  %v283 = vrot.slane %v282, 4
  %v284 = vadd.f32 %v282, %v283
  %v285 = vrot.slane %v284, 2
  %v286 = vadd.f32 %v284, %v285
  %v287 = vrot.slane %v286, 1
  %v288 = vadd.f32 %v286, %v287
  %v289 = vsel %vm30, %v195, 0.0
  %v290 = vrot.slane %v289, 4
  %v291 = vadd.f32 %v289, %v290
  %v292 = vrot.slane %v291, 2
  %v293 = vadd.f32 %v291, %v292
  %v294 = vrot.slane %v293, 1
  %v295 = vadd.f32 %v293, %v294
  %v296 = vsel %vm30, %v196, 0.0
  %v297 = vrot.slane %v296, 4
  %v298 = vadd.f32 %v296, %v297
  %v299 = vrot.slane %v298, 2
  %v300 = vadd.f32 %v298, %v299
  %v301 = vrot.slane %v300, 1
  %v302 = vadd.f32 %v300, %v301
  %v303 = vsel %vm30, %v197, 0.0
  %v304 = vrot.slane %v303, 4
  %v305 = vadd.f32 %v303, %v304
  %v306 = vrot.slane %v305, 2
  %v307 = vadd.f32 %v305, %v306
  %v308 = vrot.slane %v307, 1
  %v309 = vadd.f32 %v307, %v308
  %v310 = vmul.f32 %v204, %v149
  %v311 = vmul.f32 %v211, %v149
  %v312 = vmul.f32 %v218, %v149
  %v313 = vmul.f32 %v225, %v149
  %v314 = vmul.f32 %v232, %v149
  %v315 = vmul.f32 %v239, %v149
  %v316 = vmul.f32 %v246, %v149
  %v317 = vmul.f32 %v253, %v149
  %v318 = vmul.f32 %v260, %v149
  %v319 = vmul.f32 %v267, %v149
  %v320 = vmul.f32 %v274, %v149
  %v321 = vmul.f32 %v281, %v149
  %v322 = vmul.f32 %v288, %v149
  %v323 = vmul.f32 %v295, %v149
  %v324 = vmul.f32 %v302, %v149
  %v325 = vmul.f32 %v309, %v149
  %v326 = vadd.f32 %v310, 1e-05
  %v327 = vadd.f32 %v311, 1e-05
  %v328 = vadd.f32 %v312, 1e-05
  %v329 = vadd.f32 %v313, 1e-05
  %v330 = vadd.f32 %v314, 1e-05
  %v331 = vadd.f32 %v315, 1e-05
  %v332 = vadd.f32 %v316, 1e-05
  %v333 = vadd.f32 %v317, 1e-05
  %v334 = vadd.f32 %v318, 1e-05
  %v335 = vadd.f32 %v319, 1e-05
  %v336 = vadd.f32 %v320, 1e-05
  %v337 = vadd.f32 %v321, 1e-05
  %v338 = vadd.f32 %v322, 1e-05
  %v339 = vadd.f32 %v323, 1e-05
  %v340 = vadd.f32 %v324, 1e-05
  %v341 = vadd.f32 %v325, 1e-05
  %v342 = vrsqrt.pop %v326
  %v343 = vmul.f32 %v342, %v326
  %v344 = vmul.f32 %v343, %v342
  %v345 = vmul.f32 0.5, %v344
  %v346 = vsub.f32 1.5, %v345
  %v347 = vmul.f32 %v342, %v346
  %vm348 = vweird.f32 %v326
  %vm349 = vweird.f32 %v342
  %vm350 = vmor %vm348, %vm349
  %v351 = vsel %vm350, %v342, %v347
  %v352 = vrsqrt.pop %v327
  %v353 = vmul.f32 %v352, %v327
  %v354 = vmul.f32 %v353, %v352
  %v355 = vmul.f32 0.5, %v354
  %v356 = vsub.f32 1.5, %v355
  %v357 = vmul.f32 %v352, %v356
  %vm358 = vweird.f32 %v327
  %vm359 = vweird.f32 %v352
  %vm360 = vmor %vm358, %vm359
  %v361 = vsel %vm360, %v352, %v357
  %v362 = vrsqrt.pop %v328
  %v363 = vmul.f32 %v362, %v328
  %v364 = vmul.f32 %v363, %v362
  %v365 = vmul.f32 0.5, %v364
  %v366 = vsub.f32 1.5, %v365
  %v367 = vmul.f32 %v362, %v366
  %vm368 = vweird.f32 %v328
  %vm369 = vweird.f32 %v362
  %vm370 = vmor %vm368, %vm369
  %v371 = vsel %vm370, %v362, %v367
  %v372 = vrsqrt.pop %v329
  %v373 = vmul.f32 %v372, %v329
  %v374 = vmul.f32 %v373, %v372
  %v375 = vmul.f32 0.5, %v374
  %v376 = vsub.f32 1.5, %v375
  %v377 = vmul.f32 %v372, %v376
  %vm378 = vweird.f32 %v329
  %vm379 = vweird.f32 %v372
  %vm380 = vmor %vm378, %vm379
  %v381 = vsel %vm380, %v372, %v377
  %v382 = vrsqrt.pop %v330
  %v383 = vmul.f32 %v382, %v330
  %v384 = vmul.f32 %v383, %v382
  %v385 = vmul.f32 0.5, %v384
  %v386 = vsub.f32 1.5, %v385
  %v387 = vmul.f32 %v382, %v386
  %vm388 = vweird.f32 %v330
  %vm389 = vweird.f32 %v382
  %vm390 = vmor %vm388, %vm389
  %v391 = vsel %vm390, %v382, %v387
  %v392 = vrsqrt.pop %v331
  %v393 = vmul.f32 %v392, %v331
  %v394 = vmul.f32 %v393, %v392
  %v395 = vmul.f32 0.5, %v394
  %v396 = vsub.f32 1.5, %v395
  %v397 = vmul.f32 %v392, %v396
  %vm398 = vweird.f32 %v331
  %vm399 = vweird.f32 %v392
  %vm400 = vmor %vm398, %vm399
  %v401 = vsel %vm400, %v392, %v397
  %v402 = vrsqrt.pop %v332
  %v403 = vmul.f32 %v402, %v332
  %v404 = vmul.f32 %v403, %v402
  %v405 = vmul.f32 0.5, %v404
  %v406 = vsub.f32 1.5, %v405
  %v407 = vmul.f32 %v402, %v406
  %vm408 = vweird.f32 %v332
  %vm409 = vweird.f32 %v402
  %vm410 = vmor %vm408, %vm409
  %v411 = vsel %vm410, %v402, %v407
  %v412 = vrsqrt.pop %v333
  %v413 = vmul.f32 %v412, %v333
  %v414 = vmul.f32 %v413, %v412
  %v415 = vmul.f32 0.5, %v414
  %v416 = vsub.f32 1.5, %v415
  %v417 = vmul.f32 %v412, %v416
  %vm418 = vweird.f32 %v333
  %vm419 = vweird.f32 %v412
  %vm420 = vmor %vm418, %vm419
  %v421 = vsel %vm420, %v412, %v417
  %v422 = vrsqrt.pop %v334
  %v423 = vmul.f32 %v422, %v334
  %v424 = vmul.f32 %v423, %v422
  %v425 = vmul.f32 0.5, %v424
  %v426 = vsub.f32 1.5, %v425
  %v427 = vmul.f32 %v422, %v426
  %vm428 = vweird.f32 %v334
  %vm429 = vweird.f32 %v422
  %vm430 = vmor %vm428, %vm429
  %v431 = vsel %vm430, %v422, %v427
  %v432 = vrsqrt.pop %v335
  %v433 = vmul.f32 %v432, %v335
  %v434 = vmul.f32 %v433, %v432
  %v435 = vmul.f32 0.5, %v434
  %v436 = vsub.f32 1.5, %v435
  %v437 = vmul.f32 %v432, %v436
  %vm438 = vweird.f32 %v335
  %vm439 = vweird.f32 %v432
  %vm440 = vmor %vm438, %vm439
  %v441 = vsel %vm440, %v432, %v437
  %v442 = vrsqrt.pop %v336
  %v443 = vmul.f32 %v442, %v336
  %v444 = vmul.f32 %v443, %v442
  %v445 = vmul.f32 0.5, %v444
  %v446 = vsub.f32 1.5, %v445
  %v447 = vmul.f32 %v442, %v446
  %vm448 = vweird.f32 %v336
  %vm449 = vweird.f32 %v442
  %vm450 = vmor %vm448, %vm449
  %v451 = vsel %vm450, %v442, %v447
  %v452 = vrsqrt.pop %v337
  %v453 = vmul.f32 %v452, %v337
  %v454 = vmul.f32 %v453, %v452
  %v455 = vmul.f32 0.5, %v454
  %v456 = vsub.f32 1.5, %v455
  %v457 = vmul.f32 %v452, %v456
  %vm458 = vweird.f32 %v337
  %vm459 = vweird.f32 %v452
  %vm460 = vmor %vm458, %vm459
  %v461 = vsel %vm460, %v452, %v457
  %v462 = vrsqrt.pop %v338
  %v463 = vmul.f32 %v462, %v338
  %v464 = vmul.f32 %v463, %v462
  %v465 = vmul.f32 0.5, %v464
  %v466 = vsub.f32 1.5, %v465
  %v467 = vmul.f32 %v462, %v466
  %vm468 = vweird.f32 %v338
  %vm469 = vweird.f32 %v462
  %vm470 = vmor %vm468, %vm469
  %v471 = vsel %vm470, %v462, %v467
  %v472 = vrsqrt.pop %v339
  %v473 = vmul.f32 %v472, %v339
  %v474 = vmul.f32 %v473, %v472
  %v475 = vmul.f32 0.5, %v474
  %v476 = vsub.f32 1.5, %v475
  %v477 = vmul.f32 %v472, %v476
  %vm478 = vweird.f32 %v339
  %vm479 = vweird.f32 %v472
  %vm480 = vmor %vm478, %vm479
  %v481 = vsel %vm480, %v472, %v477
  %v482 = vrsqrt.pop %v340
  %v483 = vmul.f32 %v482, %v340
  %v484 = vmul.f32 %v483, %v482
  %v485 = vmul.f32 0.5, %v484
  %v486 = vsub.f32 1.5, %v485
  %v487 = vmul.f32 %v482, %v486
  %vm488 = vweird.f32 %v340
  %vm489 = vweird.f32 %v482
  %vm490 = vmor %vm488, %vm489
  %v491 = vsel %vm490, %v482, %v487
  %v492 = vrsqrt.pop %v341
  %v493 = vmul.f32 %v492, %v341
  %v494 = vmul.f32 %v493, %v492
  %v495 = vmul.f32 0.5, %v494
  %v496 = vsub.f32 1.5, %v495
  %v497 = vmul.f32 %v492, %v496
  %vm498 = vweird.f32 %v341
  %vm499 = vweird.f32 %v492
  %vm500 = vmor %vm498, %vm499
  %v501 = vsel %vm500, %v492, %v497
  %v502 = vmul.f32 %v166, %v351
  %v503 = vmul.f32 %v167, %v361
  %v504 = vmul.f32 %v168, %v371
  %v505 = vmul.f32 %v169, %v381
  %v506 = vmul.f32 %v170, %v391
  %v507 = vmul.f32 %v171, %v401
  %v508 = vmul.f32 %v172, %v411
  %v509 = vmul.f32 %v173, %v421
  %v510 = vmul.f32 %v174, %v431
  %v511 = vmul.f32 %v175, %v441
  %v512 = vmul.f32 %v176, %v451
  %v513 = vmul.f32 %v177, %v461
  %v514 = vmul.f32 %v178, %v471
  %v515 = vmul.f32 %v179, %v481
  %v516 = vmul.f32 %v180, %v491
  %v517 = vmul.f32 %v181, %v501
  %v518 = vld [vmem:[%s1] sm:$0xf]
  %v519 = vmul.f32 %v502, %v518
  %v520 = vmul.f32 %v503, %v518
  %v521 = vmul.f32 %v504, %v518
  %v522 = vmul.f32 %v505, %v518
  %v523 = vmul.f32 %v506, %v518
  %v524 = vmul.f32 %v507, %v518
  %v525 = vmul.f32 %v508, %v518
  %v526 = vmul.f32 %v509, %v518
  %v527 = vmul.f32 %v510, %v518
  %v528 = vmul.f32 %v511, %v518
  %v529 = vmul.f32 %v512, %v518
  %v530 = vmul.f32 %v513, %v518
  %v531 = vmul.f32 %v514, %v518
  %v532 = vmul.f32 %v515, %v518
  %v533 = vmul.f32 %v516, %v518
  %v534 = vmul.f32 %v517, %v518
  %v535 = vld [vmem:[%s2] sm:$0xf]
  %v536 = vadd.f32 %v519, %v535
  %v537 = vadd.f32 %v520, %v535
  %v538 = vadd.f32 %v521, %v535
  %v539 = vadd.f32 %v522, %v535
  %v540 = vadd.f32 %v523, %v535
  %v541 = vadd.f32 %v524, %v535
  %v542 = vadd.f32 %v525, %v535
  %v543 = vadd.f32 %v526, %v535
  %v544 = vadd.f32 %v527, %v535
  %v545 = vadd.f32 %v528, %v535
  %v546 = vadd.f32 %v529, %v535
  %v547 = vadd.f32 %v530, %v535
  %v548 = vadd.f32 %v531, %v535
  %v549 = vadd.f32 %v532, %v535
  %v550 = vadd.f32 %v533, %v535
  %v551 = vadd.f32 %v534, %v535
  %552 = vst.msk [vmem:[%s3] sm:$0xf] %vm30, %v536
  %553 = vst.msk [vmem:[%s3 + $0x4] sm:$0xf] %vm30, %v537
  %554 = vst.msk [vmem:[%s3 + $0x8] sm:$0xf] %vm30, %v538
  %555 = vst.msk [vmem:[%s3 + $0xc] sm:$0xf] %vm30, %v539
  %556 = vst.msk [vmem:[%s3 + $0x10] sm:$0xf] %vm30, %v540
  %557 = vst.msk [vmem:[%s3 + $0x14] sm:$0xf] %vm30, %v541
  %558 = vst.msk [vmem:[%s3 + $0x18] sm:$0xf] %vm30, %v542
  %559 = vst.msk [vmem:[%s3 + $0x1c] sm:$0xf] %vm30, %v543
  %560 = vst.msk [vmem:[%s3 + $0x20] sm:$0xf] %vm30, %v544
  %561 = vst.msk [vmem:[%s3 + $0x24] sm:$0xf] %vm30, %v545
  %562 = vst.msk [vmem:[%s3 + $0x28] sm:$0xf] %vm30, %v546
  %563 = vst.msk [vmem:[%s3 + $0x2c] sm:$0xf] %vm30, %v547
  %564 = vst.msk [vmem:[%s3 + $0x30] sm:$0xf] %vm30, %v548
  %565 = vst.msk [vmem:[%s3 + $0x34] sm:$0xf] %vm30, %v549
  %566 = vst.msk [vmem:[%s3 + $0x38] sm:$0xf] %vm30, %v550
  %567 = vst.msk [vmem:[%s3 + $0x3c] sm:$0xf] %vm30, %v551
  // Predicated region
  $region14: #{dprnn_block_forward.6} parent=0 // pred_check
    _
  $region15: #{dprnn_block_forward.6} parent=0 // pred_check_branch
    %569 = sbr.rel (0) target = $region17
  $region16: #{dprnn_block_forward.6} parent=0 // pred_region
    _
  $region17: #{dprnn_block_forward.6} parent=0 // pred_fallthru
    _
  // Predicated region
  $region18: #{dprnn_block_forward.6} parent=0 // pred_check
    _
  $region19: #{dprnn_block_forward.6} parent=0 // pred_check_branch
    %571 = sbr.rel (0) target = $region21
  $region20: #{dprnn_block_forward.6} parent=0 // pred_region
    _
  $region21: #{dprnn_block_forward.6} parent=0 // pred_fallthru
    _

// kernel: dprnn_block_forward.8
$region0: #{dprnn_block_forward.8}
  #allocation0 [shape = 'u32[]', space=smem, size = 0x4, offset = 0x4, fixed_abs, tag = 'smem constant byte address 0x4 - core index']
  #allocation1 [shape = 'u32[72,128]{1,0:T(1,128)}', space=vmem, size = 0x9000, scoped, tag = 'internal scratch']
  #allocation2 [shape = 'f32[9,16,64]{2,1,0:T(8,128)}', space=vmem, size = 0x12000, scoped, tag = 'scratch operand']
  #allocation3 [shape = 'f32[9,16,64]{2,1,0:T(8,128)}', space=vmem, size = 0x12000, scoped, tag = 'scratch operand']
  %s0 = inlined_call_operand.vmem [shape: bf16[9,16,16], index: 0, kind: input, shape index: {}]
  %s1 = inlined_call_operand.vmem [shape: bf16[9,16,16], index: 1, kind: input, shape index: {}]
  %s2 = inlined_call_operand.vmem [shape: bf16[16,64], index: 2, kind: input, shape index: {}]
  %s3 = inlined_call_operand.vmem [shape: bf16[16,64], index: 3, kind: input, shape index: {}]
  %s4 = inlined_call_operand.vmem [shape: bf16[16,64], index: 4, kind: input, shape index: {}]
  %s5 = inlined_call_operand.vmem [shape: bf16[16,64], index: 5, kind: input, shape index: {}]
  %s6 = inlined_call_operand.vmem [shape: f32[4,16], index: 6, kind: input, shape index: {}]
  %s7 = inlined_call_operand.vmem [shape: f32[4,16], index: 7, kind: input, shape index: {}]
  %s8 = inlined_call_operand.vmem [shape: bf16[9,16,16], index: 8, kind: output, shape index: {0}]
  %s9 = inlined_call_operand.vmem [shape: bf16[9,16,16], index: 9, kind: output, shape index: {1}]
  %10 = xla_tuple %s8, %s9
  %s11 = sld [smem:[#allocation0]]
  $region57: #{dprnn_block_forward.8} parent=0
    _
  %s13 = ssub.s32 1, %s11
  %s14 = scalar_select 0, %s13, %s11
  // Predicated region
  $region2: #{dprnn_block_forward.8} parent=0 // pred_check
    _
  $region3: #{dprnn_block_forward.8} parent=0 // pred_check_branch
    %16 = sbr.rel (0) target = $region5
  $region4: #{dprnn_block_forward.8} parent=0 // pred_region
    _
  $region5: #{dprnn_block_forward.8} parent=0 // pred_fallthru
    _
  // Predicated region
  $region6: #{dprnn_block_forward.8} parent=0 // pred_check
    _
  $region7: #{dprnn_block_forward.8} parent=0 // pred_check_branch
    %18 = sbr.rel (0) target = $region9
  $region8: #{dprnn_block_forward.8} parent=0 // pred_region
    _
  $region9: #{dprnn_block_forward.8} parent=0 // pred_fallthru
    _
  // Predicated region
  $region10: #{dprnn_block_forward.8} parent=0 // pred_check
    _
  $region11: #{dprnn_block_forward.8} parent=0 // pred_check_branch
    %20 = sbr.rel (0) target = $region13
  $region12: #{dprnn_block_forward.8} parent=0 // pred_region
    _
  $region13: #{dprnn_block_forward.8} parent=0 // pred_fallthru
    _
  // Predicated region
  $region14: #{dprnn_block_forward.8} parent=0 // pred_check
    _
  $region15: #{dprnn_block_forward.8} parent=0 // pred_check_branch
    %22 = sbr.rel (0) target = $region17
  $region16: #{dprnn_block_forward.8} parent=0 // pred_region
    _
  $region17: #{dprnn_block_forward.8} parent=0 // pred_fallthru
    _
  // Predicated region
  $region18: #{dprnn_block_forward.8} parent=0 // pred_check
    _
  $region19: #{dprnn_block_forward.8} parent=0 // pred_check_branch
    %24 = sbr.rel (0) target = $region21
  $region20: #{dprnn_block_forward.8} parent=0 // pred_region
    _
  $region21: #{dprnn_block_forward.8} parent=0 // pred_fallthru
    _
  // Predicated region
  $region22: #{dprnn_block_forward.8} parent=0 // pred_check
    _
  $region23: #{dprnn_block_forward.8} parent=0 // pred_check_branch
    %26 = sbr.rel (0) target = $region25
  $region24: #{dprnn_block_forward.8} parent=0 // pred_region
    _
  $region25: #{dprnn_block_forward.8} parent=0 // pred_fallthru
    _
  // Predicated region
  $region26: #{dprnn_block_forward.8} parent=0 // pred_check
    _
  $region27: #{dprnn_block_forward.8} parent=0 // pred_check_branch
    %28 = sbr.rel (0) target = $region29
  $region28: #{dprnn_block_forward.8} parent=0 // pred_region
    _
  $region29: #{dprnn_block_forward.8} parent=0 // pred_fallthru
    _
  // Predicated region
  $region30: #{dprnn_block_forward.8} parent=0 // pred_check
    _
  $region31: #{dprnn_block_forward.8} parent=0 // pred_check_branch
    %30 = sbr.rel (0) target = $region33
  $region32: #{dprnn_block_forward.8} parent=0 // pred_region
    _
  $region33: #{dprnn_block_forward.8} parent=0 // pred_fallthru
    _
  %v32 = vld [vmem:[%s0] sm:$0xf]
  %v33 = vld [vmem:[%s0 + $0x4] sm:$0xf]
  %v34 = vld [vmem:[%s0 + $0x8] sm:$0xf]
  %v35 = vld [vmem:[%s0 + $0xc] sm:$0xf]
  %v36 = vld [vmem:[%s0 + $0x10] sm:$0xf]
  %v37 = vld [vmem:[%s0 + $0x14] sm:$0xf]
  %v38 = vld [vmem:[%s0 + $0x18] sm:$0xf]
  %v39 = vld [vmem:[%s0 + $0x1c] sm:$0xf]
  %v40 = vld [vmem:[%s0 + $0x20] sm:$0xf]
  %v41 = vld [vmem:[%s0 + $0x24] sm:$0xf]
  %v42 = vld [vmem:[%s0 + $0x28] sm:$0xf]
  %v43 = vld [vmem:[%s0 + $0x2c] sm:$0xf]
  %v44 = vld [vmem:[%s0 + $0x30] sm:$0xf]
  %v45 = vld [vmem:[%s0 + $0x34] sm:$0xf]
  %v46 = vld [vmem:[%s0 + $0x38] sm:$0xf]
  %v47 = vld [vmem:[%s0 + $0x3c] sm:$0xf]
  %v48 = vld [vmem:[%s0 + $0x40] sm:$0xf]
  %v49 = vld [vmem:[%s0 + $0x44] sm:$0xf]
  %v50 = vld [vmem:[%s1] sm:$0xf]
  %v51 = vld [vmem:[%s1 + $0x4] sm:$0xf]
  %v52 = vld [vmem:[%s1 + $0x8] sm:$0xf]
  %v53 = vld [vmem:[%s1 + $0xc] sm:$0xf]
  %v54 = vld [vmem:[%s1 + $0x10] sm:$0xf]
  %v55 = vld [vmem:[%s1 + $0x14] sm:$0xf]
  %v56 = vld [vmem:[%s1 + $0x18] sm:$0xf]
  %v57 = vld [vmem:[%s1 + $0x1c] sm:$0xf]
  %v58 = vld [vmem:[%s1 + $0x20] sm:$0xf]
  %v59 = vld [vmem:[%s1 + $0x24] sm:$0xf]
  %v60 = vld [vmem:[%s1 + $0x28] sm:$0xf]
  %v61 = vld [vmem:[%s1 + $0x2c] sm:$0xf]
  %v62 = vld [vmem:[%s1 + $0x30] sm:$0xf]
  %v63 = vld [vmem:[%s1 + $0x34] sm:$0xf]
  %v64 = vld [vmem:[%s1 + $0x38] sm:$0xf]
  %v65 = vld [vmem:[%s1 + $0x3c] sm:$0xf]
  %v66 = vld [vmem:[%s1 + $0x40] sm:$0xf]
  %v67 = vld [vmem:[%s1 + $0x44] sm:$0xf]
  %v68 = vld [vmem:[%s2] sm:$0xf]
  %v69 = vld [vmem:[%s2 + $0x4] sm:$0xf]
  %v70 = vld [vmem:[%s3] sm:$0xf]
  %v71 = vld [vmem:[%s3 + $0x4] sm:$0xf]
  %v90 = vunpack.c.l.b16 %v50
  %v91 = vunpack.c.l.b16 %v51
  %v92 = vunpack.c.l.b16 %v52
  %v93 = vunpack.c.l.b16 %v53
  %v94 = vunpack.c.l.b16 %v54
  %v95 = vunpack.c.l.b16 %v55
  %v96 = vunpack.c.l.b16 %v56
  %v97 = vunpack.c.l.b16 %v57
  %v98 = vunpack.c.l.b16 %v58
  %v99 = vunpack.c.l.b16 %v59
  %v100 = vunpack.c.l.b16 %v60
  %v101 = vunpack.c.l.b16 %v61
  %v102 = vunpack.c.l.b16 %v62
  %v103 = vunpack.c.l.b16 %v63
  %v104 = vunpack.c.l.b16 %v64
  %v105 = vunpack.c.l.b16 %v65
  %v106 = vunpack.c.l.b16 %v66
  %v107 = vunpack.c.l.b16 %v67
  %v108 = vpack.c.b16 %v91, %v90
  %v109 = vpack.c.b16 %v93, %v92
  %v110 = vpack.c.b16 %v95, %v94
  %v111 = vpack.c.b16 %v97, %v96
  %v112 = vpack.c.b16 %v99, %v98
  %v113 = vpack.c.b16 %v101, %v100
  %v114 = vpack.c.b16 %v103, %v102
  %v115 = vpack.c.b16 %v105, %v104
  %v116 = vpack.c.b16 %v107, %v106
  %v119 = vunpack.c.l.b16 %v70
  %v120 = vunpack.c.l.b16 %v71
  %v121 = vpack.c.b16 %v120, %v119
  %vm123 = vcmask 130048
  %v125 = vsel %vm123, %v108, 0
  %v128 = vsel %vm123, %v109, 0
  %v131 = vsel %vm123, %v110, 0
  %v134 = vsel %vm123, %v111, 0
  %v137 = vsel %vm123, %v112, 0
  %v140 = vsel %vm123, %v113, 0
  %v143 = vsel %vm123, %v114, 0
  %v146 = vsel %vm123, %v115, 0
  %v149 = vsel %vm123, %v116, 0
  %151 = vmatpush.bf16.msra.mxu0 0
  %152 = vmatpush.bf16.msra.mxu0 0
  %153 = vmatpush.bf16.msra.mxu0 0
  %154 = vmatpush.bf16.msra.mxu0 0
  %155 = vmatpush.bf16.msra.mxu0 0
  %156 = vmatpush.bf16.msra.mxu0 0
  %157 = vmatpush.bf16.msra.mxu0 0
  %158 = vmatpush.bf16.msra.mxu0 %v121
  %159 = vmatmul.bf16.gmra.mxu0 %v125
  %v160 = vpop.f32.mrf.mxu0
  %v161 = vadd.f32 0.0, %v160
  %v162 = vpop.f32.mrf.mxu0
  %v163 = vadd.f32 0.0, %v162
  %164 = vmatmul.bf16.gmra.mxu0 %v128
  %v165 = vpop.f32.mrf.mxu0
  %v166 = vadd.f32 0.0, %v165
  %v167 = vpop.f32.mrf.mxu0
  %v168 = vadd.f32 0.0, %v167
  %169 = vmatmul.bf16.gmra.mxu0 %v131
  %v170 = vpop.f32.mrf.mxu0
  %v171 = vadd.f32 0.0, %v170
  %v172 = vpop.f32.mrf.mxu0
  %v173 = vadd.f32 0.0, %v172
  %174 = vmatmul.bf16.gmra.mxu0 %v134
  %v175 = vpop.f32.mrf.mxu0
  %v176 = vadd.f32 0.0, %v175
  %v177 = vpop.f32.mrf.mxu0
  %v178 = vadd.f32 0.0, %v177
  %179 = vmatmul.bf16.gmra.mxu0 %v137
  %v180 = vpop.f32.mrf.mxu0
  %v181 = vadd.f32 0.0, %v180
  %v182 = vpop.f32.mrf.mxu0
  %v183 = vadd.f32 0.0, %v182
  %184 = vmatmul.bf16.gmra.mxu0 %v140
  %v185 = vpop.f32.mrf.mxu0
  %v186 = vadd.f32 0.0, %v185
  %v187 = vpop.f32.mrf.mxu0
  %v188 = vadd.f32 0.0, %v187
  %189 = vmatmul.bf16.gmra.mxu0 %v143
  %v190 = vpop.f32.mrf.mxu0
  %v191 = vadd.f32 0.0, %v190
  %v192 = vpop.f32.mrf.mxu0
  %v193 = vadd.f32 0.0, %v192
  %194 = vmatmul.bf16.gmra.mxu0 %v146
  %v195 = vpop.f32.mrf.mxu0
  %v196 = vadd.f32 0.0, %v195
  %v197 = vpop.f32.mrf.mxu0
  %v198 = vadd.f32 0.0, %v197
  %199 = vmatmul.bf16.gmra.mxu0 %v149
  %v200 = vpop.f32.mrf.mxu0
  %v201 = vadd.f32 0.0, %v200
  %v202 = vpop.f32.mrf.mxu0
  %v203 = vadd.f32 0.0, %v202
  %204 = vdwg.mxu0
  %v223 = vunpack.c.l.b16 %v32
  %v224 = vunpack.c.l.b16 %v33
  %v225 = vunpack.c.l.b16 %v34
  %v226 = vunpack.c.l.b16 %v35
  %v227 = vunpack.c.l.b16 %v36
  %v228 = vunpack.c.l.b16 %v37
  %v229 = vunpack.c.l.b16 %v38
  %v230 = vunpack.c.l.b16 %v39
  %v231 = vunpack.c.l.b16 %v40
  %v232 = vunpack.c.l.b16 %v41
  %v233 = vunpack.c.l.b16 %v42
  %v234 = vunpack.c.l.b16 %v43
  %v235 = vunpack.c.l.b16 %v44
  %v236 = vunpack.c.l.b16 %v45
  %v237 = vunpack.c.l.b16 %v46
  %v238 = vunpack.c.l.b16 %v47
  %v239 = vunpack.c.l.b16 %v48
  %v240 = vunpack.c.l.b16 %v49
  %v241 = vpack.c.b16 %v224, %v223
  %v242 = vpack.c.b16 %v226, %v225
  %v243 = vpack.c.b16 %v228, %v227
  %v244 = vpack.c.b16 %v230, %v229
  %v245 = vpack.c.b16 %v232, %v231
  %v246 = vpack.c.b16 %v234, %v233
  %v247 = vpack.c.b16 %v236, %v235
  %v248 = vpack.c.b16 %v238, %v237
  %v249 = vpack.c.b16 %v240, %v239
  %v252 = vunpack.c.l.b16 %v68
  %v253 = vunpack.c.l.b16 %v69
  %v254 = vpack.c.b16 %v253, %v252
  %v257 = vsel %vm123, %v241, 0
  %v260 = vsel %vm123, %v242, 0
  %v263 = vsel %vm123, %v243, 0
  %v266 = vsel %vm123, %v244, 0
  %v269 = vsel %vm123, %v245, 0
  %v272 = vsel %vm123, %v246, 0
  %v275 = vsel %vm123, %v247, 0
  %v278 = vsel %vm123, %v248, 0
  %v281 = vsel %vm123, %v249, 0
  %283 = vmatpush.bf16.msra.mxu0 0
  %284 = vmatpush.bf16.msra.mxu0 0
  %285 = vmatpush.bf16.msra.mxu0 0
  %286 = vmatpush.bf16.msra.mxu0 0
  %287 = vmatpush.bf16.msra.mxu0 0
  %288 = vmatpush.bf16.msra.mxu0 0
  %289 = vmatpush.bf16.msra.mxu0 0
  %290 = vmatpush.bf16.msra.mxu0 %v254
  %291 = vmatmul.bf16.gmra.mxu0 %v257
  %v292 = vpop.f32.mrf.mxu0
  %v293 = vadd.f32 %v161, %v292
  %v294 = vpop.f32.mrf.mxu0
  %v295 = vadd.f32 %v163, %v294
  %296 = vmatmul.bf16.gmra.mxu0 %v260
  %v297 = vpop.f32.mrf.mxu0
  %v298 = vadd.f32 %v166, %v297
  %v299 = vpop.f32.mrf.mxu0
  %v300 = vadd.f32 %v168, %v299
  %301 = vmatmul.bf16.gmra.mxu0 %v263
  %v302 = vpop.f32.mrf.mxu0
  %v303 = vadd.f32 %v171, %v302
  %v304 = vpop.f32.mrf.mxu0
  %v305 = vadd.f32 %v173, %v304
  %306 = vmatmul.bf16.gmra.mxu0 %v266
  %v307 = vpop.f32.mrf.mxu0
  %v308 = vadd.f32 %v176, %v307
  %v309 = vpop.f32.mrf.mxu0
  %v310 = vadd.f32 %v178, %v309
  %311 = vmatmul.bf16.gmra.mxu0 %v269
  %v312 = vpop.f32.mrf.mxu0
  %v313 = vadd.f32 %v181, %v312
  %v314 = vpop.f32.mrf.mxu0
  %v315 = vadd.f32 %v183, %v314
  %316 = vmatmul.bf16.gmra.mxu0 %v272
  %v317 = vpop.f32.mrf.mxu0
  %v318 = vadd.f32 %v186, %v317
  %v319 = vpop.f32.mrf.mxu0
  %v320 = vadd.f32 %v188, %v319
  %321 = vmatmul.bf16.gmra.mxu0 %v275
  %v322 = vpop.f32.mrf.mxu0
  %v323 = vadd.f32 %v191, %v322
  %v324 = vpop.f32.mrf.mxu0
  %v325 = vadd.f32 %v193, %v324
  %326 = vmatmul.bf16.gmra.mxu0 %v278
  %v327 = vpop.f32.mrf.mxu0
  %v328 = vadd.f32 %v196, %v327
  %v329 = vpop.f32.mrf.mxu0
  %v330 = vadd.f32 %v198, %v329
  %331 = vmatmul.bf16.gmra.mxu0 %v281
  %v332 = vpop.f32.mrf.mxu0
  %v333 = vadd.f32 %v201, %v332
  %v334 = vpop.f32.mrf.mxu0
  %v335 = vadd.f32 %v203, %v334
  %336 = vdwg.mxu0
  %v337 = vld [vmem:[%s4] sm:$0xf]
  %v338 = vld [vmem:[%s4 + $0x4] sm:$0xf]
  %v339 = vld [vmem:[%s5] sm:$0xf]
  %v340 = vld [vmem:[%s5 + $0x4] sm:$0xf]
  %v343 = vunpack.c.l.b16 %v339
  %v344 = vunpack.c.l.b16 %v340
  %v345 = vpack.c.b16 %v344, %v343
  %347 = vmatpush.bf16.msra.mxu0 0
  %348 = vmatpush.bf16.msra.mxu0 0
  %349 = vmatpush.bf16.msra.mxu0 0
  %350 = vmatpush.bf16.msra.mxu0 0
  %351 = vmatpush.bf16.msra.mxu0 0
  %352 = vmatpush.bf16.msra.mxu0 0
  %353 = vmatpush.bf16.msra.mxu0 0
  %354 = vmatpush.bf16.msra.mxu0 %v345
  %355 = vmatmul.bf16.gmra.mxu0 %v125
  %v356 = vpop.f32.mrf.mxu0
  %v357 = vadd.f32 0.0, %v356
  %v358 = vpop.f32.mrf.mxu0
  %v359 = vadd.f32 0.0, %v358
  %360 = vmatmul.bf16.gmra.mxu0 %v128
  %v361 = vpop.f32.mrf.mxu0
  %v362 = vadd.f32 0.0, %v361
  %v363 = vpop.f32.mrf.mxu0
  %v364 = vadd.f32 0.0, %v363
  %365 = vmatmul.bf16.gmra.mxu0 %v131
  %v366 = vpop.f32.mrf.mxu0
  %v367 = vadd.f32 0.0, %v366
  %v368 = vpop.f32.mrf.mxu0
  %v369 = vadd.f32 0.0, %v368
  %370 = vmatmul.bf16.gmra.mxu0 %v134
  %v371 = vpop.f32.mrf.mxu0
  %v372 = vadd.f32 0.0, %v371
  %v373 = vpop.f32.mrf.mxu0
  %v374 = vadd.f32 0.0, %v373
  %375 = vmatmul.bf16.gmra.mxu0 %v137
  %v376 = vpop.f32.mrf.mxu0
  %v377 = vadd.f32 0.0, %v376
  %v378 = vpop.f32.mrf.mxu0
  %v379 = vadd.f32 0.0, %v378
  %380 = vmatmul.bf16.gmra.mxu0 %v140
  %v381 = vpop.f32.mrf.mxu0
  %v382 = vadd.f32 0.0, %v381
  %v383 = vpop.f32.mrf.mxu0
  %v384 = vadd.f32 0.0, %v383
  %385 = vmatmul.bf16.gmra.mxu0 %v143
  %v386 = vpop.f32.mrf.mxu0
  %v387 = vadd.f32 0.0, %v386
  %v388 = vpop.f32.mrf.mxu0
  %v389 = vadd.f32 0.0, %v388
  %390 = vmatmul.bf16.gmra.mxu0 %v146
  %v391 = vpop.f32.mrf.mxu0
  %v392 = vadd.f32 0.0, %v391
  %v393 = vpop.f32.mrf.mxu0
  %v394 = vadd.f32 0.0, %v393
  %395 = vmatmul.bf16.gmra.mxu0 %v149
  %v396 = vpop.f32.mrf.mxu0
  %v397 = vadd.f32 0.0, %v396
  %v398 = vpop.f32.mrf.mxu0
  %v399 = vadd.f32 0.0, %v398
  %400 = vdwg.mxu0
  %v403 = vunpack.c.l.b16 %v337
  %v404 = vunpack.c.l.b16 %v338
  %v405 = vpack.c.b16 %v404, %v403
  %407 = vmatpush.bf16.msra.mxu0 0
  %408 = vmatpush.bf16.msra.mxu0 0
  %409 = vmatpush.bf16.msra.mxu0 0
  %410 = vmatpush.bf16.msra.mxu0 0
  %411 = vmatpush.bf16.msra.mxu0 0
  %412 = vmatpush.bf16.msra.mxu0 0
  %413 = vmatpush.bf16.msra.mxu0 0
  %414 = vmatpush.bf16.msra.mxu0 %v405
  %415 = vmatmul.bf16.gmra.mxu0 %v257
  %v416 = vpop.f32.mrf.mxu0
  %v417 = vadd.f32 %v357, %v416
  %v418 = vpop.f32.mrf.mxu0
  %v419 = vadd.f32 %v359, %v418
  %420 = vmatmul.bf16.gmra.mxu0 %v260
  %v421 = vpop.f32.mrf.mxu0
  %v422 = vadd.f32 %v362, %v421
  %v423 = vpop.f32.mrf.mxu0
  %v424 = vadd.f32 %v364, %v423
  %425 = vmatmul.bf16.gmra.mxu0 %v263
  %v426 = vpop.f32.mrf.mxu0
  %v427 = vadd.f32 %v367, %v426
  %v428 = vpop.f32.mrf.mxu0
  %v429 = vadd.f32 %v369, %v428
  %430 = vmatmul.bf16.gmra.mxu0 %v266
  %v431 = vpop.f32.mrf.mxu0
  %v432 = vadd.f32 %v372, %v431
  %v433 = vpop.f32.mrf.mxu0
  %v434 = vadd.f32 %v374, %v433
  %435 = vmatmul.bf16.gmra.mxu0 %v269
  %v436 = vpop.f32.mrf.mxu0
  %v437 = vadd.f32 %v377, %v436
  %v438 = vpop.f32.mrf.mxu0
  %v439 = vadd.f32 %v379, %v438
  %440 = vmatmul.bf16.gmra.mxu0 %v272
  %v441 = vpop.f32.mrf.mxu0
  %v442 = vadd.f32 %v382, %v441
  %v443 = vpop.f32.mrf.mxu0
  %v444 = vadd.f32 %v384, %v443
  %445 = vmatmul.bf16.gmra.mxu0 %v275
  %v446 = vpop.f32.mrf.mxu0
  %v447 = vadd.f32 %v387, %v446
  %v448 = vpop.f32.mrf.mxu0
  %v449 = vadd.f32 %v389, %v448
  %450 = vmatmul.bf16.gmra.mxu0 %v278
  %v451 = vpop.f32.mrf.mxu0
  %v452 = vadd.f32 %v392, %v451
  %v453 = vpop.f32.mrf.mxu0
  %v454 = vadd.f32 %v394, %v453
  %455 = vmatmul.bf16.gmra.mxu0 %v281
  %v456 = vpop.f32.mrf.mxu0
  %v457 = vadd.f32 %v397, %v456
  %v458 = vpop.f32.mrf.mxu0
  %v459 = vadd.f32 %v399, %v458
  %460 = vdwg.mxu0
  %vm461 = vcmask 523264
  %462 = vst.msk [vmem:[#allocation2] sm:$0xff] %vm461, %v293
  %463 = vst.msk [vmem:[#allocation2 + $0x8] sm:$0xff] %vm461, %v295
  %464 = vst.msk [vmem:[#allocation2 + $0x10] sm:$0xff] %vm461, %v298
  %465 = vst.msk [vmem:[#allocation2 + $0x18] sm:$0xff] %vm461, %v300
  %466 = vst.msk [vmem:[#allocation2 + $0x20] sm:$0xff] %vm461, %v303
  %467 = vst.msk [vmem:[#allocation2 + $0x28] sm:$0xff] %vm461, %v305
  %468 = vst.msk [vmem:[#allocation2 + $0x30] sm:$0xff] %vm461, %v308
  %469 = vst.msk [vmem:[#allocation2 + $0x38] sm:$0xff] %vm461, %v310
  %470 = vst.msk [vmem:[#allocation2 + $0x40] sm:$0xff] %vm461, %v313
  %471 = vst.msk [vmem:[#allocation2 + $0x48] sm:$0xff] %vm461, %v315
  %472 = vst.msk [vmem:[#allocation2 + $0x50] sm:$0xff] %vm461, %v318
  %473 = vst.msk [vmem:[#allocation2 + $0x58] sm:$0xff] %vm461, %v320
  %474 = vst.msk [vmem:[#allocation2 + $0x60] sm:$0xff] %vm461, %v323
  %475 = vst.msk [vmem:[#allocation2 + $0x68] sm:$0xff] %vm461, %v325
  %476 = vst.msk [vmem:[#allocation2 + $0x70] sm:$0xff] %vm461, %v328
  %477 = vst.msk [vmem:[#allocation2 + $0x78] sm:$0xff] %vm461, %v330
  %478 = vst.msk [vmem:[#allocation2 + $0x80] sm:$0xff] %vm461, %v333
  %479 = vst.msk [vmem:[#allocation2 + $0x88] sm:$0xff] %vm461, %v335
  %480 = vst.msk [vmem:[#allocation3] sm:$0xff] %vm461, %v417
  %481 = vst.msk [vmem:[#allocation3 + $0x8] sm:$0xff] %vm461, %v419
  %482 = vst.msk [vmem:[#allocation3 + $0x10] sm:$0xff] %vm461, %v422
  %483 = vst.msk [vmem:[#allocation3 + $0x18] sm:$0xff] %vm461, %v424
  %484 = vst.msk [vmem:[#allocation3 + $0x20] sm:$0xff] %vm461, %v427
  %485 = vst.msk [vmem:[#allocation3 + $0x28] sm:$0xff] %vm461, %v429
  %486 = vst.msk [vmem:[#allocation3 + $0x30] sm:$0xff] %vm461, %v432
  %487 = vst.msk [vmem:[#allocation3 + $0x38] sm:$0xff] %vm461, %v434
  %488 = vst.msk [vmem:[#allocation3 + $0x40] sm:$0xff] %vm461, %v437
  %489 = vst.msk [vmem:[#allocation3 + $0x48] sm:$0xff] %vm461, %v439
  %490 = vst.msk [vmem:[#allocation3 + $0x50] sm:$0xff] %vm461, %v442
  %491 = vst.msk [vmem:[#allocation3 + $0x58] sm:$0xff] %vm461, %v444
  %492 = vst.msk [vmem:[#allocation3 + $0x60] sm:$0xff] %vm461, %v447
  %493 = vst.msk [vmem:[#allocation3 + $0x68] sm:$0xff] %vm461, %v449
  %494 = vst.msk [vmem:[#allocation3 + $0x70] sm:$0xff] %vm461, %v452
  %495 = vst.msk [vmem:[#allocation3 + $0x78] sm:$0xff] %vm461, %v454
  %496 = vst.msk [vmem:[#allocation3 + $0x80] sm:$0xff] %vm461, %v457
  %497 = vst.msk [vmem:[#allocation3 + $0x88] sm:$0xff] %vm461, %v459
  %v498 = vld [vmem:[%s6] sm:$0xf]
  %v499 = vld [vmem:[%s7] sm:$0xf]
  loop: start=0, step=1, limit=9
  $region34: #{dprnn_block_forward.8} parent=0 // loop_pre_header
    _
  $region35: #{dprnn_block_forward.8} parent=0 // loop_header
    %s501 = sphi 0, %s505
    %p502 = scmp.ge.s32.totalorder %s501, 9
    %v506 = vphi 0.0, %v652
    %v507 = vphi 0.0, %v653
    %v508 = vphi 0.0, %v835
    %v509 = vphi 0.0, %v836
  $region36: #{dprnn_block_forward.8} parent=0 // loop_header_branch
    %504 = sbr.rel (%p502) target = $region40
  $region37: #{dprnn_block_forward.8} parent=0 // loop_body
    %s510 = smul.u32 %s501, 16
    %s511 = scalar_lea.vmem [#allocation2], %s510
    %v512 = vld [vmem:[%s511] sm:$0xff]
    %v513 = vld [vmem:[%s511 + $0x8] sm:$0xff]
    %v514 = vperm.slane %v498, 0
    %517 = vrot.lane.b32.xlu0 %v506, 112
    %v518 = vpop.permute.xlu0 %517
    %519 = vrot.lane.b32.xlu0 %v507, 112
    %v520 = vpop.permute.xlu0 %519
    %v523 = vmul.f32 %v514, %v518
    %v524 = vmul.f32 %v514, %v520
    %527 = vrot.lane.b32.xlu0 %v523, 16
    %v528 = vpop.permute.xlu0 %527
    %529 = vrot.lane.b32.xlu0 %v524, 16
    %v530 = vpop.permute.xlu0 %529
    %v533 = vadd.f32 %v512, %v528
    %v534 = vadd.f32 %v513, %v530
    %v535 = vperm.slane %v499, 0
    %537 = vrot.lane.b32.xlu0 %v535, 16
    %v538 = vpop.permute.xlu0 %537
    %v540 = vadd.f32 %v533, %v538
    %v541 = vadd.f32 %v534, %v538
    %v542 = vxor.u32 %v540, 2147483648
    %v543 = vxor.u32 %v541, 2147483648
    %v544 = vmul.f32 %v542, 1.442695
    %v545 = vpow.pop %v544
    %v546 = vmul.f32 %v543, 1.442695
    %v547 = vpow.pop %v546
    %v548 = vadd.f32 %v545, 1.0
    %v549 = vadd.f32 %v547, 1.0
    %v550 = vrcp.pop %v548
    %v551 = vmul.f32 %v548, %v550
    %v552 = vsub.f32 1.0, %v551
    %v553 = vmul.f32 %v550, %v552
    %v554 = vadd.f32 %v550, %v553
    %vm555 = vweird.f32 %v548
    %vm556 = vweird.f32 %v550
    %vm557 = vmor %vm555, %vm556
    %v558 = vsel %vm557, %v550, %v554
    %v559 = vand.u32 2147483647, %v548
    %vm560 = vcmp.eq.f32.partialorder %v559, 8.507059e+37
    %v561 = vand.u32 %v548, 2147483648
    %v562 = vor.u32 1.1754944e-38, %v561
    %v563 = vsel %vm560, %v562, %v558
    %v564 = vmul.f32 1.0, %v563
    %v565 = vrcp.pop %v549
    %v566 = vmul.f32 %v549, %v565
    %v567 = vsub.f32 1.0, %v566
    %v568 = vmul.f32 %v565, %v567
    %v569 = vadd.f32 %v565, %v568
    %vm570 = vweird.f32 %v549
    %vm571 = vweird.f32 %v565
    %vm572 = vmor %vm570, %vm571
    %v573 = vsel %vm572, %v565, %v569
    %v574 = vand.u32 2147483647, %v549
    %vm575 = vcmp.eq.f32.partialorder %v574, 8.507059e+37
    %v576 = vand.u32 %v549, 2147483648
    %v577 = vor.u32 1.1754944e-38, %v576
    %v578 = vsel %vm575, %v577, %v573
    %v579 = vmul.f32 1.0, %v578
    %v580 = vperm.slane %v498, 1
    %v581 = vmul.f32 %v580, %v518
    %v582 = vmul.f32 %v580, %v520
    %585 = vrot.lane.b32.xlu0 %v581, 32
    %v586 = vpop.permute.xlu0 %585
    %587 = vrot.lane.b32.xlu0 %v582, 32
    %v588 = vpop.permute.xlu0 %587
    %v591 = vadd.f32 %v512, %v586
    %v592 = vadd.f32 %v513, %v588
    %v593 = vperm.slane %v499, 1
    %595 = vrot.lane.b32.xlu0 %v593, 32
    %v596 = vpop.permute.xlu0 %595
    %v598 = vadd.f32 %v591, %v596
    %v599 = vadd.f32 %v592, %v596
    %v600 = vxor.u32 %v598, 2147483648
    %v601 = vxor.u32 %v599, 2147483648
    %v602 = vmul.f32 %v600, 1.442695
    %v603 = vpow.pop %v602
    %v604 = vmul.f32 %v601, 1.442695
    %v605 = vpow.pop %v604
    %v606 = vadd.f32 %v603, 1.0
    %v607 = vadd.f32 %v605, 1.0
    %v608 = vrcp.pop %v606
    %v609 = vmul.f32 %v606, %v608
    %v610 = vsub.f32 1.0, %v609
    %v611 = vmul.f32 %v608, %v610
    %v612 = vadd.f32 %v608, %v611
    %vm613 = vweird.f32 %v606
    %vm614 = vweird.f32 %v608
    %vm615 = vmor %vm613, %vm614
    %v616 = vsel %vm615, %v608, %v612
    %v617 = vand.u32 2147483647, %v606
    %vm618 = vcmp.eq.f32.partialorder %v617, 8.507059e+37
    %v619 = vand.u32 %v606, 2147483648
    %v620 = vor.u32 1.1754944e-38, %v619
    %v621 = vsel %vm618, %v620, %v616
    %v622 = vmul.f32 1.0, %v621
    %v623 = vrcp.pop %v607
    %v624 = vmul.f32 %v607, %v623
    %v625 = vsub.f32 1.0, %v624
    %v626 = vmul.f32 %v623, %v625
    %v627 = vadd.f32 %v623, %v626
    %vm628 = vweird.f32 %v607
    %vm629 = vweird.f32 %v623
    %vm630 = vmor %vm628, %vm629
    %v631 = vsel %vm630, %v623, %v627
    %v632 = vand.u32 2147483647, %v607
    %vm633 = vcmp.eq.f32.partialorder %v632, 8.507059e+37
    %v634 = vand.u32 %v607, 2147483648
    %v635 = vor.u32 1.1754944e-38, %v634
    %v636 = vsel %vm633, %v635, %v631
    %v637 = vmul.f32 1.0, %v636
    %v638 = vmul.f32 %v564, %v506
    %v639 = vmul.f32 %v579, %v507
    %v640 = vsub.f32 1.0, %v564
    %v641 = vsub.f32 1.0, %v579
    %644 = vrot.lane.b32.xlu0 %v512, 16
    %v645 = vpop.permute.xlu0 %644
    %646 = vrot.lane.b32.xlu0 %v513, 16
    %v647 = vpop.permute.xlu0 %646
    %v650 = vmul.f32 %v640, %v645
    %v651 = vmul.f32 %v641, %v647
    %v652 = vadd.f32 %v638, %v650
    %v653 = vadd.f32 %v639, %v651
    %656 = vrot.lane.b32.xlu0 %v652, 16
    %v657 = vpop.permute.xlu0 %656
    %658 = vrot.lane.b32.xlu0 %v653, 16
    %v659 = vpop.permute.xlu0 %658
    %v662 = vmul.f32 %v622, %v657
    %v663 = vmul.f32 %v637, %v659
    %v664 = vsub.f32 1.0, %v622
    %v665 = vsub.f32 1.0, %v637
    %666 = vrot.lane.b32.xlu0 %v512, 112
    %v667 = vpop.permute.xlu0 %666
    %668 = vrot.lane.b32.xlu0 %v513, 112
    %v669 = vpop.permute.xlu0 %668
    %v672 = vmul.f32 %v664, %v667
    %v673 = vmul.f32 %v665, %v669
    %v674 = vadd.f32 %v662, %v672
    %v675 = vadd.f32 %v663, %v673
    %v676 = vpack.c.bf16 %v674, %v674
    %v677 = vpack.c.bf16 %v675, %v675
    %680 = vrot.lane.b32.xlu0 %v676, 96
    %v681 = vpop.permute.xlu0 %680
    %682 = vrot.lane.b32.xlu0 %v677, 96
    %v683 = vpop.permute.xlu0 %682
    %s686 = smul.u32 %s501, 2
    %s687 = smul.addr %s686, 4
    %s688 = scalar_lea.vmem %s8, %s687
    %vm689 = vcmask 125952
    %690 = vst.msk [vmem:[%s688] sm:$0xf] %vm689, %v681
    %691 = vst.msk [vmem:[%s688 + $0x4] sm:$0xf] %vm689, %v683
    %s692 = ssub.s32 8, %s501
    %s693 = smul.u32 %s692, 16
    %s694 = scalar_lea.vmem [#allocation3], %s693
    %v695 = vld [vmem:[%s694] sm:$0xff]
    %v696 = vld [vmem:[%s694 + $0x8] sm:$0xff]
    %v697 = vperm.slane %v498, 2
    %700 = vrot.lane.b32.xlu0 %v508, 112
    %v701 = vpop.permute.xlu0 %700
    %702 = vrot.lane.b32.xlu0 %v509, 112
    %v703 = vpop.permute.xlu0 %702
    %v706 = vmul.f32 %v697, %v701
    %v707 = vmul.f32 %v697, %v703
    %710 = vrot.lane.b32.xlu0 %v706, 16
    %v711 = vpop.permute.xlu0 %710
    %712 = vrot.lane.b32.xlu0 %v707, 16
    %v713 = vpop.permute.xlu0 %712
    %v716 = vadd.f32 %v695, %v711
    %v717 = vadd.f32 %v696, %v713
    %v718 = vperm.slane %v499, 2
    %720 = vrot.lane.b32.xlu0 %v718, 16
    %v721 = vpop.permute.xlu0 %720
    %v723 = vadd.f32 %v716, %v721
    %v724 = vadd.f32 %v717, %v721
    %v725 = vxor.u32 %v723, 2147483648
    %v726 = vxor.u32 %v724, 2147483648
    %v727 = vmul.f32 %v725, 1.442695
    %v728 = vpow.pop %v727
    %v729 = vmul.f32 %v726, 1.442695
    %v730 = vpow.pop %v729
    %v731 = vadd.f32 %v728, 1.0
    %v732 = vadd.f32 %v730, 1.0
    %v733 = vrcp.pop %v731
    %v734 = vmul.f32 %v731, %v733
    %v735 = vsub.f32 1.0, %v734
    %v736 = vmul.f32 %v733, %v735
    %v737 = vadd.f32 %v733, %v736
    %vm738 = vweird.f32 %v731
    %vm739 = vweird.f32 %v733
    %vm740 = vmor %vm738, %vm739
    %v741 = vsel %vm740, %v733, %v737
    %v742 = vand.u32 2147483647, %v731
    %vm743 = vcmp.eq.f32.partialorder %v742, 8.507059e+37
    %v744 = vand.u32 %v731, 2147483648
    %v745 = vor.u32 1.1754944e-38, %v744
    %v746 = vsel %vm743, %v745, %v741
    %v747 = vmul.f32 1.0, %v746
    %v748 = vrcp.pop %v732
    %v749 = vmul.f32 %v732, %v748
    %v750 = vsub.f32 1.0, %v749
    %v751 = vmul.f32 %v748, %v750
    %v752 = vadd.f32 %v748, %v751
    %vm753 = vweird.f32 %v732
    %vm754 = vweird.f32 %v748
    %vm755 = vmor %vm753, %vm754
    %v756 = vsel %vm755, %v748, %v752
    %v757 = vand.u32 2147483647, %v732
    %vm758 = vcmp.eq.f32.partialorder %v757, 8.507059e+37
    %v759 = vand.u32 %v732, 2147483648
    %v760 = vor.u32 1.1754944e-38, %v759
    %v761 = vsel %vm758, %v760, %v756
    %v762 = vmul.f32 1.0, %v761
    %v763 = vperm.slane %v498, 3
    %v764 = vmul.f32 %v763, %v701
    %v765 = vmul.f32 %v763, %v703
    %768 = vrot.lane.b32.xlu0 %v764, 32
    %v769 = vpop.permute.xlu0 %768
    %770 = vrot.lane.b32.xlu0 %v765, 32
    %v771 = vpop.permute.xlu0 %770
    %v774 = vadd.f32 %v695, %v769
    %v775 = vadd.f32 %v696, %v771
    %v776 = vperm.slane %v499, 3
    %778 = vrot.lane.b32.xlu0 %v776, 32
    %v779 = vpop.permute.xlu0 %778
    %v781 = vadd.f32 %v774, %v779
    %v782 = vadd.f32 %v775, %v779
    %v783 = vxor.u32 %v781, 2147483648
    %v784 = vxor.u32 %v782, 2147483648
    %v785 = vmul.f32 %v783, 1.442695
    %v786 = vpow.pop %v785
    %v787 = vmul.f32 %v784, 1.442695
    %v788 = vpow.pop %v787
    %v789 = vadd.f32 %v786, 1.0
    %v790 = vadd.f32 %v788, 1.0
    %v791 = vrcp.pop %v789
    %v792 = vmul.f32 %v789, %v791
    %v793 = vsub.f32 1.0, %v792
    %v794 = vmul.f32 %v791, %v793
    %v795 = vadd.f32 %v791, %v794
    %vm796 = vweird.f32 %v789
    %vm797 = vweird.f32 %v791
    %vm798 = vmor %vm796, %vm797
    %v799 = vsel %vm798, %v791, %v795
    %v800 = vand.u32 2147483647, %v789
    %vm801 = vcmp.eq.f32.partialorder %v800, 8.507059e+37
    %v802 = vand.u32 %v789, 2147483648
    %v803 = vor.u32 1.1754944e-38, %v802
    %v804 = vsel %vm801, %v803, %v799
    %v805 = vmul.f32 1.0, %v804
    %v806 = vrcp.pop %v790
    %v807 = vmul.f32 %v790, %v806
    %v808 = vsub.f32 1.0, %v807
    %v809 = vmul.f32 %v806, %v808
    %v810 = vadd.f32 %v806, %v809
    %vm811 = vweird.f32 %v790
    %vm812 = vweird.f32 %v806
    %vm813 = vmor %vm811, %vm812
    %v814 = vsel %vm813, %v806, %v810
    %v815 = vand.u32 2147483647, %v790
    %vm816 = vcmp.eq.f32.partialorder %v815, 8.507059e+37
    %v817 = vand.u32 %v790, 2147483648
    %v818 = vor.u32 1.1754944e-38, %v817
    %v819 = vsel %vm816, %v818, %v814
    %v820 = vmul.f32 1.0, %v819
    %v821 = vmul.f32 %v747, %v508
    %v822 = vmul.f32 %v762, %v509
    %v823 = vsub.f32 1.0, %v747
    %v824 = vsub.f32 1.0, %v762
    %827 = vrot.lane.b32.xlu0 %v695, 16
    %v828 = vpop.permute.xlu0 %827
    %829 = vrot.lane.b32.xlu0 %v696, 16
    %v830 = vpop.permute.xlu0 %829
    %v833 = vmul.f32 %v823, %v828
    %v834 = vmul.f32 %v824, %v830
    %v835 = vadd.f32 %v821, %v833
    %v836 = vadd.f32 %v822, %v834
    %839 = vrot.lane.b32.xlu0 %v835, 16
    %v840 = vpop.permute.xlu0 %839
    %841 = vrot.lane.b32.xlu0 %v836, 16
    %v842 = vpop.permute.xlu0 %841
    %v845 = vmul.f32 %v805, %v840
    %v846 = vmul.f32 %v820, %v842
    %v847 = vsub.f32 1.0, %v805
    %v848 = vsub.f32 1.0, %v820
    %849 = vrot.lane.b32.xlu0 %v695, 112
    %v850 = vpop.permute.xlu0 %849
    %851 = vrot.lane.b32.xlu0 %v696, 112
    %v852 = vpop.permute.xlu0 %851
    %v855 = vmul.f32 %v847, %v850
    %v856 = vmul.f32 %v848, %v852
    %v857 = vadd.f32 %v845, %v855
    %v858 = vadd.f32 %v846, %v856
    %v859 = vpack.c.bf16 %v857, %v857
    %v860 = vpack.c.bf16 %v858, %v858
    %863 = vrot.lane.b32.xlu0 %v859, 96
    %v864 = vpop.permute.xlu0 %863
    %865 = vrot.lane.b32.xlu0 %v860, 96
    %v866 = vpop.permute.xlu0 %865
    %s869 = smul.u32 %s692, 2
    %s870 = smul.addr %s869, 4
    %s871 = scalar_lea.vmem %s9, %s870
    %872 = vst.msk [vmem:[%s871] sm:$0xf] %vm689, %v864
    %873 = vst.msk [vmem:[%s871 + $0x4] sm:$0xf] %vm689, %v866
  $region38: #{dprnn_block_forward.8} parent=0 // loop_footer
    %s505 = sadd.s32 1, %s501
  $region39: #{dprnn_block_forward.8} parent=0 // loop_footer_branch
    %500 = sbr.rel target = $region35
  $region40: #{dprnn_block_forward.8} parent=0 // loop_exit
    _
  // Predicated region
  $region41: #{dprnn_block_forward.8} parent=0 // pred_check
    _
  $region42: #{dprnn_block_forward.8} parent=0 // pred_check_branch
    %875 = sbr.rel (0) target = $region44
  $region43: #{dprnn_block_forward.8} parent=0 // pred_region
    _
  $region44: #{dprnn_block_forward.8} parent=0 // pred_fallthru
    _
  // Predicated region
  $region45: #{dprnn_block_forward.8} parent=0 // pred_check
    _
  $region46: #{dprnn_block_forward.8} parent=0 // pred_check_branch
    %877 = sbr.rel (0) target = $region48
  $region47: #{dprnn_block_forward.8} parent=0 // pred_region
    _
  $region48: #{dprnn_block_forward.8} parent=0 // pred_fallthru
    _
  // Predicated region
  $region49: #{dprnn_block_forward.8} parent=0 // pred_check
    _
  $region50: #{dprnn_block_forward.8} parent=0 // pred_check_branch
    %879 = sbr.rel (0) target = $region52
  $region51: #{dprnn_block_forward.8} parent=0 // pred_region
    _
  $region52: #{dprnn_block_forward.8} parent=0 // pred_fallthru
    _
  // Predicated region
  $region53: #{dprnn_block_forward.8} parent=0 // pred_check
    _
  $region54: #{dprnn_block_forward.8} parent=0 // pred_check_branch
    %881 = sbr.rel (0) target = $region56
  $region55: #{dprnn_block_forward.8} parent=0 // pred_region
    _
  $region56: #{dprnn_block_forward.8} parent=0 // pred_fallthru
    _

// kernel: dprnn_block_forward.11
$region0: #{dprnn_block_forward.11}
  #allocation0 [shape = 'u32[]', space=smem, size = 0x4, offset = 0x4, fixed_abs, tag = 'smem constant byte address 0x4 - core index']
  #allocation1 [shape = 'u32[72,128]{1,0:T(1,128)}', space=vmem, size = 0x9000, scoped, tag = 'internal scratch']
  %s0 = inlined_call_operand.vmem [shape: bf16[16,9,16], index: 0, kind: input, shape index: {}]
  %s1 = inlined_call_operand.vmem [shape: bf16[16,9,16], index: 1, kind: input, shape index: {}]
  %s2 = inlined_call_operand.vmem [shape: bf16[32,16], index: 2, kind: input, shape index: {}]
  %s3 = inlined_call_operand.vmem [shape: bf16[32,16], index: 3, kind: input, shape index: {}]
  %s4 = inlined_call_operand.vmem [shape: f32[4,16], index: 4, kind: input, shape index: {}]
  %s5 = inlined_call_operand.vmem [shape: f32[16,4,16], index: 5, kind: input, shape index: {}]
  %s6 = inlined_call_operand.vmem [shape: f32[16,4,16], index: 6, kind: output, shape index: {}]
  %s7 = sld [smem:[#allocation0]]
  $region34: #{dprnn_block_forward.11} parent=0
    _
  %s9 = ssub.s32 1, %s7
  %s10 = scalar_select 0, %s9, %s7
  // Predicated region
  $region2: #{dprnn_block_forward.11} parent=0 // pred_check
    _
  $region3: #{dprnn_block_forward.11} parent=0 // pred_check_branch
    %12 = sbr.rel (0) target = $region5
  $region4: #{dprnn_block_forward.11} parent=0 // pred_region
    _
  $region5: #{dprnn_block_forward.11} parent=0 // pred_fallthru
    _
  // Predicated region
  $region6: #{dprnn_block_forward.11} parent=0 // pred_check
    _
  $region7: #{dprnn_block_forward.11} parent=0 // pred_check_branch
    %14 = sbr.rel (0) target = $region9
  $region8: #{dprnn_block_forward.11} parent=0 // pred_region
    _
  $region9: #{dprnn_block_forward.11} parent=0 // pred_fallthru
    _
  // Predicated region
  $region10: #{dprnn_block_forward.11} parent=0 // pred_check
    _
  $region11: #{dprnn_block_forward.11} parent=0 // pred_check_branch
    %16 = sbr.rel (0) target = $region13
  $region12: #{dprnn_block_forward.11} parent=0 // pred_region
    _
  $region13: #{dprnn_block_forward.11} parent=0 // pred_fallthru
    _
  // Predicated region
  $region14: #{dprnn_block_forward.11} parent=0 // pred_check
    _
  $region15: #{dprnn_block_forward.11} parent=0 // pred_check_branch
    %18 = sbr.rel (0) target = $region17
  $region16: #{dprnn_block_forward.11} parent=0 // pred_region
    _
  $region17: #{dprnn_block_forward.11} parent=0 // pred_fallthru
    _
  // Predicated region
  $region18: #{dprnn_block_forward.11} parent=0 // pred_check
    _
  $region19: #{dprnn_block_forward.11} parent=0 // pred_check_branch
    %20 = sbr.rel (0) target = $region21
  $region20: #{dprnn_block_forward.11} parent=0 // pred_region
    _
  $region21: #{dprnn_block_forward.11} parent=0 // pred_fallthru
    _
  // Predicated region
  $region22: #{dprnn_block_forward.11} parent=0 // pred_check
    _
  $region23: #{dprnn_block_forward.11} parent=0 // pred_check_branch
    %22 = sbr.rel (0) target = $region25
  $region24: #{dprnn_block_forward.11} parent=0 // pred_region
    _
  $region25: #{dprnn_block_forward.11} parent=0 // pred_fallthru
    _
  %v24 = vld [vmem:[%s2] sm:$0xf]
  %v25 = vld [vmem:[%s2 + $0x4] sm:$0xf]
  %v26 = vld [vmem:[%s2 + $0x8] sm:$0xf]
  %v27 = vld [vmem:[%s2 + $0xc] sm:$0xf]
  %v28 = vld [vmem:[%s3] sm:$0xf]
  %v29 = vld [vmem:[%s3 + $0x4] sm:$0xf]
  %v30 = vld [vmem:[%s3 + $0x8] sm:$0xf]
  %v31 = vld [vmem:[%s3 + $0xc] sm:$0xf]
  %v32 = vld [vmem:[%s0] sm:$0xf]
  %v33 = vld [vmem:[%s0 + $0x4] sm:$0x1]
  %v34 = vld [vmem:[%s0 + $0x8] sm:$0xf]
  %v35 = vld [vmem:[%s0 + $0xc] sm:$0x1]
  %v36 = vld [vmem:[%s0 + $0x10] sm:$0xf]
  %v37 = vld [vmem:[%s0 + $0x14] sm:$0x1]
  %v38 = vld [vmem:[%s0 + $0x18] sm:$0xf]
  %v39 = vld [vmem:[%s0 + $0x1c] sm:$0x1]
  %v40 = vld [vmem:[%s0 + $0x20] sm:$0xf]
  %v41 = vld [vmem:[%s0 + $0x24] sm:$0x1]
  %v42 = vld [vmem:[%s0 + $0x28] sm:$0xf]
  %v43 = vld [vmem:[%s0 + $0x2c] sm:$0x1]
  %v44 = vld [vmem:[%s0 + $0x30] sm:$0xf]
  %v45 = vld [vmem:[%s0 + $0x34] sm:$0x1]
  %v46 = vld [vmem:[%s0 + $0x38] sm:$0xf]
  %v47 = vld [vmem:[%s0 + $0x3c] sm:$0x1]
  %v48 = vld [vmem:[%s0 + $0x40] sm:$0xf]
  %v49 = vld [vmem:[%s0 + $0x44] sm:$0x1]
  %v50 = vld [vmem:[%s0 + $0x48] sm:$0xf]
  %v51 = vld [vmem:[%s0 + $0x4c] sm:$0x1]
  %v52 = vld [vmem:[%s0 + $0x50] sm:$0xf]
  %v53 = vld [vmem:[%s0 + $0x54] sm:$0x1]
  %v54 = vld [vmem:[%s0 + $0x58] sm:$0xf]
  %v55 = vld [vmem:[%s0 + $0x5c] sm:$0x1]
  %v56 = vld [vmem:[%s0 + $0x60] sm:$0xf]
  %v57 = vld [vmem:[%s0 + $0x64] sm:$0x1]
  %v58 = vld [vmem:[%s0 + $0x68] sm:$0xf]
  %v59 = vld [vmem:[%s0 + $0x6c] sm:$0x1]
  %v60 = vld [vmem:[%s0 + $0x70] sm:$0xf]
  %v61 = vld [vmem:[%s0 + $0x74] sm:$0x1]
  %v62 = vld [vmem:[%s0 + $0x78] sm:$0xf]
  %v63 = vld [vmem:[%s0 + $0x7c] sm:$0x1]
  %v64 = vld [vmem:[%s1] sm:$0xf]
  %v65 = vld [vmem:[%s1 + $0x4] sm:$0x1]
  %v66 = vld [vmem:[%s1 + $0x8] sm:$0xf]
  %v67 = vld [vmem:[%s1 + $0xc] sm:$0x1]
  %v68 = vld [vmem:[%s1 + $0x10] sm:$0xf]
  %v69 = vld [vmem:[%s1 + $0x14] sm:$0x1]
  %v70 = vld [vmem:[%s1 + $0x18] sm:$0xf]
  %v71 = vld [vmem:[%s1 + $0x1c] sm:$0x1]
  %v72 = vld [vmem:[%s1 + $0x20] sm:$0xf]
  %v73 = vld [vmem:[%s1 + $0x24] sm:$0x1]
  %v74 = vld [vmem:[%s1 + $0x28] sm:$0xf]
  %v75 = vld [vmem:[%s1 + $0x2c] sm:$0x1]
  %v76 = vld [vmem:[%s1 + $0x30] sm:$0xf]
  %v77 = vld [vmem:[%s1 + $0x34] sm:$0x1]
  %v78 = vld [vmem:[%s1 + $0x38] sm:$0xf]
  %v79 = vld [vmem:[%s1 + $0x3c] sm:$0x1]
  %v80 = vld [vmem:[%s1 + $0x40] sm:$0xf]
  %v81 = vld [vmem:[%s1 + $0x44] sm:$0x1]
  %v82 = vld [vmem:[%s1 + $0x48] sm:$0xf]
  %v83 = vld [vmem:[%s1 + $0x4c] sm:$0x1]
  %v84 = vld [vmem:[%s1 + $0x50] sm:$0xf]
  %v85 = vld [vmem:[%s1 + $0x54] sm:$0x1]
  %v86 = vld [vmem:[%s1 + $0x58] sm:$0xf]
  %v87 = vld [vmem:[%s1 + $0x5c] sm:$0x1]
  %v88 = vld [vmem:[%s1 + $0x60] sm:$0xf]
  %v89 = vld [vmem:[%s1 + $0x64] sm:$0x1]
  %v90 = vld [vmem:[%s1 + $0x68] sm:$0xf]
  %v91 = vld [vmem:[%s1 + $0x6c] sm:$0x1]
  %v92 = vld [vmem:[%s1 + $0x70] sm:$0xf]
  %v93 = vld [vmem:[%s1 + $0x74] sm:$0x1]
  %v94 = vld [vmem:[%s1 + $0x78] sm:$0xf]
  %v95 = vld [vmem:[%s1 + $0x7c] sm:$0x1]
  %v100 = vunpack.c.l.b16 %v28
  %v101 = vunpack.c.l.b16 %v29
  %v102 = vunpack.c.l.b16 %v30
  %v103 = vunpack.c.l.b16 %v31
  %v104 = vpack.c.b16 %v101, %v100
  %v105 = vpack.c.b16 %v103, %v102
  %v108 = vunpack.c.l.b16 %v64
  %v109 = vunpack.c.l.b16 %v65
  %v110 = vpack.c.b16 %v109, %v108
  %vm111 = vcmask 130048
  %v113 = vsel %vm111, %v104, 0
  %v116 = vsel %vm111, %v105, 0
  %v119 = vsel %vm111, %v110, 0
  %121 = vmatpush.bf16.xpose.msra.mxu0 0
  %122 = vmatpush.bf16.xpose.msra.mxu0 0
  %123 = vmatpush.bf16.xpose.msra.mxu0 0
  %124 = vmatpush.bf16.xpose.msra.mxu0 0
  %125 = vmatpush.bf16.xpose.msra.mxu0 0
  %126 = vmatpush.bf16.xpose.msra.mxu0 0
  %127 = vmatpush.bf16.xpose.msra.mxu0 0
  %128 = vmatpush.bf16.xpose.msra.mxu0 %v119
  %129 = vmatmul.bf16.gmra.mxu0 %v113
  %v130 = vpop.f32.mrf.mxu0
  %v131 = vadd.f32 0.0, %v130
  %v132 = vpop.f32.mrf.mxu0
  %v133 = vadd.f32 0.0, %v132
  %134 = vmatmul.bf16.gmra.mxu0 %v116
  %v135 = vpop.f32.mrf.mxu0
  %v136 = vadd.f32 0.0, %v135
  %v137 = vpop.f32.mrf.mxu0
  %v138 = vadd.f32 0.0, %v137
  %139 = vdwg.mxu0
  %v142 = vunpack.c.l.b16 %v66
  %v143 = vunpack.c.l.b16 %v67
  %v144 = vpack.c.b16 %v143, %v142
  %v146 = vsel %vm111, %v144, 0
  %148 = vmatpush.bf16.xpose.msra.mxu0 0
  %149 = vmatpush.bf16.xpose.msra.mxu0 0
  %150 = vmatpush.bf16.xpose.msra.mxu0 0
  %151 = vmatpush.bf16.xpose.msra.mxu0 0
  %152 = vmatpush.bf16.xpose.msra.mxu0 0
  %153 = vmatpush.bf16.xpose.msra.mxu0 0
  %154 = vmatpush.bf16.xpose.msra.mxu0 0
  %155 = vmatpush.bf16.xpose.msra.mxu0 %v146
  %156 = vmatmul.bf16.gmra.mxu0 %v113
  %v157 = vpop.f32.mrf.mxu0
  %v158 = vadd.f32 0.0, %v157
  %v159 = vpop.f32.mrf.mxu0
  %v160 = vadd.f32 0.0, %v159
  %161 = vmatmul.bf16.gmra.mxu0 %v116
  %v162 = vpop.f32.mrf.mxu0
  %v163 = vadd.f32 0.0, %v162
  %v164 = vpop.f32.mrf.mxu0
  %v165 = vadd.f32 0.0, %v164
  %166 = vdwg.mxu0
  %v169 = vunpack.c.l.b16 %v68
  %v170 = vunpack.c.l.b16 %v69
  %v171 = vpack.c.b16 %v170, %v169
  %v173 = vsel %vm111, %v171, 0
  %175 = vmatpush.bf16.xpose.msra.mxu0 0
  %176 = vmatpush.bf16.xpose.msra.mxu0 0
  %177 = vmatpush.bf16.xpose.msra.mxu0 0
  %178 = vmatpush.bf16.xpose.msra.mxu0 0
  %179 = vmatpush.bf16.xpose.msra.mxu0 0
  %180 = vmatpush.bf16.xpose.msra.mxu0 0
  %181 = vmatpush.bf16.xpose.msra.mxu0 0
  %182 = vmatpush.bf16.xpose.msra.mxu0 %v173
  %183 = vmatmul.bf16.gmra.mxu0 %v113
  %v184 = vpop.f32.mrf.mxu0
  %v185 = vadd.f32 0.0, %v184
  %v186 = vpop.f32.mrf.mxu0
  %v187 = vadd.f32 0.0, %v186
  %188 = vmatmul.bf16.gmra.mxu0 %v116
  %v189 = vpop.f32.mrf.mxu0
  %v190 = vadd.f32 0.0, %v189
  %v191 = vpop.f32.mrf.mxu0
  %v192 = vadd.f32 0.0, %v191
  %193 = vdwg.mxu0
  %v196 = vunpack.c.l.b16 %v70
  %v197 = vunpack.c.l.b16 %v71
  %v198 = vpack.c.b16 %v197, %v196
  %v200 = vsel %vm111, %v198, 0
  %202 = vmatpush.bf16.xpose.msra.mxu0 0
  %203 = vmatpush.bf16.xpose.msra.mxu0 0
  %204 = vmatpush.bf16.xpose.msra.mxu0 0
  %205 = vmatpush.bf16.xpose.msra.mxu0 0
  %206 = vmatpush.bf16.xpose.msra.mxu0 0
  %207 = vmatpush.bf16.xpose.msra.mxu0 0
  %208 = vmatpush.bf16.xpose.msra.mxu0 0
  %209 = vmatpush.bf16.xpose.msra.mxu0 %v200
  %210 = vmatmul.bf16.gmra.mxu0 %v113
  %v211 = vpop.f32.mrf.mxu0
  %v212 = vadd.f32 0.0, %v211
  %v213 = vpop.f32.mrf.mxu0
  %v214 = vadd.f32 0.0, %v213
  %215 = vmatmul.bf16.gmra.mxu0 %v116
  %v216 = vpop.f32.mrf.mxu0
  %v217 = vadd.f32 0.0, %v216
  %v218 = vpop.f32.mrf.mxu0
  %v219 = vadd.f32 0.0, %v218
  %220 = vdwg.mxu0
  %v223 = vunpack.c.l.b16 %v72
  %v224 = vunpack.c.l.b16 %v73
  %v225 = vpack.c.b16 %v224, %v223
  %v227 = vsel %vm111, %v225, 0
  %229 = vmatpush.bf16.xpose.msra.mxu0 0
  %230 = vmatpush.bf16.xpose.msra.mxu0 0
  %231 = vmatpush.bf16.xpose.msra.mxu0 0
  %232 = vmatpush.bf16.xpose.msra.mxu0 0
  %233 = vmatpush.bf16.xpose.msra.mxu0 0
  %234 = vmatpush.bf16.xpose.msra.mxu0 0
  %235 = vmatpush.bf16.xpose.msra.mxu0 0
  %236 = vmatpush.bf16.xpose.msra.mxu0 %v227
  %237 = vmatmul.bf16.gmra.mxu0 %v113
  %v238 = vpop.f32.mrf.mxu0
  %v239 = vadd.f32 0.0, %v238
  %v240 = vpop.f32.mrf.mxu0
  %v241 = vadd.f32 0.0, %v240
  %242 = vmatmul.bf16.gmra.mxu0 %v116
  %v243 = vpop.f32.mrf.mxu0
  %v244 = vadd.f32 0.0, %v243
  %v245 = vpop.f32.mrf.mxu0
  %v246 = vadd.f32 0.0, %v245
  %247 = vdwg.mxu0
  %v250 = vunpack.c.l.b16 %v74
  %v251 = vunpack.c.l.b16 %v75
  %v252 = vpack.c.b16 %v251, %v250
  %v254 = vsel %vm111, %v252, 0
  %256 = vmatpush.bf16.xpose.msra.mxu0 0
  %257 = vmatpush.bf16.xpose.msra.mxu0 0
  %258 = vmatpush.bf16.xpose.msra.mxu0 0
  %259 = vmatpush.bf16.xpose.msra.mxu0 0
  %260 = vmatpush.bf16.xpose.msra.mxu0 0
  %261 = vmatpush.bf16.xpose.msra.mxu0 0
  %262 = vmatpush.bf16.xpose.msra.mxu0 0
  %263 = vmatpush.bf16.xpose.msra.mxu0 %v254
  %264 = vmatmul.bf16.gmra.mxu0 %v113
  %v265 = vpop.f32.mrf.mxu0
  %v266 = vadd.f32 0.0, %v265
  %v267 = vpop.f32.mrf.mxu0
  %v268 = vadd.f32 0.0, %v267
  %269 = vmatmul.bf16.gmra.mxu0 %v116
  %v270 = vpop.f32.mrf.mxu0
  %v271 = vadd.f32 0.0, %v270
  %v272 = vpop.f32.mrf.mxu0
  %v273 = vadd.f32 0.0, %v272
  %274 = vdwg.mxu0
  %v277 = vunpack.c.l.b16 %v76
  %v278 = vunpack.c.l.b16 %v77
  %v279 = vpack.c.b16 %v278, %v277
  %v281 = vsel %vm111, %v279, 0
  %283 = vmatpush.bf16.xpose.msra.mxu0 0
  %284 = vmatpush.bf16.xpose.msra.mxu0 0
  %285 = vmatpush.bf16.xpose.msra.mxu0 0
  %286 = vmatpush.bf16.xpose.msra.mxu0 0
  %287 = vmatpush.bf16.xpose.msra.mxu0 0
  %288 = vmatpush.bf16.xpose.msra.mxu0 0
  %289 = vmatpush.bf16.xpose.msra.mxu0 0
  %290 = vmatpush.bf16.xpose.msra.mxu0 %v281
  %291 = vmatmul.bf16.gmra.mxu0 %v113
  %v292 = vpop.f32.mrf.mxu0
  %v293 = vadd.f32 0.0, %v292
  %v294 = vpop.f32.mrf.mxu0
  %v295 = vadd.f32 0.0, %v294
  %296 = vmatmul.bf16.gmra.mxu0 %v116
  %v297 = vpop.f32.mrf.mxu0
  %v298 = vadd.f32 0.0, %v297
  %v299 = vpop.f32.mrf.mxu0
  %v300 = vadd.f32 0.0, %v299
  %301 = vdwg.mxu0
  %v304 = vunpack.c.l.b16 %v78
  %v305 = vunpack.c.l.b16 %v79
  %v306 = vpack.c.b16 %v305, %v304
  %v308 = vsel %vm111, %v306, 0
  %310 = vmatpush.bf16.xpose.msra.mxu0 0
  %311 = vmatpush.bf16.xpose.msra.mxu0 0
  %312 = vmatpush.bf16.xpose.msra.mxu0 0
  %313 = vmatpush.bf16.xpose.msra.mxu0 0
  %314 = vmatpush.bf16.xpose.msra.mxu0 0
  %315 = vmatpush.bf16.xpose.msra.mxu0 0
  %316 = vmatpush.bf16.xpose.msra.mxu0 0
  %317 = vmatpush.bf16.xpose.msra.mxu0 %v308
  %318 = vmatmul.bf16.gmra.mxu0 %v113
  %v319 = vpop.f32.mrf.mxu0
  %v320 = vadd.f32 0.0, %v319
  %v321 = vpop.f32.mrf.mxu0
  %v322 = vadd.f32 0.0, %v321
  %323 = vmatmul.bf16.gmra.mxu0 %v116
  %v324 = vpop.f32.mrf.mxu0
  %v325 = vadd.f32 0.0, %v324
  %v326 = vpop.f32.mrf.mxu0
  %v327 = vadd.f32 0.0, %v326
  %328 = vdwg.mxu0
  %v331 = vunpack.c.l.b16 %v80
  %v332 = vunpack.c.l.b16 %v81
  %v333 = vpack.c.b16 %v332, %v331
  %v335 = vsel %vm111, %v333, 0
  %337 = vmatpush.bf16.xpose.msra.mxu0 0
  %338 = vmatpush.bf16.xpose.msra.mxu0 0
  %339 = vmatpush.bf16.xpose.msra.mxu0 0
  %340 = vmatpush.bf16.xpose.msra.mxu0 0
  %341 = vmatpush.bf16.xpose.msra.mxu0 0
  %342 = vmatpush.bf16.xpose.msra.mxu0 0
  %343 = vmatpush.bf16.xpose.msra.mxu0 0
  %344 = vmatpush.bf16.xpose.msra.mxu0 %v335
  %345 = vmatmul.bf16.gmra.mxu0 %v113
  %v346 = vpop.f32.mrf.mxu0
  %v347 = vadd.f32 0.0, %v346
  %v348 = vpop.f32.mrf.mxu0
  %v349 = vadd.f32 0.0, %v348
  %350 = vmatmul.bf16.gmra.mxu0 %v116
  %v351 = vpop.f32.mrf.mxu0
  %v352 = vadd.f32 0.0, %v351
  %v353 = vpop.f32.mrf.mxu0
  %v354 = vadd.f32 0.0, %v353
  %355 = vdwg.mxu0
  %v358 = vunpack.c.l.b16 %v82
  %v359 = vunpack.c.l.b16 %v83
  %v360 = vpack.c.b16 %v359, %v358
  %v362 = vsel %vm111, %v360, 0
  %364 = vmatpush.bf16.xpose.msra.mxu0 0
  %365 = vmatpush.bf16.xpose.msra.mxu0 0
  %366 = vmatpush.bf16.xpose.msra.mxu0 0
  %367 = vmatpush.bf16.xpose.msra.mxu0 0
  %368 = vmatpush.bf16.xpose.msra.mxu0 0
  %369 = vmatpush.bf16.xpose.msra.mxu0 0
  %370 = vmatpush.bf16.xpose.msra.mxu0 0
  %371 = vmatpush.bf16.xpose.msra.mxu0 %v362
  %372 = vmatmul.bf16.gmra.mxu0 %v113
  %v373 = vpop.f32.mrf.mxu0
  %v374 = vadd.f32 0.0, %v373
  %v375 = vpop.f32.mrf.mxu0
  %v376 = vadd.f32 0.0, %v375
  %377 = vmatmul.bf16.gmra.mxu0 %v116
  %v378 = vpop.f32.mrf.mxu0
  %v379 = vadd.f32 0.0, %v378
  %v380 = vpop.f32.mrf.mxu0
  %v381 = vadd.f32 0.0, %v380
  %382 = vdwg.mxu0
  %v385 = vunpack.c.l.b16 %v84
  %v386 = vunpack.c.l.b16 %v85
  %v387 = vpack.c.b16 %v386, %v385
  %v389 = vsel %vm111, %v387, 0
  %391 = vmatpush.bf16.xpose.msra.mxu0 0
  %392 = vmatpush.bf16.xpose.msra.mxu0 0
  %393 = vmatpush.bf16.xpose.msra.mxu0 0
  %394 = vmatpush.bf16.xpose.msra.mxu0 0
  %395 = vmatpush.bf16.xpose.msra.mxu0 0
  %396 = vmatpush.bf16.xpose.msra.mxu0 0
  %397 = vmatpush.bf16.xpose.msra.mxu0 0
  %398 = vmatpush.bf16.xpose.msra.mxu0 %v389
  %399 = vmatmul.bf16.gmra.mxu0 %v113
  %v400 = vpop.f32.mrf.mxu0
  %v401 = vadd.f32 0.0, %v400
  %v402 = vpop.f32.mrf.mxu0
  %v403 = vadd.f32 0.0, %v402
  %404 = vmatmul.bf16.gmra.mxu0 %v116
  %v405 = vpop.f32.mrf.mxu0
  %v406 = vadd.f32 0.0, %v405
  %v407 = vpop.f32.mrf.mxu0
  %v408 = vadd.f32 0.0, %v407
  %409 = vdwg.mxu0
  %v412 = vunpack.c.l.b16 %v86
  %v413 = vunpack.c.l.b16 %v87
  %v414 = vpack.c.b16 %v413, %v412
  %v416 = vsel %vm111, %v414, 0
  %418 = vmatpush.bf16.xpose.msra.mxu0 0
  %419 = vmatpush.bf16.xpose.msra.mxu0 0
  %420 = vmatpush.bf16.xpose.msra.mxu0 0
  %421 = vmatpush.bf16.xpose.msra.mxu0 0
  %422 = vmatpush.bf16.xpose.msra.mxu0 0
  %423 = vmatpush.bf16.xpose.msra.mxu0 0
  %424 = vmatpush.bf16.xpose.msra.mxu0 0
  %425 = vmatpush.bf16.xpose.msra.mxu0 %v416
  %426 = vmatmul.bf16.gmra.mxu0 %v113
  %v427 = vpop.f32.mrf.mxu0
  %v428 = vadd.f32 0.0, %v427
  %v429 = vpop.f32.mrf.mxu0
  %v430 = vadd.f32 0.0, %v429
  %431 = vmatmul.bf16.gmra.mxu0 %v116
  %v432 = vpop.f32.mrf.mxu0
  %v433 = vadd.f32 0.0, %v432
  %v434 = vpop.f32.mrf.mxu0
  %v435 = vadd.f32 0.0, %v434
  %436 = vdwg.mxu0
  %v439 = vunpack.c.l.b16 %v88
  %v440 = vunpack.c.l.b16 %v89
  %v441 = vpack.c.b16 %v440, %v439
  %v443 = vsel %vm111, %v441, 0
  %445 = vmatpush.bf16.xpose.msra.mxu0 0
  %446 = vmatpush.bf16.xpose.msra.mxu0 0
  %447 = vmatpush.bf16.xpose.msra.mxu0 0
  %448 = vmatpush.bf16.xpose.msra.mxu0 0
  %449 = vmatpush.bf16.xpose.msra.mxu0 0
  %450 = vmatpush.bf16.xpose.msra.mxu0 0
  %451 = vmatpush.bf16.xpose.msra.mxu0 0
  %452 = vmatpush.bf16.xpose.msra.mxu0 %v443
  %453 = vmatmul.bf16.gmra.mxu0 %v113
  %v454 = vpop.f32.mrf.mxu0
  %v455 = vadd.f32 0.0, %v454
  %v456 = vpop.f32.mrf.mxu0
  %v457 = vadd.f32 0.0, %v456
  %458 = vmatmul.bf16.gmra.mxu0 %v116
  %v459 = vpop.f32.mrf.mxu0
  %v460 = vadd.f32 0.0, %v459
  %v461 = vpop.f32.mrf.mxu0
  %v462 = vadd.f32 0.0, %v461
  %463 = vdwg.mxu0
  %v466 = vunpack.c.l.b16 %v90
  %v467 = vunpack.c.l.b16 %v91
  %v468 = vpack.c.b16 %v467, %v466
  %v470 = vsel %vm111, %v468, 0
  %472 = vmatpush.bf16.xpose.msra.mxu0 0
  %473 = vmatpush.bf16.xpose.msra.mxu0 0
  %474 = vmatpush.bf16.xpose.msra.mxu0 0
  %475 = vmatpush.bf16.xpose.msra.mxu0 0
  %476 = vmatpush.bf16.xpose.msra.mxu0 0
  %477 = vmatpush.bf16.xpose.msra.mxu0 0
  %478 = vmatpush.bf16.xpose.msra.mxu0 0
  %479 = vmatpush.bf16.xpose.msra.mxu0 %v470
  %480 = vmatmul.bf16.gmra.mxu0 %v113
  %v481 = vpop.f32.mrf.mxu0
  %v482 = vadd.f32 0.0, %v481
  %v483 = vpop.f32.mrf.mxu0
  %v484 = vadd.f32 0.0, %v483
  %485 = vmatmul.bf16.gmra.mxu0 %v116
  %v486 = vpop.f32.mrf.mxu0
  %v487 = vadd.f32 0.0, %v486
  %v488 = vpop.f32.mrf.mxu0
  %v489 = vadd.f32 0.0, %v488
  %490 = vdwg.mxu0
  %v493 = vunpack.c.l.b16 %v92
  %v494 = vunpack.c.l.b16 %v93
  %v495 = vpack.c.b16 %v494, %v493
  %v497 = vsel %vm111, %v495, 0
  %499 = vmatpush.bf16.xpose.msra.mxu0 0
  %500 = vmatpush.bf16.xpose.msra.mxu0 0
  %501 = vmatpush.bf16.xpose.msra.mxu0 0
  %502 = vmatpush.bf16.xpose.msra.mxu0 0
  %503 = vmatpush.bf16.xpose.msra.mxu0 0
  %504 = vmatpush.bf16.xpose.msra.mxu0 0
  %505 = vmatpush.bf16.xpose.msra.mxu0 0
  %506 = vmatpush.bf16.xpose.msra.mxu0 %v497
  %507 = vmatmul.bf16.gmra.mxu0 %v113
  %v508 = vpop.f32.mrf.mxu0
  %v509 = vadd.f32 0.0, %v508
  %v510 = vpop.f32.mrf.mxu0
  %v511 = vadd.f32 0.0, %v510
  %512 = vmatmul.bf16.gmra.mxu0 %v116
  %v513 = vpop.f32.mrf.mxu0
  %v514 = vadd.f32 0.0, %v513
  %v515 = vpop.f32.mrf.mxu0
  %v516 = vadd.f32 0.0, %v515
  %517 = vdwg.mxu0
  %v520 = vunpack.c.l.b16 %v94
  %v521 = vunpack.c.l.b16 %v95
  %v522 = vpack.c.b16 %v521, %v520
  %v524 = vsel %vm111, %v522, 0
  %526 = vmatpush.bf16.xpose.msra.mxu0 0
  %527 = vmatpush.bf16.xpose.msra.mxu0 0
  %528 = vmatpush.bf16.xpose.msra.mxu0 0
  %529 = vmatpush.bf16.xpose.msra.mxu0 0
  %530 = vmatpush.bf16.xpose.msra.mxu0 0
  %531 = vmatpush.bf16.xpose.msra.mxu0 0
  %532 = vmatpush.bf16.xpose.msra.mxu0 0
  %533 = vmatpush.bf16.xpose.msra.mxu0 %v524
  %534 = vmatmul.bf16.gmra.mxu0 %v113
  %v535 = vpop.f32.mrf.mxu0
  %v536 = vadd.f32 0.0, %v535
  %v537 = vpop.f32.mrf.mxu0
  %v538 = vadd.f32 0.0, %v537
  %539 = vmatmul.bf16.gmra.mxu0 %v116
  %v540 = vpop.f32.mrf.mxu0
  %v541 = vadd.f32 0.0, %v540
  %v542 = vpop.f32.mrf.mxu0
  %v543 = vadd.f32 0.0, %v542
  %544 = vdwg.mxu0
  %v549 = vunpack.c.l.b16 %v24
  %v550 = vunpack.c.l.b16 %v25
  %v551 = vunpack.c.l.b16 %v26
  %v552 = vunpack.c.l.b16 %v27
  %v553 = vpack.c.b16 %v550, %v549
  %v554 = vpack.c.b16 %v552, %v551
  %v557 = vunpack.c.l.b16 %v32
  %v558 = vunpack.c.l.b16 %v33
  %v559 = vpack.c.b16 %v558, %v557
  %v561 = vsel %vm111, %v553, 0
  %v564 = vsel %vm111, %v554, 0
  %v567 = vsel %vm111, %v559, 0
  %569 = vmatpush.bf16.xpose.msra.mxu0 0
  %570 = vmatpush.bf16.xpose.msra.mxu0 0
  %571 = vmatpush.bf16.xpose.msra.mxu0 0
  %572 = vmatpush.bf16.xpose.msra.mxu0 0
  %573 = vmatpush.bf16.xpose.msra.mxu0 0
  %574 = vmatpush.bf16.xpose.msra.mxu0 0
  %575 = vmatpush.bf16.xpose.msra.mxu0 0
  %576 = vmatpush.bf16.xpose.msra.mxu0 %v567
  %577 = vmatmul.bf16.gmra.mxu0 %v561
  %v578 = vpop.f32.mrf.mxu0
  %v579 = vadd.f32 %v131, %v578
  %v580 = vpop.f32.mrf.mxu0
  %v581 = vadd.f32 %v133, %v580
  %582 = vmatmul.bf16.gmra.mxu0 %v564
  %v583 = vpop.f32.mrf.mxu0
  %v584 = vadd.f32 %v136, %v583
  %v585 = vpop.f32.mrf.mxu0
  %v586 = vadd.f32 %v138, %v585
  %587 = vdwg.mxu0
  %v590 = vunpack.c.l.b16 %v34
  %v591 = vunpack.c.l.b16 %v35
  %v592 = vpack.c.b16 %v591, %v590
  %v594 = vsel %vm111, %v592, 0
  %596 = vmatpush.bf16.xpose.msra.mxu0 0
  %597 = vmatpush.bf16.xpose.msra.mxu0 0
  %598 = vmatpush.bf16.xpose.msra.mxu0 0
  %599 = vmatpush.bf16.xpose.msra.mxu0 0
  %600 = vmatpush.bf16.xpose.msra.mxu0 0
  %601 = vmatpush.bf16.xpose.msra.mxu0 0
  %602 = vmatpush.bf16.xpose.msra.mxu0 0
  %603 = vmatpush.bf16.xpose.msra.mxu0 %v594
  %604 = vmatmul.bf16.gmra.mxu0 %v561
  %v605 = vpop.f32.mrf.mxu0
  %v606 = vadd.f32 %v158, %v605
  %v607 = vpop.f32.mrf.mxu0
  %v608 = vadd.f32 %v160, %v607
  %609 = vmatmul.bf16.gmra.mxu0 %v564
  %v610 = vpop.f32.mrf.mxu0
  %v611 = vadd.f32 %v163, %v610
  %v612 = vpop.f32.mrf.mxu0
  %v613 = vadd.f32 %v165, %v612
  %614 = vdwg.mxu0
  %v617 = vunpack.c.l.b16 %v36
  %v618 = vunpack.c.l.b16 %v37
  %v619 = vpack.c.b16 %v618, %v617
  %v621 = vsel %vm111, %v619, 0
  %623 = vmatpush.bf16.xpose.msra.mxu0 0
  %624 = vmatpush.bf16.xpose.msra.mxu0 0
  %625 = vmatpush.bf16.xpose.msra.mxu0 0
  %626 = vmatpush.bf16.xpose.msra.mxu0 0
  %627 = vmatpush.bf16.xpose.msra.mxu0 0
  %628 = vmatpush.bf16.xpose.msra.mxu0 0
  %629 = vmatpush.bf16.xpose.msra.mxu0 0
  %630 = vmatpush.bf16.xpose.msra.mxu0 %v621
  %631 = vmatmul.bf16.gmra.mxu0 %v561
  %v632 = vpop.f32.mrf.mxu0
  %v633 = vadd.f32 %v185, %v632
  %v634 = vpop.f32.mrf.mxu0
  %v635 = vadd.f32 %v187, %v634
  %636 = vmatmul.bf16.gmra.mxu0 %v564
  %v637 = vpop.f32.mrf.mxu0
  %v638 = vadd.f32 %v190, %v637
  %v639 = vpop.f32.mrf.mxu0
  %v640 = vadd.f32 %v192, %v639
  %641 = vdwg.mxu0
  %v644 = vunpack.c.l.b16 %v38
  %v645 = vunpack.c.l.b16 %v39
  %v646 = vpack.c.b16 %v645, %v644
  %v648 = vsel %vm111, %v646, 0
  %650 = vmatpush.bf16.xpose.msra.mxu0 0
  %651 = vmatpush.bf16.xpose.msra.mxu0 0
  %652 = vmatpush.bf16.xpose.msra.mxu0 0
  %653 = vmatpush.bf16.xpose.msra.mxu0 0
  %654 = vmatpush.bf16.xpose.msra.mxu0 0
  %655 = vmatpush.bf16.xpose.msra.mxu0 0
  %656 = vmatpush.bf16.xpose.msra.mxu0 0
  %657 = vmatpush.bf16.xpose.msra.mxu0 %v648
  %658 = vmatmul.bf16.gmra.mxu0 %v561
  %v659 = vpop.f32.mrf.mxu0
  %v660 = vadd.f32 %v212, %v659
  %v661 = vpop.f32.mrf.mxu0
  %v662 = vadd.f32 %v214, %v661
  %663 = vmatmul.bf16.gmra.mxu0 %v564
  %v664 = vpop.f32.mrf.mxu0
  %v665 = vadd.f32 %v217, %v664
  %v666 = vpop.f32.mrf.mxu0
  %v667 = vadd.f32 %v219, %v666
  %668 = vdwg.mxu0
  %v671 = vunpack.c.l.b16 %v40
  %v672 = vunpack.c.l.b16 %v41
  %v673 = vpack.c.b16 %v672, %v671
  %v675 = vsel %vm111, %v673, 0
  %677 = vmatpush.bf16.xpose.msra.mxu0 0
  %678 = vmatpush.bf16.xpose.msra.mxu0 0
  %679 = vmatpush.bf16.xpose.msra.mxu0 0
  %680 = vmatpush.bf16.xpose.msra.mxu0 0
  %681 = vmatpush.bf16.xpose.msra.mxu0 0
  %682 = vmatpush.bf16.xpose.msra.mxu0 0
  %683 = vmatpush.bf16.xpose.msra.mxu0 0
  %684 = vmatpush.bf16.xpose.msra.mxu0 %v675
  %685 = vmatmul.bf16.gmra.mxu0 %v561
  %v686 = vpop.f32.mrf.mxu0
  %v687 = vadd.f32 %v239, %v686
  %v688 = vpop.f32.mrf.mxu0
  %v689 = vadd.f32 %v241, %v688
  %690 = vmatmul.bf16.gmra.mxu0 %v564
  %v691 = vpop.f32.mrf.mxu0
  %v692 = vadd.f32 %v244, %v691
  %v693 = vpop.f32.mrf.mxu0
  %v694 = vadd.f32 %v246, %v693
  %695 = vdwg.mxu0
  %v698 = vunpack.c.l.b16 %v42
  %v699 = vunpack.c.l.b16 %v43
  %v700 = vpack.c.b16 %v699, %v698
  %v702 = vsel %vm111, %v700, 0
  %704 = vmatpush.bf16.xpose.msra.mxu0 0
  %705 = vmatpush.bf16.xpose.msra.mxu0 0
  %706 = vmatpush.bf16.xpose.msra.mxu0 0
  %707 = vmatpush.bf16.xpose.msra.mxu0 0
  %708 = vmatpush.bf16.xpose.msra.mxu0 0
  %709 = vmatpush.bf16.xpose.msra.mxu0 0
  %710 = vmatpush.bf16.xpose.msra.mxu0 0
  %711 = vmatpush.bf16.xpose.msra.mxu0 %v702
  %712 = vmatmul.bf16.gmra.mxu0 %v561
  %v713 = vpop.f32.mrf.mxu0
  %v714 = vadd.f32 %v266, %v713
  %v715 = vpop.f32.mrf.mxu0
  %v716 = vadd.f32 %v268, %v715
  %717 = vmatmul.bf16.gmra.mxu0 %v564
  %v718 = vpop.f32.mrf.mxu0
  %v719 = vadd.f32 %v271, %v718
  %v720 = vpop.f32.mrf.mxu0
  %v721 = vadd.f32 %v273, %v720
  %722 = vdwg.mxu0
  %v725 = vunpack.c.l.b16 %v44
  %v726 = vunpack.c.l.b16 %v45
  %v727 = vpack.c.b16 %v726, %v725
  %v729 = vsel %vm111, %v727, 0
  %731 = vmatpush.bf16.xpose.msra.mxu0 0
  %732 = vmatpush.bf16.xpose.msra.mxu0 0
  %733 = vmatpush.bf16.xpose.msra.mxu0 0
  %734 = vmatpush.bf16.xpose.msra.mxu0 0
  %735 = vmatpush.bf16.xpose.msra.mxu0 0
  %736 = vmatpush.bf16.xpose.msra.mxu0 0
  %737 = vmatpush.bf16.xpose.msra.mxu0 0
  %738 = vmatpush.bf16.xpose.msra.mxu0 %v729
  %739 = vmatmul.bf16.gmra.mxu0 %v561
  %v740 = vpop.f32.mrf.mxu0
  %v741 = vadd.f32 %v293, %v740
  %v742 = vpop.f32.mrf.mxu0
  %v743 = vadd.f32 %v295, %v742
  %744 = vmatmul.bf16.gmra.mxu0 %v564
  %v745 = vpop.f32.mrf.mxu0
  %v746 = vadd.f32 %v298, %v745
  %v747 = vpop.f32.mrf.mxu0
  %v748 = vadd.f32 %v300, %v747
  %749 = vdwg.mxu0
  %v752 = vunpack.c.l.b16 %v46
  %v753 = vunpack.c.l.b16 %v47
  %v754 = vpack.c.b16 %v753, %v752
  %v756 = vsel %vm111, %v754, 0
  %758 = vmatpush.bf16.xpose.msra.mxu0 0
  %759 = vmatpush.bf16.xpose.msra.mxu0 0
  %760 = vmatpush.bf16.xpose.msra.mxu0 0
  %761 = vmatpush.bf16.xpose.msra.mxu0 0
  %762 = vmatpush.bf16.xpose.msra.mxu0 0
  %763 = vmatpush.bf16.xpose.msra.mxu0 0
  %764 = vmatpush.bf16.xpose.msra.mxu0 0
  %765 = vmatpush.bf16.xpose.msra.mxu0 %v756
  %766 = vmatmul.bf16.gmra.mxu0 %v561
  %v767 = vpop.f32.mrf.mxu0
  %v768 = vadd.f32 %v320, %v767
  %v769 = vpop.f32.mrf.mxu0
  %v770 = vadd.f32 %v322, %v769
  %771 = vmatmul.bf16.gmra.mxu0 %v564
  %v772 = vpop.f32.mrf.mxu0
  %v773 = vadd.f32 %v325, %v772
  %v774 = vpop.f32.mrf.mxu0
  %v775 = vadd.f32 %v327, %v774
  %776 = vdwg.mxu0
  %v779 = vunpack.c.l.b16 %v48
  %v780 = vunpack.c.l.b16 %v49
  %v781 = vpack.c.b16 %v780, %v779
  %v783 = vsel %vm111, %v781, 0
  %785 = vmatpush.bf16.xpose.msra.mxu0 0
  %786 = vmatpush.bf16.xpose.msra.mxu0 0
  %787 = vmatpush.bf16.xpose.msra.mxu0 0
  %788 = vmatpush.bf16.xpose.msra.mxu0 0
  %789 = vmatpush.bf16.xpose.msra.mxu0 0
  %790 = vmatpush.bf16.xpose.msra.mxu0 0
  %791 = vmatpush.bf16.xpose.msra.mxu0 0
  %792 = vmatpush.bf16.xpose.msra.mxu0 %v783
  %793 = vmatmul.bf16.gmra.mxu0 %v561
  %v794 = vpop.f32.mrf.mxu0
  %v795 = vadd.f32 %v347, %v794
  %v796 = vpop.f32.mrf.mxu0
  %v797 = vadd.f32 %v349, %v796
  %798 = vmatmul.bf16.gmra.mxu0 %v564
  %v799 = vpop.f32.mrf.mxu0
  %v800 = vadd.f32 %v352, %v799
  %v801 = vpop.f32.mrf.mxu0
  %v802 = vadd.f32 %v354, %v801
  %803 = vdwg.mxu0
  %v806 = vunpack.c.l.b16 %v50
  %v807 = vunpack.c.l.b16 %v51
  %v808 = vpack.c.b16 %v807, %v806
  %v810 = vsel %vm111, %v808, 0
  %812 = vmatpush.bf16.xpose.msra.mxu0 0
  %813 = vmatpush.bf16.xpose.msra.mxu0 0
  %814 = vmatpush.bf16.xpose.msra.mxu0 0
  %815 = vmatpush.bf16.xpose.msra.mxu0 0
  %816 = vmatpush.bf16.xpose.msra.mxu0 0
  %817 = vmatpush.bf16.xpose.msra.mxu0 0
  %818 = vmatpush.bf16.xpose.msra.mxu0 0
  %819 = vmatpush.bf16.xpose.msra.mxu0 %v810
  %820 = vmatmul.bf16.gmra.mxu0 %v561
  %v821 = vpop.f32.mrf.mxu0
  %v822 = vadd.f32 %v374, %v821
  %v823 = vpop.f32.mrf.mxu0
  %v824 = vadd.f32 %v376, %v823
  %825 = vmatmul.bf16.gmra.mxu0 %v564
  %v826 = vpop.f32.mrf.mxu0
  %v827 = vadd.f32 %v379, %v826
  %v828 = vpop.f32.mrf.mxu0
  %v829 = vadd.f32 %v381, %v828
  %830 = vdwg.mxu0
  %v833 = vunpack.c.l.b16 %v52
  %v834 = vunpack.c.l.b16 %v53
  %v835 = vpack.c.b16 %v834, %v833
  %v837 = vsel %vm111, %v835, 0
  %839 = vmatpush.bf16.xpose.msra.mxu0 0
  %840 = vmatpush.bf16.xpose.msra.mxu0 0
  %841 = vmatpush.bf16.xpose.msra.mxu0 0
  %842 = vmatpush.bf16.xpose.msra.mxu0 0
  %843 = vmatpush.bf16.xpose.msra.mxu0 0
  %844 = vmatpush.bf16.xpose.msra.mxu0 0
  %845 = vmatpush.bf16.xpose.msra.mxu0 0
  %846 = vmatpush.bf16.xpose.msra.mxu0 %v837
  %847 = vmatmul.bf16.gmra.mxu0 %v561
  %v848 = vpop.f32.mrf.mxu0
  %v849 = vadd.f32 %v401, %v848
  %v850 = vpop.f32.mrf.mxu0
  %v851 = vadd.f32 %v403, %v850
  %852 = vmatmul.bf16.gmra.mxu0 %v564
  %v853 = vpop.f32.mrf.mxu0
  %v854 = vadd.f32 %v406, %v853
  %v855 = vpop.f32.mrf.mxu0
  %v856 = vadd.f32 %v408, %v855
  %857 = vdwg.mxu0
  %v860 = vunpack.c.l.b16 %v54
  %v861 = vunpack.c.l.b16 %v55
  %v862 = vpack.c.b16 %v861, %v860
  %v864 = vsel %vm111, %v862, 0
  %866 = vmatpush.bf16.xpose.msra.mxu0 0
  %867 = vmatpush.bf16.xpose.msra.mxu0 0
  %868 = vmatpush.bf16.xpose.msra.mxu0 0
  %869 = vmatpush.bf16.xpose.msra.mxu0 0
  %870 = vmatpush.bf16.xpose.msra.mxu0 0
  %871 = vmatpush.bf16.xpose.msra.mxu0 0
  %872 = vmatpush.bf16.xpose.msra.mxu0 0
  %873 = vmatpush.bf16.xpose.msra.mxu0 %v864
  %874 = vmatmul.bf16.gmra.mxu0 %v561
  %v875 = vpop.f32.mrf.mxu0
  %v876 = vadd.f32 %v428, %v875
  %v877 = vpop.f32.mrf.mxu0
  %v878 = vadd.f32 %v430, %v877
  %879 = vmatmul.bf16.gmra.mxu0 %v564
  %v880 = vpop.f32.mrf.mxu0
  %v881 = vadd.f32 %v433, %v880
  %v882 = vpop.f32.mrf.mxu0
  %v883 = vadd.f32 %v435, %v882
  %884 = vdwg.mxu0
  %v887 = vunpack.c.l.b16 %v56
  %v888 = vunpack.c.l.b16 %v57
  %v889 = vpack.c.b16 %v888, %v887
  %v891 = vsel %vm111, %v889, 0
  %893 = vmatpush.bf16.xpose.msra.mxu0 0
  %894 = vmatpush.bf16.xpose.msra.mxu0 0
  %895 = vmatpush.bf16.xpose.msra.mxu0 0
  %896 = vmatpush.bf16.xpose.msra.mxu0 0
  %897 = vmatpush.bf16.xpose.msra.mxu0 0
  %898 = vmatpush.bf16.xpose.msra.mxu0 0
  %899 = vmatpush.bf16.xpose.msra.mxu0 0
  %900 = vmatpush.bf16.xpose.msra.mxu0 %v891
  %901 = vmatmul.bf16.gmra.mxu0 %v561
  %v902 = vpop.f32.mrf.mxu0
  %v903 = vadd.f32 %v455, %v902
  %v904 = vpop.f32.mrf.mxu0
  %v905 = vadd.f32 %v457, %v904
  %906 = vmatmul.bf16.gmra.mxu0 %v564
  %v907 = vpop.f32.mrf.mxu0
  %v908 = vadd.f32 %v460, %v907
  %v909 = vpop.f32.mrf.mxu0
  %v910 = vadd.f32 %v462, %v909
  %911 = vdwg.mxu0
  %v914 = vunpack.c.l.b16 %v58
  %v915 = vunpack.c.l.b16 %v59
  %v916 = vpack.c.b16 %v915, %v914
  %v918 = vsel %vm111, %v916, 0
  %920 = vmatpush.bf16.xpose.msra.mxu0 0
  %921 = vmatpush.bf16.xpose.msra.mxu0 0
  %922 = vmatpush.bf16.xpose.msra.mxu0 0
  %923 = vmatpush.bf16.xpose.msra.mxu0 0
  %924 = vmatpush.bf16.xpose.msra.mxu0 0
  %925 = vmatpush.bf16.xpose.msra.mxu0 0
  %926 = vmatpush.bf16.xpose.msra.mxu0 0
  %927 = vmatpush.bf16.xpose.msra.mxu0 %v918
  %928 = vmatmul.bf16.gmra.mxu0 %v561
  %v929 = vpop.f32.mrf.mxu0
  %v930 = vadd.f32 %v482, %v929
  %v931 = vpop.f32.mrf.mxu0
  %v932 = vadd.f32 %v484, %v931
  %933 = vmatmul.bf16.gmra.mxu0 %v564
  %v934 = vpop.f32.mrf.mxu0
  %v935 = vadd.f32 %v487, %v934
  %v936 = vpop.f32.mrf.mxu0
  %v937 = vadd.f32 %v489, %v936
  %938 = vdwg.mxu0
  %v941 = vunpack.c.l.b16 %v60
  %v942 = vunpack.c.l.b16 %v61
  %v943 = vpack.c.b16 %v942, %v941
  %v945 = vsel %vm111, %v943, 0
  %947 = vmatpush.bf16.xpose.msra.mxu0 0
  %948 = vmatpush.bf16.xpose.msra.mxu0 0
  %949 = vmatpush.bf16.xpose.msra.mxu0 0
  %950 = vmatpush.bf16.xpose.msra.mxu0 0
  %951 = vmatpush.bf16.xpose.msra.mxu0 0
  %952 = vmatpush.bf16.xpose.msra.mxu0 0
  %953 = vmatpush.bf16.xpose.msra.mxu0 0
  %954 = vmatpush.bf16.xpose.msra.mxu0 %v945
  %955 = vmatmul.bf16.gmra.mxu0 %v561
  %v956 = vpop.f32.mrf.mxu0
  %v957 = vadd.f32 %v509, %v956
  %v958 = vpop.f32.mrf.mxu0
  %v959 = vadd.f32 %v511, %v958
  %960 = vmatmul.bf16.gmra.mxu0 %v564
  %v961 = vpop.f32.mrf.mxu0
  %v962 = vadd.f32 %v514, %v961
  %v963 = vpop.f32.mrf.mxu0
  %v964 = vadd.f32 %v516, %v963
  %965 = vdwg.mxu0
  %v968 = vunpack.c.l.b16 %v62
  %v969 = vunpack.c.l.b16 %v63
  %v970 = vpack.c.b16 %v969, %v968
  %v972 = vsel %vm111, %v970, 0
  %974 = vmatpush.bf16.xpose.msra.mxu0 0
  %975 = vmatpush.bf16.xpose.msra.mxu0 0
  %976 = vmatpush.bf16.xpose.msra.mxu0 0
  %977 = vmatpush.bf16.xpose.msra.mxu0 0
  %978 = vmatpush.bf16.xpose.msra.mxu0 0
  %979 = vmatpush.bf16.xpose.msra.mxu0 0
  %980 = vmatpush.bf16.xpose.msra.mxu0 0
  %981 = vmatpush.bf16.xpose.msra.mxu0 %v972
  %982 = vmatmul.bf16.gmra.mxu0 %v561
  %v983 = vpop.f32.mrf.mxu0
  %v984 = vadd.f32 %v536, %v983
  %v985 = vpop.f32.mrf.mxu0
  %v986 = vadd.f32 %v538, %v985
  %987 = vmatmul.bf16.gmra.mxu0 %v564
  %v988 = vpop.f32.mrf.mxu0
  %v989 = vadd.f32 %v541, %v988
  %v990 = vpop.f32.mrf.mxu0
  %v991 = vadd.f32 %v543, %v990
  %992 = vdwg.mxu0
  %v993 = vld [vmem:[%s5] sm:$0xf]
  %v994 = vld [vmem:[%s5 + $0x4] sm:$0xf]
  %v995 = vld [vmem:[%s5 + $0x8] sm:$0xf]
  %v996 = vld [vmem:[%s5 + $0xc] sm:$0xf]
  %v997 = vld [vmem:[%s5 + $0x10] sm:$0xf]
  %v998 = vld [vmem:[%s5 + $0x14] sm:$0xf]
  %v999 = vld [vmem:[%s5 + $0x18] sm:$0xf]
  %v1000 = vld [vmem:[%s5 + $0x1c] sm:$0xf]
  %v1001 = vld [vmem:[%s5 + $0x20] sm:$0xf]
  %v1002 = vld [vmem:[%s5 + $0x24] sm:$0xf]
  %v1003 = vld [vmem:[%s5 + $0x28] sm:$0xf]
  %v1004 = vld [vmem:[%s5 + $0x2c] sm:$0xf]
  %v1005 = vld [vmem:[%s5 + $0x30] sm:$0xf]
  %v1006 = vld [vmem:[%s5 + $0x34] sm:$0xf]
  %v1007 = vld [vmem:[%s5 + $0x38] sm:$0xf]
  %v1008 = vld [vmem:[%s5 + $0x3c] sm:$0xf]
  %v1009 = vld [vmem:[%s4] sm:$0xf]
  %v1010 = vadd.f32 %v993, %v1009
  %v1011 = vadd.f32 %v994, %v1009
  %v1012 = vadd.f32 %v995, %v1009
  %v1013 = vadd.f32 %v996, %v1009
  %v1014 = vadd.f32 %v997, %v1009
  %v1015 = vadd.f32 %v998, %v1009
  %v1016 = vadd.f32 %v999, %v1009
  %v1017 = vadd.f32 %v1000, %v1009
  %v1018 = vadd.f32 %v1001, %v1009
  %v1019 = vadd.f32 %v1002, %v1009
  %v1020 = vadd.f32 %v1003, %v1009
  %v1021 = vadd.f32 %v1004, %v1009
  %v1022 = vadd.f32 %v1005, %v1009
  %v1023 = vadd.f32 %v1006, %v1009
  %v1024 = vadd.f32 %v1007, %v1009
  %v1025 = vadd.f32 %v1008, %v1009
  %vm1026 = vcmask 72704
  %v1027 = vsel %vm1026, %v579, 0.0
  %v1028 = vsel %vm1026, %v606, 0.0
  %v1029 = vsel %vm1026, %v633, 0.0
  %v1030 = vsel %vm1026, %v660, 0.0
  %v1031 = vsel %vm1026, %v687, 0.0
  %v1032 = vsel %vm1026, %v714, 0.0
  %v1033 = vsel %vm1026, %v741, 0.0
  %v1034 = vsel %vm1026, %v768, 0.0
  %v1035 = vsel %vm1026, %v795, 0.0
  %v1036 = vsel %vm1026, %v822, 0.0
  %v1037 = vsel %vm1026, %v849, 0.0
  %v1038 = vsel %vm1026, %v876, 0.0
  %v1039 = vsel %vm1026, %v903, 0.0
  %v1040 = vsel %vm1026, %v930, 0.0
  %v1041 = vsel %vm1026, %v957, 0.0
  %v1042 = vsel %vm1026, %v984, 0.0
  %v1043 = vadd.f32 %v1010, %v1027
  %v1044 = vadd.f32 %v1011, %v1028
  %v1045 = vadd.f32 %v1012, %v1029
  %v1046 = vadd.f32 %v1013, %v1030
  %v1047 = vadd.f32 %v1014, %v1031
  %v1048 = vadd.f32 %v1015, %v1032
  %v1049 = vadd.f32 %v1016, %v1033
  %v1050 = vadd.f32 %v1017, %v1034
  %v1051 = vadd.f32 %v1018, %v1035
  %v1052 = vadd.f32 %v1019, %v1036
  %v1053 = vadd.f32 %v1020, %v1037
  %v1054 = vadd.f32 %v1021, %v1038
  %v1055 = vadd.f32 %v1022, %v1039
  %v1056 = vadd.f32 %v1023, %v1040
  %v1057 = vadd.f32 %v1024, %v1041
  %v1058 = vadd.f32 %v1025, %v1042
  %v1075 = vrot.slane %v579, 4
  %v1076 = vrot.slane %v606, 4
  %v1077 = vrot.slane %v633, 4
  %v1078 = vrot.slane %v660, 4
  %v1079 = vrot.slane %v687, 4
  %v1080 = vrot.slane %v714, 4
  %v1081 = vrot.slane %v741, 4
  %v1082 = vrot.slane %v768, 4
  %v1083 = vrot.slane %v795, 4
  %v1084 = vrot.slane %v822, 4
  %v1085 = vrot.slane %v849, 4
  %v1086 = vrot.slane %v876, 4
  %v1087 = vrot.slane %v903, 4
  %v1088 = vrot.slane %v930, 4
  %v1089 = vrot.slane %v957, 4
  %v1090 = vrot.slane %v984, 4
  %1091 = vrot.lane.b32.xlu0 %v1075, 1
  %v1092 = vpop.permute.xlu0 %1091
  %1093 = vrot.lane.b32.xlu0 %v1076, 1
  %v1094 = vpop.permute.xlu0 %1093
  %1095 = vrot.lane.b32.xlu0 %v1077, 1
  %v1096 = vpop.permute.xlu0 %1095
  %1097 = vrot.lane.b32.xlu0 %v1078, 1
  %v1098 = vpop.permute.xlu0 %1097
  %1099 = vrot.lane.b32.xlu0 %v1079, 1
  %v1100 = vpop.permute.xlu0 %1099
  %1101 = vrot.lane.b32.xlu0 %v1080, 1
  %v1102 = vpop.permute.xlu0 %1101
  %1103 = vrot.lane.b32.xlu0 %v1081, 1
  %v1104 = vpop.permute.xlu0 %1103
  %1105 = vrot.lane.b32.xlu0 %v1082, 1
  %v1106 = vpop.permute.xlu0 %1105
  %1107 = vrot.lane.b32.xlu0 %v1083, 1
  %v1108 = vpop.permute.xlu0 %1107
  %1109 = vrot.lane.b32.xlu0 %v1084, 1
  %v1110 = vpop.permute.xlu0 %1109
  %1111 = vrot.lane.b32.xlu0 %v1085, 1
  %v1112 = vpop.permute.xlu0 %1111
  %1113 = vrot.lane.b32.xlu0 %v1086, 1
  %v1114 = vpop.permute.xlu0 %1113
  %1115 = vrot.lane.b32.xlu0 %v1087, 1
  %v1116 = vpop.permute.xlu0 %1115
  %1117 = vrot.lane.b32.xlu0 %v1088, 1
  %v1118 = vpop.permute.xlu0 %1117
  %1119 = vrot.lane.b32.xlu0 %v1089, 1
  %v1120 = vpop.permute.xlu0 %1119
  %1121 = vrot.lane.b32.xlu0 %v1090, 1
  %v1122 = vpop.permute.xlu0 %1121
  %vm1139 = vcmask 7168
  %v1140 = vsel %vm1139, 0.0, %v1092
  %v1141 = vsel %vm1139, 0.0, %v1094
  %v1142 = vsel %vm1139, 0.0, %v1096
  %v1143 = vsel %vm1139, 0.0, %v1098
  %v1144 = vsel %vm1139, 0.0, %v1100
  %v1145 = vsel %vm1139, 0.0, %v1102
  %v1146 = vsel %vm1139, 0.0, %v1104
  %v1147 = vsel %vm1139, 0.0, %v1106
  %v1148 = vsel %vm1139, 0.0, %v1108
  %v1149 = vsel %vm1139, 0.0, %v1110
  %v1150 = vsel %vm1139, 0.0, %v1112
  %v1151 = vsel %vm1139, 0.0, %v1114
  %v1152 = vsel %vm1139, 0.0, %v1116
  %v1153 = vsel %vm1139, 0.0, %v1118
  %v1154 = vsel %vm1139, 0.0, %v1120
  %v1155 = vsel %vm1139, 0.0, %v1122
  %vm1156 = vcmask 80896
  %v1157 = vsel %vm1156, %v1140, 0.0
  %v1158 = vsel %vm1156, %v1141, 0.0
  %v1159 = vsel %vm1156, %v1142, 0.0
  %v1160 = vsel %vm1156, %v1143, 0.0
  %v1161 = vsel %vm1156, %v1144, 0.0
  %v1162 = vsel %vm1156, %v1145, 0.0
  %v1163 = vsel %vm1156, %v1146, 0.0
  %v1164 = vsel %vm1156, %v1147, 0.0
  %v1165 = vsel %vm1156, %v1148, 0.0
  %v1166 = vsel %vm1156, %v1149, 0.0
  %v1167 = vsel %vm1156, %v1150, 0.0
  %v1168 = vsel %vm1156, %v1151, 0.0
  %v1169 = vsel %vm1156, %v1152, 0.0
  %v1170 = vsel %vm1156, %v1153, 0.0
  %v1171 = vsel %vm1156, %v1154, 0.0
  %v1172 = vsel %vm1156, %v1155, 0.0
  %v1173 = vadd.f32 %v1043, %v1157
  %v1174 = vadd.f32 %v1044, %v1158
  %v1175 = vadd.f32 %v1045, %v1159
  %v1176 = vadd.f32 %v1046, %v1160
  %v1177 = vadd.f32 %v1047, %v1161
  %v1178 = vadd.f32 %v1048, %v1162
  %v1179 = vadd.f32 %v1049, %v1163
  %v1180 = vadd.f32 %v1050, %v1164
  %v1181 = vadd.f32 %v1051, %v1165
  %v1182 = vadd.f32 %v1052, %v1166
  %v1183 = vadd.f32 %v1053, %v1167
  %v1184 = vadd.f32 %v1054, %v1168
  %v1185 = vadd.f32 %v1055, %v1169
  %v1186 = vadd.f32 %v1056, %v1170
  %v1187 = vadd.f32 %v1057, %v1171
  %v1188 = vadd.f32 %v1058, %v1172
  %1205 = vrot.lane.b32.xlu0 %v581, 2
  %v1206 = vpop.permute.xlu0 %1205
  %1207 = vrot.lane.b32.xlu0 %v608, 2
  %v1208 = vpop.permute.xlu0 %1207
  %1209 = vrot.lane.b32.xlu0 %v635, 2
  %v1210 = vpop.permute.xlu0 %1209
  %1211 = vrot.lane.b32.xlu0 %v662, 2
  %v1212 = vpop.permute.xlu0 %1211
  %1213 = vrot.lane.b32.xlu0 %v689, 2
  %v1214 = vpop.permute.xlu0 %1213
  %1215 = vrot.lane.b32.xlu0 %v716, 2
  %v1216 = vpop.permute.xlu0 %1215
  %1217 = vrot.lane.b32.xlu0 %v743, 2
  %v1218 = vpop.permute.xlu0 %1217
  %1219 = vrot.lane.b32.xlu0 %v770, 2
  %v1220 = vpop.permute.xlu0 %1219
  %1221 = vrot.lane.b32.xlu0 %v797, 2
  %v1222 = vpop.permute.xlu0 %1221
  %1223 = vrot.lane.b32.xlu0 %v824, 2
  %v1224 = vpop.permute.xlu0 %1223
  %1225 = vrot.lane.b32.xlu0 %v851, 2
  %v1226 = vpop.permute.xlu0 %1225
  %1227 = vrot.lane.b32.xlu0 %v878, 2
  %v1228 = vpop.permute.xlu0 %1227
  %1229 = vrot.lane.b32.xlu0 %v905, 2
  %v1230 = vpop.permute.xlu0 %1229
  %1231 = vrot.lane.b32.xlu0 %v932, 2
  %v1232 = vpop.permute.xlu0 %1231
  %1233 = vrot.lane.b32.xlu0 %v959, 2
  %v1234 = vpop.permute.xlu0 %1233
  %1235 = vrot.lane.b32.xlu0 %v986, 2
  %v1236 = vpop.permute.xlu0 %1235
  %vm1253 = vcmask 15360
  %v1254 = vsel %vm1253, 0.0, %v1206
  %v1255 = vsel %vm1253, 0.0, %v1208
  %v1256 = vsel %vm1253, 0.0, %v1210
  %v1257 = vsel %vm1253, 0.0, %v1212
  %v1258 = vsel %vm1253, 0.0, %v1214
  %v1259 = vsel %vm1253, 0.0, %v1216
  %v1260 = vsel %vm1253, 0.0, %v1218
  %v1261 = vsel %vm1253, 0.0, %v1220
  %v1262 = vsel %vm1253, 0.0, %v1222
  %v1263 = vsel %vm1253, 0.0, %v1224
  %v1264 = vsel %vm1253, 0.0, %v1226
  %v1265 = vsel %vm1253, 0.0, %v1228
  %v1266 = vsel %vm1253, 0.0, %v1230
  %v1267 = vsel %vm1253, 0.0, %v1232
  %v1268 = vsel %vm1253, 0.0, %v1234
  %v1269 = vsel %vm1253, 0.0, %v1236
  %vm1270 = vcmask 89088
  %v1271 = vsel %vm1270, %v1254, 0.0
  %v1272 = vsel %vm1270, %v1255, 0.0
  %v1273 = vsel %vm1270, %v1256, 0.0
  %v1274 = vsel %vm1270, %v1257, 0.0
  %v1275 = vsel %vm1270, %v1258, 0.0
  %v1276 = vsel %vm1270, %v1259, 0.0
  %v1277 = vsel %vm1270, %v1260, 0.0
  %v1278 = vsel %vm1270, %v1261, 0.0
  %v1279 = vsel %vm1270, %v1262, 0.0
  %v1280 = vsel %vm1270, %v1263, 0.0
  %v1281 = vsel %vm1270, %v1264, 0.0
  %v1282 = vsel %vm1270, %v1265, 0.0
  %v1283 = vsel %vm1270, %v1266, 0.0
  %v1284 = vsel %vm1270, %v1267, 0.0
  %v1285 = vsel %vm1270, %v1268, 0.0
  %v1286 = vsel %vm1270, %v1269, 0.0
  %v1287 = vadd.f32 %v1173, %v1271
  %v1288 = vadd.f32 %v1174, %v1272
  %v1289 = vadd.f32 %v1175, %v1273
  %v1290 = vadd.f32 %v1176, %v1274
  %v1291 = vadd.f32 %v1177, %v1275
  %v1292 = vadd.f32 %v1178, %v1276
  %v1293 = vadd.f32 %v1179, %v1277
  %v1294 = vadd.f32 %v1180, %v1278
  %v1295 = vadd.f32 %v1181, %v1279
  %v1296 = vadd.f32 %v1182, %v1280
  %v1297 = vadd.f32 %v1183, %v1281
  %v1298 = vadd.f32 %v1184, %v1282
  %v1299 = vadd.f32 %v1185, %v1283
  %v1300 = vadd.f32 %v1186, %v1284
  %v1301 = vadd.f32 %v1187, %v1285
  %v1302 = vadd.f32 %v1188, %v1286
  %v1303 = vrot.slane %v581, 4
  %v1304 = vrot.slane %v608, 4
  %v1305 = vrot.slane %v635, 4
  %v1306 = vrot.slane %v662, 4
  %v1307 = vrot.slane %v689, 4
  %v1308 = vrot.slane %v716, 4
  %v1309 = vrot.slane %v743, 4
  %v1310 = vrot.slane %v770, 4
  %v1311 = vrot.slane %v797, 4
  %v1312 = vrot.slane %v824, 4
  %v1313 = vrot.slane %v851, 4
  %v1314 = vrot.slane %v878, 4
  %v1315 = vrot.slane %v905, 4
  %v1316 = vrot.slane %v932, 4
  %v1317 = vrot.slane %v959, 4
  %v1318 = vrot.slane %v986, 4
  %1319 = vrot.lane.b32.xlu0 %v1303, 3
  %v1320 = vpop.permute.xlu0 %1319
  %1321 = vrot.lane.b32.xlu0 %v1304, 3
  %v1322 = vpop.permute.xlu0 %1321
  %1323 = vrot.lane.b32.xlu0 %v1305, 3
  %v1324 = vpop.permute.xlu0 %1323
  %1325 = vrot.lane.b32.xlu0 %v1306, 3
  %v1326 = vpop.permute.xlu0 %1325
  %1327 = vrot.lane.b32.xlu0 %v1307, 3
  %v1328 = vpop.permute.xlu0 %1327
  %1329 = vrot.lane.b32.xlu0 %v1308, 3
  %v1330 = vpop.permute.xlu0 %1329
  %1331 = vrot.lane.b32.xlu0 %v1309, 3
  %v1332 = vpop.permute.xlu0 %1331
  %1333 = vrot.lane.b32.xlu0 %v1310, 3
  %v1334 = vpop.permute.xlu0 %1333
  %1335 = vrot.lane.b32.xlu0 %v1311, 3
  %v1336 = vpop.permute.xlu0 %1335
  %1337 = vrot.lane.b32.xlu0 %v1312, 3
  %v1338 = vpop.permute.xlu0 %1337
  %1339 = vrot.lane.b32.xlu0 %v1313, 3
  %v1340 = vpop.permute.xlu0 %1339
  %1341 = vrot.lane.b32.xlu0 %v1314, 3
  %v1342 = vpop.permute.xlu0 %1341
  %1343 = vrot.lane.b32.xlu0 %v1315, 3
  %v1344 = vpop.permute.xlu0 %1343
  %1345 = vrot.lane.b32.xlu0 %v1316, 3
  %v1346 = vpop.permute.xlu0 %1345
  %1347 = vrot.lane.b32.xlu0 %v1317, 3
  %v1348 = vpop.permute.xlu0 %1347
  %1349 = vrot.lane.b32.xlu0 %v1318, 3
  %v1350 = vpop.permute.xlu0 %1349
  %vm1367 = vcmask 23552
  %v1368 = vsel %vm1367, 0.0, %v1320
  %v1369 = vsel %vm1367, 0.0, %v1322
  %v1370 = vsel %vm1367, 0.0, %v1324
  %v1371 = vsel %vm1367, 0.0, %v1326
  %v1372 = vsel %vm1367, 0.0, %v1328
  %v1373 = vsel %vm1367, 0.0, %v1330
  %v1374 = vsel %vm1367, 0.0, %v1332
  %v1375 = vsel %vm1367, 0.0, %v1334
  %v1376 = vsel %vm1367, 0.0, %v1336
  %v1377 = vsel %vm1367, 0.0, %v1338
  %v1378 = vsel %vm1367, 0.0, %v1340
  %v1379 = vsel %vm1367, 0.0, %v1342
  %v1380 = vsel %vm1367, 0.0, %v1344
  %v1381 = vsel %vm1367, 0.0, %v1346
  %v1382 = vsel %vm1367, 0.0, %v1348
  %v1383 = vsel %vm1367, 0.0, %v1350
  %vm1384 = vcmask 97280
  %v1385 = vsel %vm1384, %v1368, 0.0
  %v1386 = vsel %vm1384, %v1369, 0.0
  %v1387 = vsel %vm1384, %v1370, 0.0
  %v1388 = vsel %vm1384, %v1371, 0.0
  %v1389 = vsel %vm1384, %v1372, 0.0
  %v1390 = vsel %vm1384, %v1373, 0.0
  %v1391 = vsel %vm1384, %v1374, 0.0
  %v1392 = vsel %vm1384, %v1375, 0.0
  %v1393 = vsel %vm1384, %v1376, 0.0
  %v1394 = vsel %vm1384, %v1377, 0.0
  %v1395 = vsel %vm1384, %v1378, 0.0
  %v1396 = vsel %vm1384, %v1379, 0.0
  %v1397 = vsel %vm1384, %v1380, 0.0
  %v1398 = vsel %vm1384, %v1381, 0.0
  %v1399 = vsel %vm1384, %v1382, 0.0
  %v1400 = vsel %vm1384, %v1383, 0.0
  %v1401 = vadd.f32 %v1287, %v1385
  %v1402 = vadd.f32 %v1288, %v1386
  %v1403 = vadd.f32 %v1289, %v1387
  %v1404 = vadd.f32 %v1290, %v1388
  %v1405 = vadd.f32 %v1291, %v1389
  %v1406 = vadd.f32 %v1292, %v1390
  %v1407 = vadd.f32 %v1293, %v1391
  %v1408 = vadd.f32 %v1294, %v1392
  %v1409 = vadd.f32 %v1295, %v1393
  %v1410 = vadd.f32 %v1296, %v1394
  %v1411 = vadd.f32 %v1297, %v1395
  %v1412 = vadd.f32 %v1298, %v1396
  %v1413 = vadd.f32 %v1299, %v1397
  %v1414 = vadd.f32 %v1300, %v1398
  %v1415 = vadd.f32 %v1301, %v1399
  %v1416 = vadd.f32 %v1302, %v1400
  %1433 = vrot.lane.b32.xlu0 %v584, 4
  %v1434 = vpop.permute.xlu0 %1433
  %1435 = vrot.lane.b32.xlu0 %v611, 4
  %v1436 = vpop.permute.xlu0 %1435
  %1437 = vrot.lane.b32.xlu0 %v638, 4
  %v1438 = vpop.permute.xlu0 %1437
  %1439 = vrot.lane.b32.xlu0 %v665, 4
  %v1440 = vpop.permute.xlu0 %1439
  %1441 = vrot.lane.b32.xlu0 %v692, 4
  %v1442 = vpop.permute.xlu0 %1441
  %1443 = vrot.lane.b32.xlu0 %v719, 4
  %v1444 = vpop.permute.xlu0 %1443
  %1445 = vrot.lane.b32.xlu0 %v746, 4
  %v1446 = vpop.permute.xlu0 %1445
  %1447 = vrot.lane.b32.xlu0 %v773, 4
  %v1448 = vpop.permute.xlu0 %1447
  %1449 = vrot.lane.b32.xlu0 %v800, 4
  %v1450 = vpop.permute.xlu0 %1449
  %1451 = vrot.lane.b32.xlu0 %v827, 4
  %v1452 = vpop.permute.xlu0 %1451
  %1453 = vrot.lane.b32.xlu0 %v854, 4
  %v1454 = vpop.permute.xlu0 %1453
  %1455 = vrot.lane.b32.xlu0 %v881, 4
  %v1456 = vpop.permute.xlu0 %1455
  %1457 = vrot.lane.b32.xlu0 %v908, 4
  %v1458 = vpop.permute.xlu0 %1457
  %1459 = vrot.lane.b32.xlu0 %v935, 4
  %v1460 = vpop.permute.xlu0 %1459
  %1461 = vrot.lane.b32.xlu0 %v962, 4
  %v1462 = vpop.permute.xlu0 %1461
  %1463 = vrot.lane.b32.xlu0 %v989, 4
  %v1464 = vpop.permute.xlu0 %1463
  %vm1481 = vcmask 31744
  %v1482 = vsel %vm1481, 0.0, %v1434
  %v1483 = vsel %vm1481, 0.0, %v1436
  %v1484 = vsel %vm1481, 0.0, %v1438
  %v1485 = vsel %vm1481, 0.0, %v1440
  %v1486 = vsel %vm1481, 0.0, %v1442
  %v1487 = vsel %vm1481, 0.0, %v1444
  %v1488 = vsel %vm1481, 0.0, %v1446
  %v1489 = vsel %vm1481, 0.0, %v1448
  %v1490 = vsel %vm1481, 0.0, %v1450
  %v1491 = vsel %vm1481, 0.0, %v1452
  %v1492 = vsel %vm1481, 0.0, %v1454
  %v1493 = vsel %vm1481, 0.0, %v1456
  %v1494 = vsel %vm1481, 0.0, %v1458
  %v1495 = vsel %vm1481, 0.0, %v1460
  %v1496 = vsel %vm1481, 0.0, %v1462
  %v1497 = vsel %vm1481, 0.0, %v1464
  %vm1498 = vcmask 105472
  %v1499 = vsel %vm1498, %v1482, 0.0
  %v1500 = vsel %vm1498, %v1483, 0.0
  %v1501 = vsel %vm1498, %v1484, 0.0
  %v1502 = vsel %vm1498, %v1485, 0.0
  %v1503 = vsel %vm1498, %v1486, 0.0
  %v1504 = vsel %vm1498, %v1487, 0.0
  %v1505 = vsel %vm1498, %v1488, 0.0
  %v1506 = vsel %vm1498, %v1489, 0.0
  %v1507 = vsel %vm1498, %v1490, 0.0
  %v1508 = vsel %vm1498, %v1491, 0.0
  %v1509 = vsel %vm1498, %v1492, 0.0
  %v1510 = vsel %vm1498, %v1493, 0.0
  %v1511 = vsel %vm1498, %v1494, 0.0
  %v1512 = vsel %vm1498, %v1495, 0.0
  %v1513 = vsel %vm1498, %v1496, 0.0
  %v1514 = vsel %vm1498, %v1497, 0.0
  %v1515 = vadd.f32 %v1401, %v1499
  %v1516 = vadd.f32 %v1402, %v1500
  %v1517 = vadd.f32 %v1403, %v1501
  %v1518 = vadd.f32 %v1404, %v1502
  %v1519 = vadd.f32 %v1405, %v1503
  %v1520 = vadd.f32 %v1406, %v1504
  %v1521 = vadd.f32 %v1407, %v1505
  %v1522 = vadd.f32 %v1408, %v1506
  %v1523 = vadd.f32 %v1409, %v1507
  %v1524 = vadd.f32 %v1410, %v1508
  %v1525 = vadd.f32 %v1411, %v1509
  %v1526 = vadd.f32 %v1412, %v1510
  %v1527 = vadd.f32 %v1413, %v1511
  %v1528 = vadd.f32 %v1414, %v1512
  %v1529 = vadd.f32 %v1415, %v1513
  %v1530 = vadd.f32 %v1416, %v1514
  %v1531 = vrot.slane %v584, 4
  %v1532 = vrot.slane %v611, 4
  %v1533 = vrot.slane %v638, 4
  %v1534 = vrot.slane %v665, 4
  %v1535 = vrot.slane %v692, 4
  %v1536 = vrot.slane %v719, 4
  %v1537 = vrot.slane %v746, 4
  %v1538 = vrot.slane %v773, 4
  %v1539 = vrot.slane %v800, 4
  %v1540 = vrot.slane %v827, 4
  %v1541 = vrot.slane %v854, 4
  %v1542 = vrot.slane %v881, 4
  %v1543 = vrot.slane %v908, 4
  %v1544 = vrot.slane %v935, 4
  %v1545 = vrot.slane %v962, 4
  %v1546 = vrot.slane %v989, 4
  %1547 = vrot.lane.b32.xlu0 %v1531, 5
  %v1548 = vpop.permute.xlu0 %1547
  %1549 = vrot.lane.b32.xlu0 %v1532, 5
  %v1550 = vpop.permute.xlu0 %1549
  %1551 = vrot.lane.b32.xlu0 %v1533, 5
  %v1552 = vpop.permute.xlu0 %1551
  %1553 = vrot.lane.b32.xlu0 %v1534, 5
  %v1554 = vpop.permute.xlu0 %1553
  %1555 = vrot.lane.b32.xlu0 %v1535, 5
  %v1556 = vpop.permute.xlu0 %1555
  %1557 = vrot.lane.b32.xlu0 %v1536, 5
  %v1558 = vpop.permute.xlu0 %1557
  %1559 = vrot.lane.b32.xlu0 %v1537, 5
  %v1560 = vpop.permute.xlu0 %1559
  %1561 = vrot.lane.b32.xlu0 %v1538, 5
  %v1562 = vpop.permute.xlu0 %1561
  %1563 = vrot.lane.b32.xlu0 %v1539, 5
  %v1564 = vpop.permute.xlu0 %1563
  %1565 = vrot.lane.b32.xlu0 %v1540, 5
  %v1566 = vpop.permute.xlu0 %1565
  %1567 = vrot.lane.b32.xlu0 %v1541, 5
  %v1568 = vpop.permute.xlu0 %1567
  %1569 = vrot.lane.b32.xlu0 %v1542, 5
  %v1570 = vpop.permute.xlu0 %1569
  %1571 = vrot.lane.b32.xlu0 %v1543, 5
  %v1572 = vpop.permute.xlu0 %1571
  %1573 = vrot.lane.b32.xlu0 %v1544, 5
  %v1574 = vpop.permute.xlu0 %1573
  %1575 = vrot.lane.b32.xlu0 %v1545, 5
  %v1576 = vpop.permute.xlu0 %1575
  %1577 = vrot.lane.b32.xlu0 %v1546, 5
  %v1578 = vpop.permute.xlu0 %1577
  %vm1595 = vcmask 39936
  %v1596 = vsel %vm1595, 0.0, %v1548
  %v1597 = vsel %vm1595, 0.0, %v1550
  %v1598 = vsel %vm1595, 0.0, %v1552
  %v1599 = vsel %vm1595, 0.0, %v1554
  %v1600 = vsel %vm1595, 0.0, %v1556
  %v1601 = vsel %vm1595, 0.0, %v1558
  %v1602 = vsel %vm1595, 0.0, %v1560
  %v1603 = vsel %vm1595, 0.0, %v1562
  %v1604 = vsel %vm1595, 0.0, %v1564
  %v1605 = vsel %vm1595, 0.0, %v1566
  %v1606 = vsel %vm1595, 0.0, %v1568
  %v1607 = vsel %vm1595, 0.0, %v1570
  %v1608 = vsel %vm1595, 0.0, %v1572
  %v1609 = vsel %vm1595, 0.0, %v1574
  %v1610 = vsel %vm1595, 0.0, %v1576
  %v1611 = vsel %vm1595, 0.0, %v1578
  %vm1612 = vcmask 113664
  %v1613 = vsel %vm1612, %v1596, 0.0
  %v1614 = vsel %vm1612, %v1597, 0.0
  %v1615 = vsel %vm1612, %v1598, 0.0
  %v1616 = vsel %vm1612, %v1599, 0.0
  %v1617 = vsel %vm1612, %v1600, 0.0
  %v1618 = vsel %vm1612, %v1601, 0.0
  %v1619 = vsel %vm1612, %v1602, 0.0
  %v1620 = vsel %vm1612, %v1603, 0.0
  %v1621 = vsel %vm1612, %v1604, 0.0
  %v1622 = vsel %vm1612, %v1605, 0.0
  %v1623 = vsel %vm1612, %v1606, 0.0
  %v1624 = vsel %vm1612, %v1607, 0.0
  %v1625 = vsel %vm1612, %v1608, 0.0
  %v1626 = vsel %vm1612, %v1609, 0.0
  %v1627 = vsel %vm1612, %v1610, 0.0
  %v1628 = vsel %vm1612, %v1611, 0.0
  %v1629 = vadd.f32 %v1515, %v1613
  %v1630 = vadd.f32 %v1516, %v1614
  %v1631 = vadd.f32 %v1517, %v1615
  %v1632 = vadd.f32 %v1518, %v1616
  %v1633 = vadd.f32 %v1519, %v1617
  %v1634 = vadd.f32 %v1520, %v1618
  %v1635 = vadd.f32 %v1521, %v1619
  %v1636 = vadd.f32 %v1522, %v1620
  %v1637 = vadd.f32 %v1523, %v1621
  %v1638 = vadd.f32 %v1524, %v1622
  %v1639 = vadd.f32 %v1525, %v1623
  %v1640 = vadd.f32 %v1526, %v1624
  %v1641 = vadd.f32 %v1527, %v1625
  %v1642 = vadd.f32 %v1528, %v1626
  %v1643 = vadd.f32 %v1529, %v1627
  %v1644 = vadd.f32 %v1530, %v1628
  %1661 = vrot.lane.b32.xlu0 %v586, 6
  %v1662 = vpop.permute.xlu0 %1661
  %1663 = vrot.lane.b32.xlu0 %v613, 6
  %v1664 = vpop.permute.xlu0 %1663
  %1665 = vrot.lane.b32.xlu0 %v640, 6
  %v1666 = vpop.permute.xlu0 %1665
  %1667 = vrot.lane.b32.xlu0 %v667, 6
  %v1668 = vpop.permute.xlu0 %1667
  %1669 = vrot.lane.b32.xlu0 %v694, 6
  %v1670 = vpop.permute.xlu0 %1669
  %1671 = vrot.lane.b32.xlu0 %v721, 6
  %v1672 = vpop.permute.xlu0 %1671
  %1673 = vrot.lane.b32.xlu0 %v748, 6
  %v1674 = vpop.permute.xlu0 %1673
  %1675 = vrot.lane.b32.xlu0 %v775, 6
  %v1676 = vpop.permute.xlu0 %1675
  %1677 = vrot.lane.b32.xlu0 %v802, 6
  %v1678 = vpop.permute.xlu0 %1677
  %1679 = vrot.lane.b32.xlu0 %v829, 6
  %v1680 = vpop.permute.xlu0 %1679
  %1681 = vrot.lane.b32.xlu0 %v856, 6
  %v1682 = vpop.permute.xlu0 %1681
  %1683 = vrot.lane.b32.xlu0 %v883, 6
  %v1684 = vpop.permute.xlu0 %1683
  %1685 = vrot.lane.b32.xlu0 %v910, 6
  %v1686 = vpop.permute.xlu0 %1685
  %1687 = vrot.lane.b32.xlu0 %v937, 6
  %v1688 = vpop.permute.xlu0 %1687
  %1689 = vrot.lane.b32.xlu0 %v964, 6
  %v1690 = vpop.permute.xlu0 %1689
  %1691 = vrot.lane.b32.xlu0 %v991, 6
  %v1692 = vpop.permute.xlu0 %1691
  %vm1709 = vcmask 48128
  %v1710 = vsel %vm1709, 0.0, %v1662
  %v1711 = vsel %vm1709, 0.0, %v1664
  %v1712 = vsel %vm1709, 0.0, %v1666
  %v1713 = vsel %vm1709, 0.0, %v1668
  %v1714 = vsel %vm1709, 0.0, %v1670
  %v1715 = vsel %vm1709, 0.0, %v1672
  %v1716 = vsel %vm1709, 0.0, %v1674
  %v1717 = vsel %vm1709, 0.0, %v1676
  %v1718 = vsel %vm1709, 0.0, %v1678
  %v1719 = vsel %vm1709, 0.0, %v1680
  %v1720 = vsel %vm1709, 0.0, %v1682
  %v1721 = vsel %vm1709, 0.0, %v1684
  %v1722 = vsel %vm1709, 0.0, %v1686
  %v1723 = vsel %vm1709, 0.0, %v1688
  %v1724 = vsel %vm1709, 0.0, %v1690
  %v1725 = vsel %vm1709, 0.0, %v1692
  %vm1726 = vcmask 121856
  %v1727 = vsel %vm1726, %v1710, 0.0
  %v1728 = vsel %vm1726, %v1711, 0.0
  %v1729 = vsel %vm1726, %v1712, 0.0
  %v1730 = vsel %vm1726, %v1713, 0.0
  %v1731 = vsel %vm1726, %v1714, 0.0
  %v1732 = vsel %vm1726, %v1715, 0.0
  %v1733 = vsel %vm1726, %v1716, 0.0
  %v1734 = vsel %vm1726, %v1717, 0.0
  %v1735 = vsel %vm1726, %v1718, 0.0
  %v1736 = vsel %vm1726, %v1719, 0.0
  %v1737 = vsel %vm1726, %v1720, 0.0
  %v1738 = vsel %vm1726, %v1721, 0.0
  %v1739 = vsel %vm1726, %v1722, 0.0
  %v1740 = vsel %vm1726, %v1723, 0.0
  %v1741 = vsel %vm1726, %v1724, 0.0
  %v1742 = vsel %vm1726, %v1725, 0.0
  %v1743 = vadd.f32 %v1629, %v1727
  %v1744 = vadd.f32 %v1630, %v1728
  %v1745 = vadd.f32 %v1631, %v1729
  %v1746 = vadd.f32 %v1632, %v1730
  %v1747 = vadd.f32 %v1633, %v1731
  %v1748 = vadd.f32 %v1634, %v1732
  %v1749 = vadd.f32 %v1635, %v1733
  %v1750 = vadd.f32 %v1636, %v1734
  %v1751 = vadd.f32 %v1637, %v1735
  %v1752 = vadd.f32 %v1638, %v1736
  %v1753 = vadd.f32 %v1639, %v1737
  %v1754 = vadd.f32 %v1640, %v1738
  %v1755 = vadd.f32 %v1641, %v1739
  %v1756 = vadd.f32 %v1642, %v1740
  %v1757 = vadd.f32 %v1643, %v1741
  %v1758 = vadd.f32 %v1644, %v1742
  %v1759 = vrot.slane %v586, 4
  %v1760 = vrot.slane %v613, 4
  %v1761 = vrot.slane %v640, 4
  %v1762 = vrot.slane %v667, 4
  %v1763 = vrot.slane %v694, 4
  %v1764 = vrot.slane %v721, 4
  %v1765 = vrot.slane %v748, 4
  %v1766 = vrot.slane %v775, 4
  %v1767 = vrot.slane %v802, 4
  %v1768 = vrot.slane %v829, 4
  %v1769 = vrot.slane %v856, 4
  %v1770 = vrot.slane %v883, 4
  %v1771 = vrot.slane %v910, 4
  %v1772 = vrot.slane %v937, 4
  %v1773 = vrot.slane %v964, 4
  %v1774 = vrot.slane %v991, 4
  %1775 = vrot.lane.b32.xlu0 %v1759, 7
  %v1776 = vpop.permute.xlu0 %1775
  %1777 = vrot.lane.b32.xlu0 %v1760, 7
  %v1778 = vpop.permute.xlu0 %1777
  %1779 = vrot.lane.b32.xlu0 %v1761, 7
  %v1780 = vpop.permute.xlu0 %1779
  %1781 = vrot.lane.b32.xlu0 %v1762, 7
  %v1782 = vpop.permute.xlu0 %1781
  %1783 = vrot.lane.b32.xlu0 %v1763, 7
  %v1784 = vpop.permute.xlu0 %1783
  %1785 = vrot.lane.b32.xlu0 %v1764, 7
  %v1786 = vpop.permute.xlu0 %1785
  %1787 = vrot.lane.b32.xlu0 %v1765, 7
  %v1788 = vpop.permute.xlu0 %1787
  %1789 = vrot.lane.b32.xlu0 %v1766, 7
  %v1790 = vpop.permute.xlu0 %1789
  %1791 = vrot.lane.b32.xlu0 %v1767, 7
  %v1792 = vpop.permute.xlu0 %1791
  %1793 = vrot.lane.b32.xlu0 %v1768, 7
  %v1794 = vpop.permute.xlu0 %1793
  %1795 = vrot.lane.b32.xlu0 %v1769, 7
  %v1796 = vpop.permute.xlu0 %1795
  %1797 = vrot.lane.b32.xlu0 %v1770, 7
  %v1798 = vpop.permute.xlu0 %1797
  %1799 = vrot.lane.b32.xlu0 %v1771, 7
  %v1800 = vpop.permute.xlu0 %1799
  %1801 = vrot.lane.b32.xlu0 %v1772, 7
  %v1802 = vpop.permute.xlu0 %1801
  %1803 = vrot.lane.b32.xlu0 %v1773, 7
  %v1804 = vpop.permute.xlu0 %1803
  %1805 = vrot.lane.b32.xlu0 %v1774, 7
  %v1806 = vpop.permute.xlu0 %1805
  %vm1823 = vcmask 56320
  %v1824 = vsel %vm1823, 0.0, %v1776
  %v1825 = vsel %vm1823, 0.0, %v1778
  %v1826 = vsel %vm1823, 0.0, %v1780
  %v1827 = vsel %vm1823, 0.0, %v1782
  %v1828 = vsel %vm1823, 0.0, %v1784
  %v1829 = vsel %vm1823, 0.0, %v1786
  %v1830 = vsel %vm1823, 0.0, %v1788
  %v1831 = vsel %vm1823, 0.0, %v1790
  %v1832 = vsel %vm1823, 0.0, %v1792
  %v1833 = vsel %vm1823, 0.0, %v1794
  %v1834 = vsel %vm1823, 0.0, %v1796
  %v1835 = vsel %vm1823, 0.0, %v1798
  %v1836 = vsel %vm1823, 0.0, %v1800
  %v1837 = vsel %vm1823, 0.0, %v1802
  %v1838 = vsel %vm1823, 0.0, %v1804
  %v1839 = vsel %vm1823, 0.0, %v1806
  %v1840 = vadd.f32 %v1743, %v1824
  %v1841 = vadd.f32 %v1744, %v1825
  %v1842 = vadd.f32 %v1745, %v1826
  %v1843 = vadd.f32 %v1746, %v1827
  %v1844 = vadd.f32 %v1747, %v1828
  %v1845 = vadd.f32 %v1748, %v1829
  %v1846 = vadd.f32 %v1749, %v1830
  %v1847 = vadd.f32 %v1750, %v1831
  %v1848 = vadd.f32 %v1751, %v1832
  %v1849 = vadd.f32 %v1752, %v1833
  %v1850 = vadd.f32 %v1753, %v1834
  %v1851 = vadd.f32 %v1754, %v1835
  %v1852 = vadd.f32 %v1755, %v1836
  %v1853 = vadd.f32 %v1756, %v1837
  %v1854 = vadd.f32 %v1757, %v1838
  %v1855 = vadd.f32 %v1758, %v1839
  %vm1856 = vcmask 125952
  %1857 = vst.msk [vmem:[%s6] sm:$0xf] %vm1856, %v1840
  %1858 = vst.msk [vmem:[%s6 + $0x4] sm:$0xf] %vm1856, %v1841
  %1859 = vst.msk [vmem:[%s6 + $0x8] sm:$0xf] %vm1856, %v1842
  %1860 = vst.msk [vmem:[%s6 + $0xc] sm:$0xf] %vm1856, %v1843
  %1861 = vst.msk [vmem:[%s6 + $0x10] sm:$0xf] %vm1856, %v1844
  %1862 = vst.msk [vmem:[%s6 + $0x14] sm:$0xf] %vm1856, %v1845
  %1863 = vst.msk [vmem:[%s6 + $0x18] sm:$0xf] %vm1856, %v1846
  %1864 = vst.msk [vmem:[%s6 + $0x1c] sm:$0xf] %vm1856, %v1847
  %1865 = vst.msk [vmem:[%s6 + $0x20] sm:$0xf] %vm1856, %v1848
  %1866 = vst.msk [vmem:[%s6 + $0x24] sm:$0xf] %vm1856, %v1849
  %1867 = vst.msk [vmem:[%s6 + $0x28] sm:$0xf] %vm1856, %v1850
  %1868 = vst.msk [vmem:[%s6 + $0x2c] sm:$0xf] %vm1856, %v1851
  %1869 = vst.msk [vmem:[%s6 + $0x30] sm:$0xf] %vm1856, %v1852
  %1870 = vst.msk [vmem:[%s6 + $0x34] sm:$0xf] %vm1856, %v1853
  %1871 = vst.msk [vmem:[%s6 + $0x38] sm:$0xf] %vm1856, %v1854
  %1872 = vst.msk [vmem:[%s6 + $0x3c] sm:$0xf] %vm1856, %v1855
  // Predicated region
  $region26: #{dprnn_block_forward.11} parent=0 // pred_check
    _
  $region27: #{dprnn_block_forward.11} parent=0 // pred_check_branch
    %1874 = sbr.rel (0) target = $region29
  $region28: #{dprnn_block_forward.11} parent=0 // pred_region
    _
  $region29: #{dprnn_block_forward.11} parent=0 // pred_fallthru
    _
  // Predicated region
  $region30: #{dprnn_block_forward.11} parent=0 // pred_check
    _
  $region31: #{dprnn_block_forward.11} parent=0 // pred_check_branch
    %1876 = sbr.rel (0) target = $region33
  $region32: #{dprnn_block_forward.11} parent=0 // pred_region
    _
  $region33: #{dprnn_block_forward.11} parent=0 // pred_fallthru
    _

// kernel: dprnn_block_forward.7
$region0: #{dprnn_block_forward.7}
  #allocation0 [shape = 'u32[]', space=smem, size = 0x4, offset = 0x4, fixed_abs, tag = 'smem constant byte address 0x4 - core index']
  #allocation1 [shape = 'u32[72,128]{1,0:T(1,128)}', space=vmem, size = 0x9000, scoped, tag = 'internal scratch']
  #allocation2 [shape = 'f32[16,16,4]{2,1,0:T(8,128)}', space=vmem, size = 0x20000, scoped, tag = 'scratch operand']
  #allocation3 [shape = 'f32[9,16,64]{2,1,0:T(8,128)}', space=vmem, size = 0x12000, scoped, tag = 'scratch operand']
  #allocation4 [shape = 'f32[9,16,64]{2,1,0:T(8,128)}', space=vmem, size = 0x12000, scoped, tag = 'scratch operand']
  %s0 = inlined_call_operand.vmem [shape: f32[16,4,16], index: 0, kind: input, shape index: {}]
  %s1 = inlined_call_operand.vmem [shape: bf16[32,64], index: 1, kind: input, shape index: {}]
  %s2 = inlined_call_operand.vmem [shape: bf16[32,64], index: 2, kind: input, shape index: {}]
  %s3 = inlined_call_operand.vmem [shape: f32[4,16], index: 3, kind: input, shape index: {}]
  %s4 = inlined_call_operand.vmem [shape: f32[4,16], index: 4, kind: input, shape index: {}]
  %s5 = inlined_call_operand.vmem [shape: bf16[9,16,16], index: 5, kind: output, shape index: {0}]
  %s6 = inlined_call_operand.vmem [shape: bf16[9,16,16], index: 6, kind: output, shape index: {1}]
  %7 = xla_tuple %s5, %s6
  %s8 = sld [smem:[#allocation0]]
  $region45: #{dprnn_block_forward.7} parent=0
    _
  %s10 = ssub.s32 1, %s8
  %s11 = scalar_select 0, %s10, %s8
  // Predicated region
  $region2: #{dprnn_block_forward.7} parent=0 // pred_check
    _
  $region3: #{dprnn_block_forward.7} parent=0 // pred_check_branch
    %13 = sbr.rel (0) target = $region5
  $region4: #{dprnn_block_forward.7} parent=0 // pred_region
    _
  $region5: #{dprnn_block_forward.7} parent=0 // pred_fallthru
    _
  // Predicated region
  $region6: #{dprnn_block_forward.7} parent=0 // pred_check
    _
  $region7: #{dprnn_block_forward.7} parent=0 // pred_check_branch
    %15 = sbr.rel (0) target = $region9
  $region8: #{dprnn_block_forward.7} parent=0 // pred_region
    _
  $region9: #{dprnn_block_forward.7} parent=0 // pred_fallthru
    _
  // Predicated region
  $region10: #{dprnn_block_forward.7} parent=0 // pred_check
    _
  $region11: #{dprnn_block_forward.7} parent=0 // pred_check_branch
    %17 = sbr.rel (0) target = $region13
  $region12: #{dprnn_block_forward.7} parent=0 // pred_region
    _
  $region13: #{dprnn_block_forward.7} parent=0 // pred_fallthru
    _
  // Predicated region
  $region14: #{dprnn_block_forward.7} parent=0 // pred_check
    _
  $region15: #{dprnn_block_forward.7} parent=0 // pred_check_branch
    %19 = sbr.rel (0) target = $region17
  $region16: #{dprnn_block_forward.7} parent=0 // pred_region
    _
  $region17: #{dprnn_block_forward.7} parent=0 // pred_fallthru
    _
  // Predicated region
  $region18: #{dprnn_block_forward.7} parent=0 // pred_check
    _
  $region19: #{dprnn_block_forward.7} parent=0 // pred_check_branch
    %21 = sbr.rel (0) target = $region21
  $region20: #{dprnn_block_forward.7} parent=0 // pred_region
    _
  $region21: #{dprnn_block_forward.7} parent=0 // pred_fallthru
    _
  %v23 = vld [vmem:[%s0] sm:$0xf]
  %v24 = vld [vmem:[%s0 + $0x4] sm:$0xf]
  %v25 = vld [vmem:[%s0 + $0x8] sm:$0xf]
  %v26 = vld [vmem:[%s0 + $0xc] sm:$0xf]
  %v27 = vld [vmem:[%s0 + $0x10] sm:$0xf]
  %v28 = vld [vmem:[%s0 + $0x14] sm:$0xf]
  %v29 = vld [vmem:[%s0 + $0x18] sm:$0xf]
  %v30 = vld [vmem:[%s0 + $0x1c] sm:$0xf]
  %v31 = vld [vmem:[%s0 + $0x20] sm:$0xf]
  %v32 = vld [vmem:[%s0 + $0x24] sm:$0xf]
  %v33 = vld [vmem:[%s0 + $0x28] sm:$0xf]
  %v34 = vld [vmem:[%s0 + $0x2c] sm:$0xf]
  %v35 = vld [vmem:[%s0 + $0x30] sm:$0xf]
  %v36 = vld [vmem:[%s0 + $0x34] sm:$0xf]
  %v37 = vld [vmem:[%s0 + $0x38] sm:$0xf]
  %v38 = vld [vmem:[%s0 + $0x3c] sm:$0xf]
  %55 = vst [vmem:[#allocation1] ss:$2 sm:$0xff] %v23
  %s56 = scalar_lea.vmem [#allocation1], 1
  %57 = vst [vmem:[%s56] ss:$2 sm:$0xff] %v24
  %s58 = scalar_lea.vmem [#allocation1], 16
  %59 = vst [vmem:[%s58] ss:$2 sm:$0xff] %v25
  %s60 = scalar_lea.vmem [#allocation1], 17
  %61 = vst [vmem:[%s60] ss:$2 sm:$0xff] %v26
  %s62 = scalar_lea.vmem [#allocation1], 32
  %63 = vst [vmem:[%s62] ss:$2 sm:$0xff] %v27
  %s64 = scalar_lea.vmem [#allocation1], 33
  %65 = vst [vmem:[%s64] ss:$2 sm:$0xff] %v28
  %s66 = scalar_lea.vmem [#allocation1], 48
  %67 = vst [vmem:[%s66] ss:$2 sm:$0xff] %v29
  %s68 = scalar_lea.vmem [#allocation1], 49
  %69 = vst [vmem:[%s68] ss:$2 sm:$0xff] %v30
  %v70 = vld.sshfl [vmem:[#allocation1] sm:$0xff pattern:$0x75316420]
  %v71 = vld.sshfl [vmem:[#allocation1 + $0x10] sm:$0xff pattern:$0x75316420]
  %v72 = vld.sshfl [vmem:[#allocation1 + $0x20] sm:$0xff pattern:$0x75316420]
  %v73 = vld.sshfl [vmem:[#allocation1 + $0x30] sm:$0xff pattern:$0x75316420]
  %74 = vst [vmem:[#allocation1] ss:$2 sm:$0xff] %v31
  %75 = vst [vmem:[%s56] ss:$2 sm:$0xff] %v32
  %76 = vst [vmem:[%s58] ss:$2 sm:$0xff] %v33
  %77 = vst [vmem:[%s60] ss:$2 sm:$0xff] %v34
  %78 = vst [vmem:[%s62] ss:$2 sm:$0xff] %v35
  %79 = vst [vmem:[%s64] ss:$2 sm:$0xff] %v36
  %80 = vst [vmem:[%s66] ss:$2 sm:$0xff] %v37
  %81 = vst [vmem:[%s68] ss:$2 sm:$0xff] %v38
  %v82 = vld.sshfl [vmem:[#allocation1] sm:$0xff pattern:$0x75316420]
  %v83 = vld.sshfl [vmem:[#allocation1 + $0x10] sm:$0xff pattern:$0x75316420]
  %v84 = vld.sshfl [vmem:[#allocation1 + $0x20] sm:$0xff pattern:$0x75316420]
  %v85 = vld.sshfl [vmem:[#allocation1 + $0x30] sm:$0xff pattern:$0x75316420]
  %94 = vxpose.xlu0.b32.start [1/16] %v70, 128
  %95 = vxpose.xlu0.b32.cont [2/16] %v71, 128
  %96 = vxpose.xlu0.b32.cont [3/16] %v72, 128
  %97 = vxpose.xlu0.b32.cont [4/16] %v73, 128
  %98 = vxpose.xlu0.b32.cont [5/16] %v82, 128
  %99 = vxpose.xlu0.b32.cont [6/16] %v83, 128
  %100 = vxpose.xlu0.b32.cont [7/16] %v84, 128
  %101 = vxpose.xlu0.b32.cont [8/16] %v85, 128
  %102 = vxpose.xlu0.b32.cont [9/16] 0.0, 128
  %103 = vxpose.xlu0.b32.cont [10/16] 0.0, 128
  %104 = vxpose.xlu0.b32.cont [11/16] 0.0, 128
  %105 = vxpose.xlu0.b32.cont [12/16] 0.0, 128
  %106 = vxpose.xlu0.b32.cont [13/16] 0.0, 128
  %107 = vxpose.xlu0.b32.cont [14/16] 0.0, 128
  %108 = vxpose.xlu0.b32.cont [15/16] 0.0, 128
  %109 = vxpose.xlu0.b32.end [16/16] 0.0, 128
  %v110 = vpop.trf.xlu0
  %v111 = vpop.trf.xlu0
  %v112 = vpop.trf.xlu0
  %v113 = vpop.trf.xlu0
  %v114 = vpop.trf.xlu0
  %v115 = vpop.trf.xlu0
  %v116 = vpop.trf.xlu0
  %v117 = vpop.trf.xlu0
  %v118 = vpop.trf.xlu0
  %v119 = vpop.trf.xlu0
  %v120 = vpop.trf.xlu0
  %v121 = vpop.trf.xlu0
  %v122 = vpop.trf.xlu0
  %v123 = vpop.trf.xlu0
  %v124 = vpop.trf.xlu0
  %v125 = vpop.trf.xlu0
  %v128 = vrot.slane %v110, 1
  %v129 = vrot.slane %v110, 2
  %v130 = vrot.slane %v110, 3
  %v131 = vrot.slane %v110, 4
  %v132 = vrot.slane %v110, 5
  %v133 = vrot.slane %v110, 6
  %v134 = vrot.slane %v110, 7
  %v135 = vrot.slane %v111, 1
  %v136 = vrot.slane %v111, 2
  %v137 = vrot.slane %v111, 3
  %v138 = vrot.slane %v111, 4
  %v139 = vrot.slane %v111, 5
  %v140 = vrot.slane %v111, 6
  %v141 = vrot.slane %v111, 7
  %vm156 = vcmask 24576
  %157 = vst.msk [vmem:[#allocation2] sm:$0x1] %vm156, %v110
  %158 = vst.msk [vmem:[#allocation2 + $0x10] sm:$0x1] %vm156, %v128
  %159 = vst.msk [vmem:[#allocation2 + $0x20] sm:$0x1] %vm156, %v129
  %160 = vst.msk [vmem:[#allocation2 + $0x30] sm:$0x1] %vm156, %v130
  %161 = vst.msk [vmem:[#allocation2 + $0x40] sm:$0x1] %vm156, %v131
  %162 = vst.msk [vmem:[#allocation2 + $0x50] sm:$0x1] %vm156, %v132
  %163 = vst.msk [vmem:[#allocation2 + $0x60] sm:$0x1] %vm156, %v133
  %164 = vst.msk [vmem:[#allocation2 + $0x70] sm:$0x1] %vm156, %v134
  %165 = vst.msk [vmem:[#allocation2 + $0x80] sm:$0x1] %vm156, %v111
  %166 = vst.msk [vmem:[#allocation2 + $0x90] sm:$0x1] %vm156, %v135
  %167 = vst.msk [vmem:[#allocation2 + $0xa0] sm:$0x1] %vm156, %v136
  %168 = vst.msk [vmem:[#allocation2 + $0xb0] sm:$0x1] %vm156, %v137
  %169 = vst.msk [vmem:[#allocation2 + $0xc0] sm:$0x1] %vm156, %v138
  %170 = vst.msk [vmem:[#allocation2 + $0xd0] sm:$0x1] %vm156, %v139
  %171 = vst.msk [vmem:[#allocation2 + $0xe0] sm:$0x1] %vm156, %v140
  %172 = vst.msk [vmem:[#allocation2 + $0xf0] sm:$0x1] %vm156, %v141
  %v173 = vperm.slane %v110, 0
  %v174 = vperm.slane %v128, 0
  %v175 = vperm.slane %v129, 0
  %v176 = vperm.slane %v130, 0
  %v177 = vperm.slane %v131, 0
  %v178 = vperm.slane %v132, 0
  %v179 = vperm.slane %v133, 0
  %v180 = vperm.slane %v134, 0
  %v181 = vperm.slane %v111, 0
  %v182 = vperm.slane %v135, 0
  %v183 = vperm.slane %v136, 0
  %v184 = vperm.slane %v137, 0
  %v185 = vperm.slane %v138, 0
  %v186 = vperm.slane %v139, 0
  %v187 = vperm.slane %v140, 0
  %v188 = vperm.slane %v141, 0
  %189 = vrot.lane.b32.xlu0 %v173, 124
  %v190 = vpop.permute.xlu0 %189
  %191 = vrot.lane.b32.xlu0 %v174, 124
  %v192 = vpop.permute.xlu0 %191
  %193 = vrot.lane.b32.xlu0 %v175, 124
  %v194 = vpop.permute.xlu0 %193
  %195 = vrot.lane.b32.xlu0 %v176, 124
  %v196 = vpop.permute.xlu0 %195
  %197 = vrot.lane.b32.xlu0 %v177, 124
  %v198 = vpop.permute.xlu0 %197
  %199 = vrot.lane.b32.xlu0 %v178, 124
  %v200 = vpop.permute.xlu0 %199
  %201 = vrot.lane.b32.xlu0 %v179, 124
  %v202 = vpop.permute.xlu0 %201
  %203 = vrot.lane.b32.xlu0 %v180, 124
  %v204 = vpop.permute.xlu0 %203
  %205 = vrot.lane.b32.xlu0 %v181, 124
  %v206 = vpop.permute.xlu0 %205
  %207 = vrot.lane.b32.xlu0 %v182, 124
  %v208 = vpop.permute.xlu0 %207
  %209 = vrot.lane.b32.xlu0 %v183, 124
  %v210 = vpop.permute.xlu0 %209
  %211 = vrot.lane.b32.xlu0 %v184, 124
  %v212 = vpop.permute.xlu0 %211
  %213 = vrot.lane.b32.xlu0 %v185, 124
  %v214 = vpop.permute.xlu0 %213
  %215 = vrot.lane.b32.xlu0 %v186, 124
  %v216 = vpop.permute.xlu0 %215
  %217 = vrot.lane.b32.xlu0 %v187, 124
  %v218 = vpop.permute.xlu0 %217
  %219 = vrot.lane.b32.xlu0 %v188, 124
  %v220 = vpop.permute.xlu0 %219
  %237 = vst.msk [vmem:[#allocation2 + $0x1] sm:$0x1] %vm156, %v190
  %238 = vst.msk [vmem:[#allocation2 + $0x11] sm:$0x1] %vm156, %v192
  %239 = vst.msk [vmem:[#allocation2 + $0x21] sm:$0x1] %vm156, %v194
  %240 = vst.msk [vmem:[#allocation2 + $0x31] sm:$0x1] %vm156, %v196
  %241 = vst.msk [vmem:[#allocation2 + $0x41] sm:$0x1] %vm156, %v198
  %242 = vst.msk [vmem:[#allocation2 + $0x51] sm:$0x1] %vm156, %v200
  %243 = vst.msk [vmem:[#allocation2 + $0x61] sm:$0x1] %vm156, %v202
  %244 = vst.msk [vmem:[#allocation2 + $0x71] sm:$0x1] %vm156, %v204
  %245 = vst.msk [vmem:[#allocation2 + $0x81] sm:$0x1] %vm156, %v206
  %246 = vst.msk [vmem:[#allocation2 + $0x91] sm:$0x1] %vm156, %v208
  %247 = vst.msk [vmem:[#allocation2 + $0xa1] sm:$0x1] %vm156, %v210
  %248 = vst.msk [vmem:[#allocation2 + $0xb1] sm:$0x1] %vm156, %v212
  %249 = vst.msk [vmem:[#allocation2 + $0xc1] sm:$0x1] %vm156, %v214
  %250 = vst.msk [vmem:[#allocation2 + $0xd1] sm:$0x1] %vm156, %v216
  %251 = vst.msk [vmem:[#allocation2 + $0xe1] sm:$0x1] %vm156, %v218
  %252 = vst.msk [vmem:[#allocation2 + $0xf1] sm:$0x1] %vm156, %v220
  %253 = vrot.lane.b32.xlu0 %v173, 120
  %v254 = vpop.permute.xlu0 %253
  %255 = vrot.lane.b32.xlu0 %v174, 120
  %v256 = vpop.permute.xlu0 %255
  %257 = vrot.lane.b32.xlu0 %v175, 120
  %v258 = vpop.permute.xlu0 %257
  %259 = vrot.lane.b32.xlu0 %v176, 120
  %v260 = vpop.permute.xlu0 %259
  %261 = vrot.lane.b32.xlu0 %v177, 120
  %v262 = vpop.permute.xlu0 %261
  %263 = vrot.lane.b32.xlu0 %v178, 120
  %v264 = vpop.permute.xlu0 %263
  %265 = vrot.lane.b32.xlu0 %v179, 120
  %v266 = vpop.permute.xlu0 %265
  %267 = vrot.lane.b32.xlu0 %v180, 120
  %v268 = vpop.permute.xlu0 %267
  %269 = vrot.lane.b32.xlu0 %v181, 120
  %v270 = vpop.permute.xlu0 %269
  %271 = vrot.lane.b32.xlu0 %v182, 120
  %v272 = vpop.permute.xlu0 %271
  %273 = vrot.lane.b32.xlu0 %v183, 120
  %v274 = vpop.permute.xlu0 %273
  %275 = vrot.lane.b32.xlu0 %v184, 120
  %v276 = vpop.permute.xlu0 %275
  %277 = vrot.lane.b32.xlu0 %v185, 120
  %v278 = vpop.permute.xlu0 %277
  %279 = vrot.lane.b32.xlu0 %v186, 120
  %v280 = vpop.permute.xlu0 %279
  %281 = vrot.lane.b32.xlu0 %v187, 120
  %v282 = vpop.permute.xlu0 %281
  %283 = vrot.lane.b32.xlu0 %v188, 120
  %v284 = vpop.permute.xlu0 %283
  %301 = vst.msk [vmem:[#allocation2 + $0x2] sm:$0x1] %vm156, %v254
  %302 = vst.msk [vmem:[#allocation2 + $0x12] sm:$0x1] %vm156, %v256
  %303 = vst.msk [vmem:[#allocation2 + $0x22] sm:$0x1] %vm156, %v258
  %304 = vst.msk [vmem:[#allocation2 + $0x32] sm:$0x1] %vm156, %v260
  %305 = vst.msk [vmem:[#allocation2 + $0x42] sm:$0x1] %vm156, %v262
  %306 = vst.msk [vmem:[#allocation2 + $0x52] sm:$0x1] %vm156, %v264
  %307 = vst.msk [vmem:[#allocation2 + $0x62] sm:$0x1] %vm156, %v266
  %308 = vst.msk [vmem:[#allocation2 + $0x72] sm:$0x1] %vm156, %v268
  %309 = vst.msk [vmem:[#allocation2 + $0x82] sm:$0x1] %vm156, %v270
  %310 = vst.msk [vmem:[#allocation2 + $0x92] sm:$0x1] %vm156, %v272
  %311 = vst.msk [vmem:[#allocation2 + $0xa2] sm:$0x1] %vm156, %v274
  %312 = vst.msk [vmem:[#allocation2 + $0xb2] sm:$0x1] %vm156, %v276
  %313 = vst.msk [vmem:[#allocation2 + $0xc2] sm:$0x1] %vm156, %v278
  %314 = vst.msk [vmem:[#allocation2 + $0xd2] sm:$0x1] %vm156, %v280
  %315 = vst.msk [vmem:[#allocation2 + $0xe2] sm:$0x1] %vm156, %v282
  %316 = vst.msk [vmem:[#allocation2 + $0xf2] sm:$0x1] %vm156, %v284
  %317 = vrot.lane.b32.xlu0 %v173, 116
  %v318 = vpop.permute.xlu0 %317
  %319 = vrot.lane.b32.xlu0 %v174, 116
  %v320 = vpop.permute.xlu0 %319
  %321 = vrot.lane.b32.xlu0 %v175, 116
  %v322 = vpop.permute.xlu0 %321
  %323 = vrot.lane.b32.xlu0 %v176, 116
  %v324 = vpop.permute.xlu0 %323
  %325 = vrot.lane.b32.xlu0 %v177, 116
  %v326 = vpop.permute.xlu0 %325
  %327 = vrot.lane.b32.xlu0 %v178, 116
  %v328 = vpop.permute.xlu0 %327
  %329 = vrot.lane.b32.xlu0 %v179, 116
  %v330 = vpop.permute.xlu0 %329
  %331 = vrot.lane.b32.xlu0 %v180, 116
  %v332 = vpop.permute.xlu0 %331
  %333 = vrot.lane.b32.xlu0 %v181, 116
  %v334 = vpop.permute.xlu0 %333
  %335 = vrot.lane.b32.xlu0 %v182, 116
  %v336 = vpop.permute.xlu0 %335
  %337 = vrot.lane.b32.xlu0 %v183, 116
  %v338 = vpop.permute.xlu0 %337
  %339 = vrot.lane.b32.xlu0 %v184, 116
  %v340 = vpop.permute.xlu0 %339
  %341 = vrot.lane.b32.xlu0 %v185, 116
  %v342 = vpop.permute.xlu0 %341
  %343 = vrot.lane.b32.xlu0 %v186, 116
  %v344 = vpop.permute.xlu0 %343
  %345 = vrot.lane.b32.xlu0 %v187, 116
  %v346 = vpop.permute.xlu0 %345
  %347 = vrot.lane.b32.xlu0 %v188, 116
  %v348 = vpop.permute.xlu0 %347
  %365 = vst.msk [vmem:[#allocation2 + $0x3] sm:$0x1] %vm156, %v318
  %366 = vst.msk [vmem:[#allocation2 + $0x13] sm:$0x1] %vm156, %v320
  %367 = vst.msk [vmem:[#allocation2 + $0x23] sm:$0x1] %vm156, %v322
  %368 = vst.msk [vmem:[#allocation2 + $0x33] sm:$0x1] %vm156, %v324
  %369 = vst.msk [vmem:[#allocation2 + $0x43] sm:$0x1] %vm156, %v326
  %370 = vst.msk [vmem:[#allocation2 + $0x53] sm:$0x1] %vm156, %v328
  %371 = vst.msk [vmem:[#allocation2 + $0x63] sm:$0x1] %vm156, %v330
  %372 = vst.msk [vmem:[#allocation2 + $0x73] sm:$0x1] %vm156, %v332
  %373 = vst.msk [vmem:[#allocation2 + $0x83] sm:$0x1] %vm156, %v334
  %374 = vst.msk [vmem:[#allocation2 + $0x93] sm:$0x1] %vm156, %v336
  %375 = vst.msk [vmem:[#allocation2 + $0xa3] sm:$0x1] %vm156, %v338
  %376 = vst.msk [vmem:[#allocation2 + $0xb3] sm:$0x1] %vm156, %v340
  %377 = vst.msk [vmem:[#allocation2 + $0xc3] sm:$0x1] %vm156, %v342
  %378 = vst.msk [vmem:[#allocation2 + $0xd3] sm:$0x1] %vm156, %v344
  %379 = vst.msk [vmem:[#allocation2 + $0xe3] sm:$0x1] %vm156, %v346
  %380 = vst.msk [vmem:[#allocation2 + $0xf3] sm:$0x1] %vm156, %v348
  %381 = vrot.lane.b32.xlu0 %v173, 112
  %v382 = vpop.permute.xlu0 %381
  %383 = vrot.lane.b32.xlu0 %v174, 112
  %v384 = vpop.permute.xlu0 %383
  %385 = vrot.lane.b32.xlu0 %v175, 112
  %v386 = vpop.permute.xlu0 %385
  %387 = vrot.lane.b32.xlu0 %v176, 112
  %v388 = vpop.permute.xlu0 %387
  %389 = vrot.lane.b32.xlu0 %v177, 112
  %v390 = vpop.permute.xlu0 %389
  %391 = vrot.lane.b32.xlu0 %v178, 112
  %v392 = vpop.permute.xlu0 %391
  %393 = vrot.lane.b32.xlu0 %v179, 112
  %v394 = vpop.permute.xlu0 %393
  %395 = vrot.lane.b32.xlu0 %v180, 112
  %v396 = vpop.permute.xlu0 %395
  %397 = vrot.lane.b32.xlu0 %v181, 112
  %v398 = vpop.permute.xlu0 %397
  %399 = vrot.lane.b32.xlu0 %v182, 112
  %v400 = vpop.permute.xlu0 %399
  %401 = vrot.lane.b32.xlu0 %v183, 112
  %v402 = vpop.permute.xlu0 %401
  %403 = vrot.lane.b32.xlu0 %v184, 112
  %v404 = vpop.permute.xlu0 %403
  %405 = vrot.lane.b32.xlu0 %v185, 112
  %v406 = vpop.permute.xlu0 %405
  %407 = vrot.lane.b32.xlu0 %v186, 112
  %v408 = vpop.permute.xlu0 %407
  %409 = vrot.lane.b32.xlu0 %v187, 112
  %v410 = vpop.permute.xlu0 %409
  %411 = vrot.lane.b32.xlu0 %v188, 112
  %v412 = vpop.permute.xlu0 %411
  %429 = vst.msk [vmem:[#allocation2 + $0x4] sm:$0x1] %vm156, %v382
  %430 = vst.msk [vmem:[#allocation2 + $0x14] sm:$0x1] %vm156, %v384
  %431 = vst.msk [vmem:[#allocation2 + $0x24] sm:$0x1] %vm156, %v386
  %432 = vst.msk [vmem:[#allocation2 + $0x34] sm:$0x1] %vm156, %v388
  %433 = vst.msk [vmem:[#allocation2 + $0x44] sm:$0x1] %vm156, %v390
  %434 = vst.msk [vmem:[#allocation2 + $0x54] sm:$0x1] %vm156, %v392
  %435 = vst.msk [vmem:[#allocation2 + $0x64] sm:$0x1] %vm156, %v394
  %436 = vst.msk [vmem:[#allocation2 + $0x74] sm:$0x1] %vm156, %v396
  %437 = vst.msk [vmem:[#allocation2 + $0x84] sm:$0x1] %vm156, %v398
  %438 = vst.msk [vmem:[#allocation2 + $0x94] sm:$0x1] %vm156, %v400
  %439 = vst.msk [vmem:[#allocation2 + $0xa4] sm:$0x1] %vm156, %v402
  %440 = vst.msk [vmem:[#allocation2 + $0xb4] sm:$0x1] %vm156, %v404
  %441 = vst.msk [vmem:[#allocation2 + $0xc4] sm:$0x1] %vm156, %v406
  %442 = vst.msk [vmem:[#allocation2 + $0xd4] sm:$0x1] %vm156, %v408
  %443 = vst.msk [vmem:[#allocation2 + $0xe4] sm:$0x1] %vm156, %v410
  %444 = vst.msk [vmem:[#allocation2 + $0xf4] sm:$0x1] %vm156, %v412
  %445 = vrot.lane.b32.xlu0 %v173, 108
  %v446 = vpop.permute.xlu0 %445
  %447 = vrot.lane.b32.xlu0 %v174, 108
  %v448 = vpop.permute.xlu0 %447
  %449 = vrot.lane.b32.xlu0 %v175, 108
  %v450 = vpop.permute.xlu0 %449
  %451 = vrot.lane.b32.xlu0 %v176, 108
  %v452 = vpop.permute.xlu0 %451
  %453 = vrot.lane.b32.xlu0 %v177, 108
  %v454 = vpop.permute.xlu0 %453
  %455 = vrot.lane.b32.xlu0 %v178, 108
  %v456 = vpop.permute.xlu0 %455
  %457 = vrot.lane.b32.xlu0 %v179, 108
  %v458 = vpop.permute.xlu0 %457
  %459 = vrot.lane.b32.xlu0 %v180, 108
  %v460 = vpop.permute.xlu0 %459
  %461 = vrot.lane.b32.xlu0 %v181, 108
  %v462 = vpop.permute.xlu0 %461
  %463 = vrot.lane.b32.xlu0 %v182, 108
  %v464 = vpop.permute.xlu0 %463
  %465 = vrot.lane.b32.xlu0 %v183, 108
  %v466 = vpop.permute.xlu0 %465
  %467 = vrot.lane.b32.xlu0 %v184, 108
  %v468 = vpop.permute.xlu0 %467
  %469 = vrot.lane.b32.xlu0 %v185, 108
  %v470 = vpop.permute.xlu0 %469
  %471 = vrot.lane.b32.xlu0 %v186, 108
  %v472 = vpop.permute.xlu0 %471
  %473 = vrot.lane.b32.xlu0 %v187, 108
  %v474 = vpop.permute.xlu0 %473
  %475 = vrot.lane.b32.xlu0 %v188, 108
  %v476 = vpop.permute.xlu0 %475
  %493 = vst.msk [vmem:[#allocation2 + $0x5] sm:$0x1] %vm156, %v446
  %494 = vst.msk [vmem:[#allocation2 + $0x15] sm:$0x1] %vm156, %v448
  %495 = vst.msk [vmem:[#allocation2 + $0x25] sm:$0x1] %vm156, %v450
  %496 = vst.msk [vmem:[#allocation2 + $0x35] sm:$0x1] %vm156, %v452
  %497 = vst.msk [vmem:[#allocation2 + $0x45] sm:$0x1] %vm156, %v454
  %498 = vst.msk [vmem:[#allocation2 + $0x55] sm:$0x1] %vm156, %v456
  %499 = vst.msk [vmem:[#allocation2 + $0x65] sm:$0x1] %vm156, %v458
  %500 = vst.msk [vmem:[#allocation2 + $0x75] sm:$0x1] %vm156, %v460
  %501 = vst.msk [vmem:[#allocation2 + $0x85] sm:$0x1] %vm156, %v462
  %502 = vst.msk [vmem:[#allocation2 + $0x95] sm:$0x1] %vm156, %v464
  %503 = vst.msk [vmem:[#allocation2 + $0xa5] sm:$0x1] %vm156, %v466
  %504 = vst.msk [vmem:[#allocation2 + $0xb5] sm:$0x1] %vm156, %v468
  %505 = vst.msk [vmem:[#allocation2 + $0xc5] sm:$0x1] %vm156, %v470
  %506 = vst.msk [vmem:[#allocation2 + $0xd5] sm:$0x1] %vm156, %v472
  %507 = vst.msk [vmem:[#allocation2 + $0xe5] sm:$0x1] %vm156, %v474
  %508 = vst.msk [vmem:[#allocation2 + $0xf5] sm:$0x1] %vm156, %v476
  %509 = vrot.lane.b32.xlu0 %v173, 104
  %v510 = vpop.permute.xlu0 %509
  %511 = vrot.lane.b32.xlu0 %v174, 104
  %v512 = vpop.permute.xlu0 %511
  %513 = vrot.lane.b32.xlu0 %v175, 104
  %v514 = vpop.permute.xlu0 %513
  %515 = vrot.lane.b32.xlu0 %v176, 104
  %v516 = vpop.permute.xlu0 %515
  %517 = vrot.lane.b32.xlu0 %v177, 104
  %v518 = vpop.permute.xlu0 %517
  %519 = vrot.lane.b32.xlu0 %v178, 104
  %v520 = vpop.permute.xlu0 %519
  %521 = vrot.lane.b32.xlu0 %v179, 104
  %v522 = vpop.permute.xlu0 %521
  %523 = vrot.lane.b32.xlu0 %v180, 104
  %v524 = vpop.permute.xlu0 %523
  %525 = vrot.lane.b32.xlu0 %v181, 104
  %v526 = vpop.permute.xlu0 %525
  %527 = vrot.lane.b32.xlu0 %v182, 104
  %v528 = vpop.permute.xlu0 %527
  %529 = vrot.lane.b32.xlu0 %v183, 104
  %v530 = vpop.permute.xlu0 %529
  %531 = vrot.lane.b32.xlu0 %v184, 104
  %v532 = vpop.permute.xlu0 %531
  %533 = vrot.lane.b32.xlu0 %v185, 104
  %v534 = vpop.permute.xlu0 %533
  %535 = vrot.lane.b32.xlu0 %v186, 104
  %v536 = vpop.permute.xlu0 %535
  %537 = vrot.lane.b32.xlu0 %v187, 104
  %v538 = vpop.permute.xlu0 %537
  %539 = vrot.lane.b32.xlu0 %v188, 104
  %v540 = vpop.permute.xlu0 %539
  %557 = vst.msk [vmem:[#allocation2 + $0x6] sm:$0x1] %vm156, %v510
  %558 = vst.msk [vmem:[#allocation2 + $0x16] sm:$0x1] %vm156, %v512
  %559 = vst.msk [vmem:[#allocation2 + $0x26] sm:$0x1] %vm156, %v514
  %560 = vst.msk [vmem:[#allocation2 + $0x36] sm:$0x1] %vm156, %v516
  %561 = vst.msk [vmem:[#allocation2 + $0x46] sm:$0x1] %vm156, %v518
  %562 = vst.msk [vmem:[#allocation2 + $0x56] sm:$0x1] %vm156, %v520
  %563 = vst.msk [vmem:[#allocation2 + $0x66] sm:$0x1] %vm156, %v522
  %564 = vst.msk [vmem:[#allocation2 + $0x76] sm:$0x1] %vm156, %v524
  %565 = vst.msk [vmem:[#allocation2 + $0x86] sm:$0x1] %vm156, %v526
  %566 = vst.msk [vmem:[#allocation2 + $0x96] sm:$0x1] %vm156, %v528
  %567 = vst.msk [vmem:[#allocation2 + $0xa6] sm:$0x1] %vm156, %v530
  %568 = vst.msk [vmem:[#allocation2 + $0xb6] sm:$0x1] %vm156, %v532
  %569 = vst.msk [vmem:[#allocation2 + $0xc6] sm:$0x1] %vm156, %v534
  %570 = vst.msk [vmem:[#allocation2 + $0xd6] sm:$0x1] %vm156, %v536
  %571 = vst.msk [vmem:[#allocation2 + $0xe6] sm:$0x1] %vm156, %v538
  %572 = vst.msk [vmem:[#allocation2 + $0xf6] sm:$0x1] %vm156, %v540
  %573 = vrot.lane.b32.xlu0 %v173, 100
  %v574 = vpop.permute.xlu0 %573
  %575 = vrot.lane.b32.xlu0 %v174, 100
  %v576 = vpop.permute.xlu0 %575
  %577 = vrot.lane.b32.xlu0 %v175, 100
  %v578 = vpop.permute.xlu0 %577
  %579 = vrot.lane.b32.xlu0 %v176, 100
  %v580 = vpop.permute.xlu0 %579
  %581 = vrot.lane.b32.xlu0 %v177, 100
  %v582 = vpop.permute.xlu0 %581
  %583 = vrot.lane.b32.xlu0 %v178, 100
  %v584 = vpop.permute.xlu0 %583
  %585 = vrot.lane.b32.xlu0 %v179, 100
  %v586 = vpop.permute.xlu0 %585
  %587 = vrot.lane.b32.xlu0 %v180, 100
  %v588 = vpop.permute.xlu0 %587
  %589 = vrot.lane.b32.xlu0 %v181, 100
  %v590 = vpop.permute.xlu0 %589
  %591 = vrot.lane.b32.xlu0 %v182, 100
  %v592 = vpop.permute.xlu0 %591
  %593 = vrot.lane.b32.xlu0 %v183, 100
  %v594 = vpop.permute.xlu0 %593
  %595 = vrot.lane.b32.xlu0 %v184, 100
  %v596 = vpop.permute.xlu0 %595
  %597 = vrot.lane.b32.xlu0 %v185, 100
  %v598 = vpop.permute.xlu0 %597
  %599 = vrot.lane.b32.xlu0 %v186, 100
  %v600 = vpop.permute.xlu0 %599
  %601 = vrot.lane.b32.xlu0 %v187, 100
  %v602 = vpop.permute.xlu0 %601
  %603 = vrot.lane.b32.xlu0 %v188, 100
  %v604 = vpop.permute.xlu0 %603
  %621 = vst.msk [vmem:[#allocation2 + $0x7] sm:$0x1] %vm156, %v574
  %622 = vst.msk [vmem:[#allocation2 + $0x17] sm:$0x1] %vm156, %v576
  %623 = vst.msk [vmem:[#allocation2 + $0x27] sm:$0x1] %vm156, %v578
  %624 = vst.msk [vmem:[#allocation2 + $0x37] sm:$0x1] %vm156, %v580
  %625 = vst.msk [vmem:[#allocation2 + $0x47] sm:$0x1] %vm156, %v582
  %626 = vst.msk [vmem:[#allocation2 + $0x57] sm:$0x1] %vm156, %v584
  %627 = vst.msk [vmem:[#allocation2 + $0x67] sm:$0x1] %vm156, %v586
  %628 = vst.msk [vmem:[#allocation2 + $0x77] sm:$0x1] %vm156, %v588
  %629 = vst.msk [vmem:[#allocation2 + $0x87] sm:$0x1] %vm156, %v590
  %630 = vst.msk [vmem:[#allocation2 + $0x97] sm:$0x1] %vm156, %v592
  %631 = vst.msk [vmem:[#allocation2 + $0xa7] sm:$0x1] %vm156, %v594
  %632 = vst.msk [vmem:[#allocation2 + $0xb7] sm:$0x1] %vm156, %v596
  %633 = vst.msk [vmem:[#allocation2 + $0xc7] sm:$0x1] %vm156, %v598
  %634 = vst.msk [vmem:[#allocation2 + $0xd7] sm:$0x1] %vm156, %v600
  %635 = vst.msk [vmem:[#allocation2 + $0xe7] sm:$0x1] %vm156, %v602
  %636 = vst.msk [vmem:[#allocation2 + $0xf7] sm:$0x1] %vm156, %v604
  %637 = vrot.lane.b32.xlu0 %v173, 96
  %v638 = vpop.permute.xlu0 %637
  %639 = vrot.lane.b32.xlu0 %v174, 96
  %v640 = vpop.permute.xlu0 %639
  %641 = vrot.lane.b32.xlu0 %v175, 96
  %v642 = vpop.permute.xlu0 %641
  %643 = vrot.lane.b32.xlu0 %v176, 96
  %v644 = vpop.permute.xlu0 %643
  %645 = vrot.lane.b32.xlu0 %v177, 96
  %v646 = vpop.permute.xlu0 %645
  %647 = vrot.lane.b32.xlu0 %v178, 96
  %v648 = vpop.permute.xlu0 %647
  %649 = vrot.lane.b32.xlu0 %v179, 96
  %v650 = vpop.permute.xlu0 %649
  %651 = vrot.lane.b32.xlu0 %v180, 96
  %v652 = vpop.permute.xlu0 %651
  %653 = vrot.lane.b32.xlu0 %v181, 96
  %v654 = vpop.permute.xlu0 %653
  %655 = vrot.lane.b32.xlu0 %v182, 96
  %v656 = vpop.permute.xlu0 %655
  %657 = vrot.lane.b32.xlu0 %v183, 96
  %v658 = vpop.permute.xlu0 %657
  %659 = vrot.lane.b32.xlu0 %v184, 96
  %v660 = vpop.permute.xlu0 %659
  %661 = vrot.lane.b32.xlu0 %v185, 96
  %v662 = vpop.permute.xlu0 %661
  %663 = vrot.lane.b32.xlu0 %v186, 96
  %v664 = vpop.permute.xlu0 %663
  %665 = vrot.lane.b32.xlu0 %v187, 96
  %v666 = vpop.permute.xlu0 %665
  %667 = vrot.lane.b32.xlu0 %v188, 96
  %v668 = vpop.permute.xlu0 %667
  %685 = vst.msk [vmem:[#allocation2 + $0x8] sm:$0x1] %vm156, %v638
  %686 = vst.msk [vmem:[#allocation2 + $0x18] sm:$0x1] %vm156, %v640
  %687 = vst.msk [vmem:[#allocation2 + $0x28] sm:$0x1] %vm156, %v642
  %688 = vst.msk [vmem:[#allocation2 + $0x38] sm:$0x1] %vm156, %v644
  %689 = vst.msk [vmem:[#allocation2 + $0x48] sm:$0x1] %vm156, %v646
  %690 = vst.msk [vmem:[#allocation2 + $0x58] sm:$0x1] %vm156, %v648
  %691 = vst.msk [vmem:[#allocation2 + $0x68] sm:$0x1] %vm156, %v650
  %692 = vst.msk [vmem:[#allocation2 + $0x78] sm:$0x1] %vm156, %v652
  %693 = vst.msk [vmem:[#allocation2 + $0x88] sm:$0x1] %vm156, %v654
  %694 = vst.msk [vmem:[#allocation2 + $0x98] sm:$0x1] %vm156, %v656
  %695 = vst.msk [vmem:[#allocation2 + $0xa8] sm:$0x1] %vm156, %v658
  %696 = vst.msk [vmem:[#allocation2 + $0xb8] sm:$0x1] %vm156, %v660
  %697 = vst.msk [vmem:[#allocation2 + $0xc8] sm:$0x1] %vm156, %v662
  %698 = vst.msk [vmem:[#allocation2 + $0xd8] sm:$0x1] %vm156, %v664
  %699 = vst.msk [vmem:[#allocation2 + $0xe8] sm:$0x1] %vm156, %v666
  %700 = vst.msk [vmem:[#allocation2 + $0xf8] sm:$0x1] %vm156, %v668
  %701 = vrot.lane.b32.xlu0 %v173, 92
  %v702 = vpop.permute.xlu0 %701
  %703 = vrot.lane.b32.xlu0 %v174, 92
  %v704 = vpop.permute.xlu0 %703
  %705 = vrot.lane.b32.xlu0 %v175, 92
  %v706 = vpop.permute.xlu0 %705
  %707 = vrot.lane.b32.xlu0 %v176, 92
  %v708 = vpop.permute.xlu0 %707
  %709 = vrot.lane.b32.xlu0 %v177, 92
  %v710 = vpop.permute.xlu0 %709
  %711 = vrot.lane.b32.xlu0 %v178, 92
  %v712 = vpop.permute.xlu0 %711
  %713 = vrot.lane.b32.xlu0 %v179, 92
  %v714 = vpop.permute.xlu0 %713
  %715 = vrot.lane.b32.xlu0 %v180, 92
  %v716 = vpop.permute.xlu0 %715
  %717 = vrot.lane.b32.xlu0 %v181, 92
  %v718 = vpop.permute.xlu0 %717
  %719 = vrot.lane.b32.xlu0 %v182, 92
  %v720 = vpop.permute.xlu0 %719
  %721 = vrot.lane.b32.xlu0 %v183, 92
  %v722 = vpop.permute.xlu0 %721
  %723 = vrot.lane.b32.xlu0 %v184, 92
  %v724 = vpop.permute.xlu0 %723
  %725 = vrot.lane.b32.xlu0 %v185, 92
  %v726 = vpop.permute.xlu0 %725
  %727 = vrot.lane.b32.xlu0 %v186, 92
  %v728 = vpop.permute.xlu0 %727
  %729 = vrot.lane.b32.xlu0 %v187, 92
  %v730 = vpop.permute.xlu0 %729
  %731 = vrot.lane.b32.xlu0 %v188, 92
  %v732 = vpop.permute.xlu0 %731
  %749 = vst.msk [vmem:[#allocation2 + $0x9] sm:$0x1] %vm156, %v702
  %750 = vst.msk [vmem:[#allocation2 + $0x19] sm:$0x1] %vm156, %v704
  %751 = vst.msk [vmem:[#allocation2 + $0x29] sm:$0x1] %vm156, %v706
  %752 = vst.msk [vmem:[#allocation2 + $0x39] sm:$0x1] %vm156, %v708
  %753 = vst.msk [vmem:[#allocation2 + $0x49] sm:$0x1] %vm156, %v710
  %754 = vst.msk [vmem:[#allocation2 + $0x59] sm:$0x1] %vm156, %v712
  %755 = vst.msk [vmem:[#allocation2 + $0x69] sm:$0x1] %vm156, %v714
  %756 = vst.msk [vmem:[#allocation2 + $0x79] sm:$0x1] %vm156, %v716
  %757 = vst.msk [vmem:[#allocation2 + $0x89] sm:$0x1] %vm156, %v718
  %758 = vst.msk [vmem:[#allocation2 + $0x99] sm:$0x1] %vm156, %v720
  %759 = vst.msk [vmem:[#allocation2 + $0xa9] sm:$0x1] %vm156, %v722
  %760 = vst.msk [vmem:[#allocation2 + $0xb9] sm:$0x1] %vm156, %v724
  %761 = vst.msk [vmem:[#allocation2 + $0xc9] sm:$0x1] %vm156, %v726
  %762 = vst.msk [vmem:[#allocation2 + $0xd9] sm:$0x1] %vm156, %v728
  %763 = vst.msk [vmem:[#allocation2 + $0xe9] sm:$0x1] %vm156, %v730
  %764 = vst.msk [vmem:[#allocation2 + $0xf9] sm:$0x1] %vm156, %v732
  %765 = vrot.lane.b32.xlu0 %v173, 88
  %v766 = vpop.permute.xlu0 %765
  %767 = vrot.lane.b32.xlu0 %v174, 88
  %v768 = vpop.permute.xlu0 %767
  %769 = vrot.lane.b32.xlu0 %v175, 88
  %v770 = vpop.permute.xlu0 %769
  %771 = vrot.lane.b32.xlu0 %v176, 88
  %v772 = vpop.permute.xlu0 %771
  %773 = vrot.lane.b32.xlu0 %v177, 88
  %v774 = vpop.permute.xlu0 %773
  %775 = vrot.lane.b32.xlu0 %v178, 88
  %v776 = vpop.permute.xlu0 %775
  %777 = vrot.lane.b32.xlu0 %v179, 88
  %v778 = vpop.permute.xlu0 %777
  %779 = vrot.lane.b32.xlu0 %v180, 88
  %v780 = vpop.permute.xlu0 %779
  %781 = vrot.lane.b32.xlu0 %v181, 88
  %v782 = vpop.permute.xlu0 %781
  %783 = vrot.lane.b32.xlu0 %v182, 88
  %v784 = vpop.permute.xlu0 %783
  %785 = vrot.lane.b32.xlu0 %v183, 88
  %v786 = vpop.permute.xlu0 %785
  %787 = vrot.lane.b32.xlu0 %v184, 88
  %v788 = vpop.permute.xlu0 %787
  %789 = vrot.lane.b32.xlu0 %v185, 88
  %v790 = vpop.permute.xlu0 %789
  %791 = vrot.lane.b32.xlu0 %v186, 88
  %v792 = vpop.permute.xlu0 %791
  %793 = vrot.lane.b32.xlu0 %v187, 88
  %v794 = vpop.permute.xlu0 %793
  %795 = vrot.lane.b32.xlu0 %v188, 88
  %v796 = vpop.permute.xlu0 %795
  %813 = vst.msk [vmem:[#allocation2 + $0xa] sm:$0x1] %vm156, %v766
  %814 = vst.msk [vmem:[#allocation2 + $0x1a] sm:$0x1] %vm156, %v768
  %815 = vst.msk [vmem:[#allocation2 + $0x2a] sm:$0x1] %vm156, %v770
  %816 = vst.msk [vmem:[#allocation2 + $0x3a] sm:$0x1] %vm156, %v772
  %817 = vst.msk [vmem:[#allocation2 + $0x4a] sm:$0x1] %vm156, %v774
  %818 = vst.msk [vmem:[#allocation2 + $0x5a] sm:$0x1] %vm156, %v776
  %819 = vst.msk [vmem:[#allocation2 + $0x6a] sm:$0x1] %vm156, %v778
  %820 = vst.msk [vmem:[#allocation2 + $0x7a] sm:$0x1] %vm156, %v780
  %821 = vst.msk [vmem:[#allocation2 + $0x8a] sm:$0x1] %vm156, %v782
  %822 = vst.msk [vmem:[#allocation2 + $0x9a] sm:$0x1] %vm156, %v784
  %823 = vst.msk [vmem:[#allocation2 + $0xaa] sm:$0x1] %vm156, %v786
  %824 = vst.msk [vmem:[#allocation2 + $0xba] sm:$0x1] %vm156, %v788
  %825 = vst.msk [vmem:[#allocation2 + $0xca] sm:$0x1] %vm156, %v790
  %826 = vst.msk [vmem:[#allocation2 + $0xda] sm:$0x1] %vm156, %v792
  %827 = vst.msk [vmem:[#allocation2 + $0xea] sm:$0x1] %vm156, %v794
  %828 = vst.msk [vmem:[#allocation2 + $0xfa] sm:$0x1] %vm156, %v796
  %829 = vrot.lane.b32.xlu0 %v173, 84
  %v830 = vpop.permute.xlu0 %829
  %831 = vrot.lane.b32.xlu0 %v174, 84
  %v832 = vpop.permute.xlu0 %831
  %833 = vrot.lane.b32.xlu0 %v175, 84
  %v834 = vpop.permute.xlu0 %833
  %835 = vrot.lane.b32.xlu0 %v176, 84
  %v836 = vpop.permute.xlu0 %835
  %837 = vrot.lane.b32.xlu0 %v177, 84
  %v838 = vpop.permute.xlu0 %837
  %839 = vrot.lane.b32.xlu0 %v178, 84
  %v840 = vpop.permute.xlu0 %839
  %841 = vrot.lane.b32.xlu0 %v179, 84
  %v842 = vpop.permute.xlu0 %841
  %843 = vrot.lane.b32.xlu0 %v180, 84
  %v844 = vpop.permute.xlu0 %843
  %845 = vrot.lane.b32.xlu0 %v181, 84
  %v846 = vpop.permute.xlu0 %845
  %847 = vrot.lane.b32.xlu0 %v182, 84
  %v848 = vpop.permute.xlu0 %847
  %849 = vrot.lane.b32.xlu0 %v183, 84
  %v850 = vpop.permute.xlu0 %849
  %851 = vrot.lane.b32.xlu0 %v184, 84
  %v852 = vpop.permute.xlu0 %851
  %853 = vrot.lane.b32.xlu0 %v185, 84
  %v854 = vpop.permute.xlu0 %853
  %855 = vrot.lane.b32.xlu0 %v186, 84
  %v856 = vpop.permute.xlu0 %855
  %857 = vrot.lane.b32.xlu0 %v187, 84
  %v858 = vpop.permute.xlu0 %857
  %859 = vrot.lane.b32.xlu0 %v188, 84
  %v860 = vpop.permute.xlu0 %859
  %877 = vst.msk [vmem:[#allocation2 + $0xb] sm:$0x1] %vm156, %v830
  %878 = vst.msk [vmem:[#allocation2 + $0x1b] sm:$0x1] %vm156, %v832
  %879 = vst.msk [vmem:[#allocation2 + $0x2b] sm:$0x1] %vm156, %v834
  %880 = vst.msk [vmem:[#allocation2 + $0x3b] sm:$0x1] %vm156, %v836
  %881 = vst.msk [vmem:[#allocation2 + $0x4b] sm:$0x1] %vm156, %v838
  %882 = vst.msk [vmem:[#allocation2 + $0x5b] sm:$0x1] %vm156, %v840
  %883 = vst.msk [vmem:[#allocation2 + $0x6b] sm:$0x1] %vm156, %v842
  %884 = vst.msk [vmem:[#allocation2 + $0x7b] sm:$0x1] %vm156, %v844
  %885 = vst.msk [vmem:[#allocation2 + $0x8b] sm:$0x1] %vm156, %v846
  %886 = vst.msk [vmem:[#allocation2 + $0x9b] sm:$0x1] %vm156, %v848
  %887 = vst.msk [vmem:[#allocation2 + $0xab] sm:$0x1] %vm156, %v850
  %888 = vst.msk [vmem:[#allocation2 + $0xbb] sm:$0x1] %vm156, %v852
  %889 = vst.msk [vmem:[#allocation2 + $0xcb] sm:$0x1] %vm156, %v854
  %890 = vst.msk [vmem:[#allocation2 + $0xdb] sm:$0x1] %vm156, %v856
  %891 = vst.msk [vmem:[#allocation2 + $0xeb] sm:$0x1] %vm156, %v858
  %892 = vst.msk [vmem:[#allocation2 + $0xfb] sm:$0x1] %vm156, %v860
  %893 = vrot.lane.b32.xlu0 %v173, 80
  %v894 = vpop.permute.xlu0 %893
  %895 = vrot.lane.b32.xlu0 %v174, 80
  %v896 = vpop.permute.xlu0 %895
  %897 = vrot.lane.b32.xlu0 %v175, 80
  %v898 = vpop.permute.xlu0 %897
  %899 = vrot.lane.b32.xlu0 %v176, 80
  %v900 = vpop.permute.xlu0 %899
  %901 = vrot.lane.b32.xlu0 %v177, 80
  %v902 = vpop.permute.xlu0 %901
  %903 = vrot.lane.b32.xlu0 %v178, 80
  %v904 = vpop.permute.xlu0 %903
  %905 = vrot.lane.b32.xlu0 %v179, 80
  %v906 = vpop.permute.xlu0 %905
  %907 = vrot.lane.b32.xlu0 %v180, 80
  %v908 = vpop.permute.xlu0 %907
  %909 = vrot.lane.b32.xlu0 %v181, 80
  %v910 = vpop.permute.xlu0 %909
  %911 = vrot.lane.b32.xlu0 %v182, 80
  %v912 = vpop.permute.xlu0 %911
  %913 = vrot.lane.b32.xlu0 %v183, 80
  %v914 = vpop.permute.xlu0 %913
  %915 = vrot.lane.b32.xlu0 %v184, 80
  %v916 = vpop.permute.xlu0 %915
  %917 = vrot.lane.b32.xlu0 %v185, 80
  %v918 = vpop.permute.xlu0 %917
  %919 = vrot.lane.b32.xlu0 %v186, 80
  %v920 = vpop.permute.xlu0 %919
  %921 = vrot.lane.b32.xlu0 %v187, 80
  %v922 = vpop.permute.xlu0 %921
  %923 = vrot.lane.b32.xlu0 %v188, 80
  %v924 = vpop.permute.xlu0 %923
  %941 = vst.msk [vmem:[#allocation2 + $0xc] sm:$0x1] %vm156, %v894
  %942 = vst.msk [vmem:[#allocation2 + $0x1c] sm:$0x1] %vm156, %v896
  %943 = vst.msk [vmem:[#allocation2 + $0x2c] sm:$0x1] %vm156, %v898
  %944 = vst.msk [vmem:[#allocation2 + $0x3c] sm:$0x1] %vm156, %v900
  %945 = vst.msk [vmem:[#allocation2 + $0x4c] sm:$0x1] %vm156, %v902
  %946 = vst.msk [vmem:[#allocation2 + $0x5c] sm:$0x1] %vm156, %v904
  %947 = vst.msk [vmem:[#allocation2 + $0x6c] sm:$0x1] %vm156, %v906
  %948 = vst.msk [vmem:[#allocation2 + $0x7c] sm:$0x1] %vm156, %v908
  %949 = vst.msk [vmem:[#allocation2 + $0x8c] sm:$0x1] %vm156, %v910
  %950 = vst.msk [vmem:[#allocation2 + $0x9c] sm:$0x1] %vm156, %v912
  %951 = vst.msk [vmem:[#allocation2 + $0xac] sm:$0x1] %vm156, %v914
  %952 = vst.msk [vmem:[#allocation2 + $0xbc] sm:$0x1] %vm156, %v916
  %953 = vst.msk [vmem:[#allocation2 + $0xcc] sm:$0x1] %vm156, %v918
  %954 = vst.msk [vmem:[#allocation2 + $0xdc] sm:$0x1] %vm156, %v920
  %955 = vst.msk [vmem:[#allocation2 + $0xec] sm:$0x1] %vm156, %v922
  %956 = vst.msk [vmem:[#allocation2 + $0xfc] sm:$0x1] %vm156, %v924
  %957 = vrot.lane.b32.xlu0 %v173, 76
  %v958 = vpop.permute.xlu0 %957
  %959 = vrot.lane.b32.xlu0 %v174, 76
  %v960 = vpop.permute.xlu0 %959
  %961 = vrot.lane.b32.xlu0 %v175, 76
  %v962 = vpop.permute.xlu0 %961
  %963 = vrot.lane.b32.xlu0 %v176, 76
  %v964 = vpop.permute.xlu0 %963
  %965 = vrot.lane.b32.xlu0 %v177, 76
  %v966 = vpop.permute.xlu0 %965
  %967 = vrot.lane.b32.xlu0 %v178, 76
  %v968 = vpop.permute.xlu0 %967
  %969 = vrot.lane.b32.xlu0 %v179, 76
  %v970 = vpop.permute.xlu0 %969
  %971 = vrot.lane.b32.xlu0 %v180, 76
  %v972 = vpop.permute.xlu0 %971
  %973 = vrot.lane.b32.xlu0 %v181, 76
  %v974 = vpop.permute.xlu0 %973
  %975 = vrot.lane.b32.xlu0 %v182, 76
  %v976 = vpop.permute.xlu0 %975
  %977 = vrot.lane.b32.xlu0 %v183, 76
  %v978 = vpop.permute.xlu0 %977
  %979 = vrot.lane.b32.xlu0 %v184, 76
  %v980 = vpop.permute.xlu0 %979
  %981 = vrot.lane.b32.xlu0 %v185, 76
  %v982 = vpop.permute.xlu0 %981
  %983 = vrot.lane.b32.xlu0 %v186, 76
  %v984 = vpop.permute.xlu0 %983
  %985 = vrot.lane.b32.xlu0 %v187, 76
  %v986 = vpop.permute.xlu0 %985
  %987 = vrot.lane.b32.xlu0 %v188, 76
  %v988 = vpop.permute.xlu0 %987
  %1005 = vst.msk [vmem:[#allocation2 + $0xd] sm:$0x1] %vm156, %v958
  %1006 = vst.msk [vmem:[#allocation2 + $0x1d] sm:$0x1] %vm156, %v960
  %1007 = vst.msk [vmem:[#allocation2 + $0x2d] sm:$0x1] %vm156, %v962
  %1008 = vst.msk [vmem:[#allocation2 + $0x3d] sm:$0x1] %vm156, %v964
  %1009 = vst.msk [vmem:[#allocation2 + $0x4d] sm:$0x1] %vm156, %v966
  %1010 = vst.msk [vmem:[#allocation2 + $0x5d] sm:$0x1] %vm156, %v968
  %1011 = vst.msk [vmem:[#allocation2 + $0x6d] sm:$0x1] %vm156, %v970
  %1012 = vst.msk [vmem:[#allocation2 + $0x7d] sm:$0x1] %vm156, %v972
  %1013 = vst.msk [vmem:[#allocation2 + $0x8d] sm:$0x1] %vm156, %v974
  %1014 = vst.msk [vmem:[#allocation2 + $0x9d] sm:$0x1] %vm156, %v976
  %1015 = vst.msk [vmem:[#allocation2 + $0xad] sm:$0x1] %vm156, %v978
  %1016 = vst.msk [vmem:[#allocation2 + $0xbd] sm:$0x1] %vm156, %v980
  %1017 = vst.msk [vmem:[#allocation2 + $0xcd] sm:$0x1] %vm156, %v982
  %1018 = vst.msk [vmem:[#allocation2 + $0xdd] sm:$0x1] %vm156, %v984
  %1019 = vst.msk [vmem:[#allocation2 + $0xed] sm:$0x1] %vm156, %v986
  %1020 = vst.msk [vmem:[#allocation2 + $0xfd] sm:$0x1] %vm156, %v988
  %1021 = vrot.lane.b32.xlu0 %v173, 72
  %v1022 = vpop.permute.xlu0 %1021
  %1023 = vrot.lane.b32.xlu0 %v174, 72
  %v1024 = vpop.permute.xlu0 %1023
  %1025 = vrot.lane.b32.xlu0 %v175, 72
  %v1026 = vpop.permute.xlu0 %1025
  %1027 = vrot.lane.b32.xlu0 %v176, 72
  %v1028 = vpop.permute.xlu0 %1027
  %1029 = vrot.lane.b32.xlu0 %v177, 72
  %v1030 = vpop.permute.xlu0 %1029
  %1031 = vrot.lane.b32.xlu0 %v178, 72
  %v1032 = vpop.permute.xlu0 %1031
  %1033 = vrot.lane.b32.xlu0 %v179, 72
  %v1034 = vpop.permute.xlu0 %1033
  %1035 = vrot.lane.b32.xlu0 %v180, 72
  %v1036 = vpop.permute.xlu0 %1035
  %1037 = vrot.lane.b32.xlu0 %v181, 72
  %v1038 = vpop.permute.xlu0 %1037
  %1039 = vrot.lane.b32.xlu0 %v182, 72
  %v1040 = vpop.permute.xlu0 %1039
  %1041 = vrot.lane.b32.xlu0 %v183, 72
  %v1042 = vpop.permute.xlu0 %1041
  %1043 = vrot.lane.b32.xlu0 %v184, 72
  %v1044 = vpop.permute.xlu0 %1043
  %1045 = vrot.lane.b32.xlu0 %v185, 72
  %v1046 = vpop.permute.xlu0 %1045
  %1047 = vrot.lane.b32.xlu0 %v186, 72
  %v1048 = vpop.permute.xlu0 %1047
  %1049 = vrot.lane.b32.xlu0 %v187, 72
  %v1050 = vpop.permute.xlu0 %1049
  %1051 = vrot.lane.b32.xlu0 %v188, 72
  %v1052 = vpop.permute.xlu0 %1051
  %1069 = vst.msk [vmem:[#allocation2 + $0xe] sm:$0x1] %vm156, %v1022
  %1070 = vst.msk [vmem:[#allocation2 + $0x1e] sm:$0x1] %vm156, %v1024
  %1071 = vst.msk [vmem:[#allocation2 + $0x2e] sm:$0x1] %vm156, %v1026
  %1072 = vst.msk [vmem:[#allocation2 + $0x3e] sm:$0x1] %vm156, %v1028
  %1073 = vst.msk [vmem:[#allocation2 + $0x4e] sm:$0x1] %vm156, %v1030
  %1074 = vst.msk [vmem:[#allocation2 + $0x5e] sm:$0x1] %vm156, %v1032
  %1075 = vst.msk [vmem:[#allocation2 + $0x6e] sm:$0x1] %vm156, %v1034
  %1076 = vst.msk [vmem:[#allocation2 + $0x7e] sm:$0x1] %vm156, %v1036
  %1077 = vst.msk [vmem:[#allocation2 + $0x8e] sm:$0x1] %vm156, %v1038
  %1078 = vst.msk [vmem:[#allocation2 + $0x9e] sm:$0x1] %vm156, %v1040
  %1079 = vst.msk [vmem:[#allocation2 + $0xae] sm:$0x1] %vm156, %v1042
  %1080 = vst.msk [vmem:[#allocation2 + $0xbe] sm:$0x1] %vm156, %v1044
  %1081 = vst.msk [vmem:[#allocation2 + $0xce] sm:$0x1] %vm156, %v1046
  %1082 = vst.msk [vmem:[#allocation2 + $0xde] sm:$0x1] %vm156, %v1048
  %1083 = vst.msk [vmem:[#allocation2 + $0xee] sm:$0x1] %vm156, %v1050
  %1084 = vst.msk [vmem:[#allocation2 + $0xfe] sm:$0x1] %vm156, %v1052
  %1085 = vrot.lane.b32.xlu0 %v173, 68
  %v1086 = vpop.permute.xlu0 %1085
  %1087 = vrot.lane.b32.xlu0 %v174, 68
  %v1088 = vpop.permute.xlu0 %1087
  %1089 = vrot.lane.b32.xlu0 %v175, 68
  %v1090 = vpop.permute.xlu0 %1089
  %1091 = vrot.lane.b32.xlu0 %v176, 68
  %v1092 = vpop.permute.xlu0 %1091
  %1093 = vrot.lane.b32.xlu0 %v177, 68
  %v1094 = vpop.permute.xlu0 %1093
  %1095 = vrot.lane.b32.xlu0 %v178, 68
  %v1096 = vpop.permute.xlu0 %1095
  %1097 = vrot.lane.b32.xlu0 %v179, 68
  %v1098 = vpop.permute.xlu0 %1097
  %1099 = vrot.lane.b32.xlu0 %v180, 68
  %v1100 = vpop.permute.xlu0 %1099
  %1101 = vrot.lane.b32.xlu0 %v181, 68
  %v1102 = vpop.permute.xlu0 %1101
  %1103 = vrot.lane.b32.xlu0 %v182, 68
  %v1104 = vpop.permute.xlu0 %1103
  %1105 = vrot.lane.b32.xlu0 %v183, 68
  %v1106 = vpop.permute.xlu0 %1105
  %1107 = vrot.lane.b32.xlu0 %v184, 68
  %v1108 = vpop.permute.xlu0 %1107
  %1109 = vrot.lane.b32.xlu0 %v185, 68
  %v1110 = vpop.permute.xlu0 %1109
  %1111 = vrot.lane.b32.xlu0 %v186, 68
  %v1112 = vpop.permute.xlu0 %1111
  %1113 = vrot.lane.b32.xlu0 %v187, 68
  %v1114 = vpop.permute.xlu0 %1113
  %1115 = vrot.lane.b32.xlu0 %v188, 68
  %v1116 = vpop.permute.xlu0 %1115
  %1133 = vst.msk [vmem:[#allocation2 + $0xf] sm:$0x1] %vm156, %v1086
  %1134 = vst.msk [vmem:[#allocation2 + $0x1f] sm:$0x1] %vm156, %v1088
  %1135 = vst.msk [vmem:[#allocation2 + $0x2f] sm:$0x1] %vm156, %v1090
  %1136 = vst.msk [vmem:[#allocation2 + $0x3f] sm:$0x1] %vm156, %v1092
  %1137 = vst.msk [vmem:[#allocation2 + $0x4f] sm:$0x1] %vm156, %v1094
  %1138 = vst.msk [vmem:[#allocation2 + $0x5f] sm:$0x1] %vm156, %v1096
  %1139 = vst.msk [vmem:[#allocation2 + $0x6f] sm:$0x1] %vm156, %v1098
  %1140 = vst.msk [vmem:[#allocation2 + $0x7f] sm:$0x1] %vm156, %v1100
  %1141 = vst.msk [vmem:[#allocation2 + $0x8f] sm:$0x1] %vm156, %v1102
  %1142 = vst.msk [vmem:[#allocation2 + $0x9f] sm:$0x1] %vm156, %v1104
  %1143 = vst.msk [vmem:[#allocation2 + $0xaf] sm:$0x1] %vm156, %v1106
  %1144 = vst.msk [vmem:[#allocation2 + $0xbf] sm:$0x1] %vm156, %v1108
  %1145 = vst.msk [vmem:[#allocation2 + $0xcf] sm:$0x1] %vm156, %v1110
  %1146 = vst.msk [vmem:[#allocation2 + $0xdf] sm:$0x1] %vm156, %v1112
  %1147 = vst.msk [vmem:[#allocation2 + $0xef] sm:$0x1] %vm156, %v1114
  %1148 = vst.msk [vmem:[#allocation2 + $0xff] sm:$0x1] %vm156, %v1116
  %v1149 = vld [vmem:[#allocation2] sm:$0xff]
  %v1150 = vld [vmem:[#allocation2 + $0x8] sm:$0xff]
  %v1151 = vld [vmem:[#allocation2 + $0x10] sm:$0xff]
  %v1152 = vld [vmem:[#allocation2 + $0x18] sm:$0xff]
  %v1153 = vld [vmem:[#allocation2 + $0x20] sm:$0xff]
  %v1154 = vld [vmem:[#allocation2 + $0x28] sm:$0xff]
  %v1155 = vld [vmem:[#allocation2 + $0x30] sm:$0xff]
  %v1156 = vld [vmem:[#allocation2 + $0x38] sm:$0xff]
  %v1157 = vld [vmem:[#allocation2 + $0x40] sm:$0xff]
  %v1158 = vld [vmem:[#allocation2 + $0x48] sm:$0xff]
  %v1159 = vld [vmem:[#allocation2 + $0x50] sm:$0xff]
  %v1160 = vld [vmem:[#allocation2 + $0x58] sm:$0xff]
  %v1161 = vld [vmem:[#allocation2 + $0x60] sm:$0xff]
  %v1162 = vld [vmem:[#allocation2 + $0x68] sm:$0xff]
  %v1163 = vld [vmem:[#allocation2 + $0x70] sm:$0xff]
  %v1164 = vld [vmem:[#allocation2 + $0x78] sm:$0xff]
  %v1165 = vld [vmem:[#allocation2 + $0x80] sm:$0xff]
  %v1166 = vld [vmem:[#allocation2 + $0x88] sm:$0xff]
  %v1167 = vld [vmem:[#allocation2 + $0x90] sm:$0xff]
  %v1168 = vld [vmem:[#allocation2 + $0x98] sm:$0xff]
  %v1169 = vld [vmem:[#allocation2 + $0xa0] sm:$0xff]
  %v1170 = vld [vmem:[#allocation2 + $0xa8] sm:$0xff]
  %v1171 = vld [vmem:[#allocation2 + $0xb0] sm:$0xff]
  %v1172 = vld [vmem:[#allocation2 + $0xb8] sm:$0xff]
  %v1173 = vld [vmem:[#allocation2 + $0xc0] sm:$0xff]
  %v1174 = vld [vmem:[#allocation2 + $0xc8] sm:$0xff]
  %v1175 = vld [vmem:[#allocation2 + $0xd0] sm:$0xff]
  %v1176 = vld [vmem:[#allocation2 + $0xd8] sm:$0xff]
  %v1177 = vld [vmem:[#allocation2 + $0xe0] sm:$0xff]
  %v1178 = vld [vmem:[#allocation2 + $0xe8] sm:$0xff]
  %v1179 = vld [vmem:[#allocation2 + $0xf0] sm:$0xff]
  %v1180 = vld [vmem:[#allocation2 + $0xf8] sm:$0xff]
  %1199 = vrot.lane.b32.xlu0 %v1151, 4
  %v1200 = vpop.permute.xlu0 %1199
  %1201 = vrot.lane.b32.xlu0 %v1152, 4
  %v1202 = vpop.permute.xlu0 %1201
  %1203 = vrot.lane.b32.xlu0 %v1153, 4
  %v1204 = vpop.permute.xlu0 %1203
  %1205 = vrot.lane.b32.xlu0 %v1154, 4
  %v1206 = vpop.permute.xlu0 %1205
  %1207 = vrot.lane.b32.xlu0 %v1155, 4
  %v1208 = vpop.permute.xlu0 %1207
  %1209 = vrot.lane.b32.xlu0 %v1156, 4
  %v1210 = vpop.permute.xlu0 %1209
  %1211 = vrot.lane.b32.xlu0 %v1157, 4
  %v1212 = vpop.permute.xlu0 %1211
  %1213 = vrot.lane.b32.xlu0 %v1158, 4
  %v1214 = vpop.permute.xlu0 %1213
  %1215 = vrot.lane.b32.xlu0 %v1159, 4
  %v1216 = vpop.permute.xlu0 %1215
  %1217 = vrot.lane.b32.xlu0 %v1160, 4
  %v1218 = vpop.permute.xlu0 %1217
  %1219 = vrot.lane.b32.xlu0 %v1161, 4
  %v1220 = vpop.permute.xlu0 %1219
  %1221 = vrot.lane.b32.xlu0 %v1162, 4
  %v1222 = vpop.permute.xlu0 %1221
  %1223 = vrot.lane.b32.xlu0 %v1163, 4
  %v1224 = vpop.permute.xlu0 %1223
  %1225 = vrot.lane.b32.xlu0 %v1164, 4
  %v1226 = vpop.permute.xlu0 %1225
  %1227 = vrot.lane.b32.xlu0 %v1165, 4
  %v1228 = vpop.permute.xlu0 %1227
  %1229 = vrot.lane.b32.xlu0 %v1166, 4
  %v1230 = vpop.permute.xlu0 %1229
  %1231 = vrot.lane.b32.xlu0 %v1167, 4
  %v1232 = vpop.permute.xlu0 %1231
  %1233 = vrot.lane.b32.xlu0 %v1168, 4
  %v1234 = vpop.permute.xlu0 %1233
  %1255 = vrot.lane.b32.xlu0 %v1153, 8
  %v1256 = vpop.permute.xlu0 %1255
  %1257 = vrot.lane.b32.xlu0 %v1154, 8
  %v1258 = vpop.permute.xlu0 %1257
  %1259 = vrot.lane.b32.xlu0 %v1155, 8
  %v1260 = vpop.permute.xlu0 %1259
  %1261 = vrot.lane.b32.xlu0 %v1156, 8
  %v1262 = vpop.permute.xlu0 %1261
  %1263 = vrot.lane.b32.xlu0 %v1157, 8
  %v1264 = vpop.permute.xlu0 %1263
  %1265 = vrot.lane.b32.xlu0 %v1158, 8
  %v1266 = vpop.permute.xlu0 %1265
  %1267 = vrot.lane.b32.xlu0 %v1159, 8
  %v1268 = vpop.permute.xlu0 %1267
  %1269 = vrot.lane.b32.xlu0 %v1160, 8
  %v1270 = vpop.permute.xlu0 %1269
  %1271 = vrot.lane.b32.xlu0 %v1161, 8
  %v1272 = vpop.permute.xlu0 %1271
  %1273 = vrot.lane.b32.xlu0 %v1162, 8
  %v1274 = vpop.permute.xlu0 %1273
  %1275 = vrot.lane.b32.xlu0 %v1163, 8
  %v1276 = vpop.permute.xlu0 %1275
  %1277 = vrot.lane.b32.xlu0 %v1164, 8
  %v1278 = vpop.permute.xlu0 %1277
  %1279 = vrot.lane.b32.xlu0 %v1165, 8
  %v1280 = vpop.permute.xlu0 %1279
  %1281 = vrot.lane.b32.xlu0 %v1166, 8
  %v1282 = vpop.permute.xlu0 %1281
  %1283 = vrot.lane.b32.xlu0 %v1167, 8
  %v1284 = vpop.permute.xlu0 %1283
  %1285 = vrot.lane.b32.xlu0 %v1168, 8
  %v1286 = vpop.permute.xlu0 %1285
  %1287 = vrot.lane.b32.xlu0 %v1169, 8
  %v1288 = vpop.permute.xlu0 %1287
  %1289 = vrot.lane.b32.xlu0 %v1170, 8
  %v1290 = vpop.permute.xlu0 %1289
  %1311 = vrot.lane.b32.xlu0 %v1155, 12
  %v1312 = vpop.permute.xlu0 %1311
  %1313 = vrot.lane.b32.xlu0 %v1156, 12
  %v1314 = vpop.permute.xlu0 %1313
  %1315 = vrot.lane.b32.xlu0 %v1157, 12
  %v1316 = vpop.permute.xlu0 %1315
  %1317 = vrot.lane.b32.xlu0 %v1158, 12
  %v1318 = vpop.permute.xlu0 %1317
  %1319 = vrot.lane.b32.xlu0 %v1159, 12
  %v1320 = vpop.permute.xlu0 %1319
  %1321 = vrot.lane.b32.xlu0 %v1160, 12
  %v1322 = vpop.permute.xlu0 %1321
  %1323 = vrot.lane.b32.xlu0 %v1161, 12
  %v1324 = vpop.permute.xlu0 %1323
  %1325 = vrot.lane.b32.xlu0 %v1162, 12
  %v1326 = vpop.permute.xlu0 %1325
  %1327 = vrot.lane.b32.xlu0 %v1163, 12
  %v1328 = vpop.permute.xlu0 %1327
  %1329 = vrot.lane.b32.xlu0 %v1164, 12
  %v1330 = vpop.permute.xlu0 %1329
  %1331 = vrot.lane.b32.xlu0 %v1165, 12
  %v1332 = vpop.permute.xlu0 %1331
  %1333 = vrot.lane.b32.xlu0 %v1166, 12
  %v1334 = vpop.permute.xlu0 %1333
  %1335 = vrot.lane.b32.xlu0 %v1167, 12
  %v1336 = vpop.permute.xlu0 %1335
  %1337 = vrot.lane.b32.xlu0 %v1168, 12
  %v1338 = vpop.permute.xlu0 %1337
  %1339 = vrot.lane.b32.xlu0 %v1169, 12
  %v1340 = vpop.permute.xlu0 %1339
  %1341 = vrot.lane.b32.xlu0 %v1170, 12
  %v1342 = vpop.permute.xlu0 %1341
  %1343 = vrot.lane.b32.xlu0 %v1171, 12
  %v1344 = vpop.permute.xlu0 %1343
  %1345 = vrot.lane.b32.xlu0 %v1172, 12
  %v1346 = vpop.permute.xlu0 %1345
  %1367 = vrot.lane.b32.xlu0 %v1157, 16
  %v1368 = vpop.permute.xlu0 %1367
  %1369 = vrot.lane.b32.xlu0 %v1158, 16
  %v1370 = vpop.permute.xlu0 %1369
  %1371 = vrot.lane.b32.xlu0 %v1159, 16
  %v1372 = vpop.permute.xlu0 %1371
  %1373 = vrot.lane.b32.xlu0 %v1160, 16
  %v1374 = vpop.permute.xlu0 %1373
  %1375 = vrot.lane.b32.xlu0 %v1161, 16
  %v1376 = vpop.permute.xlu0 %1375
  %1377 = vrot.lane.b32.xlu0 %v1162, 16
  %v1378 = vpop.permute.xlu0 %1377
  %1379 = vrot.lane.b32.xlu0 %v1163, 16
  %v1380 = vpop.permute.xlu0 %1379
  %1381 = vrot.lane.b32.xlu0 %v1164, 16
  %v1382 = vpop.permute.xlu0 %1381
  %1383 = vrot.lane.b32.xlu0 %v1165, 16
  %v1384 = vpop.permute.xlu0 %1383
  %1385 = vrot.lane.b32.xlu0 %v1166, 16
  %v1386 = vpop.permute.xlu0 %1385
  %1387 = vrot.lane.b32.xlu0 %v1167, 16
  %v1388 = vpop.permute.xlu0 %1387
  %1389 = vrot.lane.b32.xlu0 %v1168, 16
  %v1390 = vpop.permute.xlu0 %1389
  %1391 = vrot.lane.b32.xlu0 %v1169, 16
  %v1392 = vpop.permute.xlu0 %1391
  %1393 = vrot.lane.b32.xlu0 %v1170, 16
  %v1394 = vpop.permute.xlu0 %1393
  %1395 = vrot.lane.b32.xlu0 %v1171, 16
  %v1396 = vpop.permute.xlu0 %1395
  %1397 = vrot.lane.b32.xlu0 %v1172, 16
  %v1398 = vpop.permute.xlu0 %1397
  %1399 = vrot.lane.b32.xlu0 %v1173, 16
  %v1400 = vpop.permute.xlu0 %1399
  %1401 = vrot.lane.b32.xlu0 %v1174, 16
  %v1402 = vpop.permute.xlu0 %1401
  %1423 = vrot.lane.b32.xlu0 %v1159, 20
  %v1424 = vpop.permute.xlu0 %1423
  %1425 = vrot.lane.b32.xlu0 %v1160, 20
  %v1426 = vpop.permute.xlu0 %1425
  %1427 = vrot.lane.b32.xlu0 %v1161, 20
  %v1428 = vpop.permute.xlu0 %1427
  %1429 = vrot.lane.b32.xlu0 %v1162, 20
  %v1430 = vpop.permute.xlu0 %1429
  %1431 = vrot.lane.b32.xlu0 %v1163, 20
  %v1432 = vpop.permute.xlu0 %1431
  %1433 = vrot.lane.b32.xlu0 %v1164, 20
  %v1434 = vpop.permute.xlu0 %1433
  %1435 = vrot.lane.b32.xlu0 %v1165, 20
  %v1436 = vpop.permute.xlu0 %1435
  %1437 = vrot.lane.b32.xlu0 %v1166, 20
  %v1438 = vpop.permute.xlu0 %1437
  %1439 = vrot.lane.b32.xlu0 %v1167, 20
  %v1440 = vpop.permute.xlu0 %1439
  %1441 = vrot.lane.b32.xlu0 %v1168, 20
  %v1442 = vpop.permute.xlu0 %1441
  %1443 = vrot.lane.b32.xlu0 %v1169, 20
  %v1444 = vpop.permute.xlu0 %1443
  %1445 = vrot.lane.b32.xlu0 %v1170, 20
  %v1446 = vpop.permute.xlu0 %1445
  %1447 = vrot.lane.b32.xlu0 %v1171, 20
  %v1448 = vpop.permute.xlu0 %1447
  %1449 = vrot.lane.b32.xlu0 %v1172, 20
  %v1450 = vpop.permute.xlu0 %1449
  %1451 = vrot.lane.b32.xlu0 %v1173, 20
  %v1452 = vpop.permute.xlu0 %1451
  %1453 = vrot.lane.b32.xlu0 %v1174, 20
  %v1454 = vpop.permute.xlu0 %1453
  %1455 = vrot.lane.b32.xlu0 %v1175, 20
  %v1456 = vpop.permute.xlu0 %1455
  %1457 = vrot.lane.b32.xlu0 %v1176, 20
  %v1458 = vpop.permute.xlu0 %1457
  %1479 = vrot.lane.b32.xlu0 %v1161, 24
  %v1480 = vpop.permute.xlu0 %1479
  %1481 = vrot.lane.b32.xlu0 %v1162, 24
  %v1482 = vpop.permute.xlu0 %1481
  %1483 = vrot.lane.b32.xlu0 %v1163, 24
  %v1484 = vpop.permute.xlu0 %1483
  %1485 = vrot.lane.b32.xlu0 %v1164, 24
  %v1486 = vpop.permute.xlu0 %1485
  %1487 = vrot.lane.b32.xlu0 %v1165, 24
  %v1488 = vpop.permute.xlu0 %1487
  %1489 = vrot.lane.b32.xlu0 %v1166, 24
  %v1490 = vpop.permute.xlu0 %1489
  %1491 = vrot.lane.b32.xlu0 %v1167, 24
  %v1492 = vpop.permute.xlu0 %1491
  %1493 = vrot.lane.b32.xlu0 %v1168, 24
  %v1494 = vpop.permute.xlu0 %1493
  %1495 = vrot.lane.b32.xlu0 %v1169, 24
  %v1496 = vpop.permute.xlu0 %1495
  %1497 = vrot.lane.b32.xlu0 %v1170, 24
  %v1498 = vpop.permute.xlu0 %1497
  %1499 = vrot.lane.b32.xlu0 %v1171, 24
  %v1500 = vpop.permute.xlu0 %1499
  %1501 = vrot.lane.b32.xlu0 %v1172, 24
  %v1502 = vpop.permute.xlu0 %1501
  %1503 = vrot.lane.b32.xlu0 %v1173, 24
  %v1504 = vpop.permute.xlu0 %1503
  %1505 = vrot.lane.b32.xlu0 %v1174, 24
  %v1506 = vpop.permute.xlu0 %1505
  %1507 = vrot.lane.b32.xlu0 %v1175, 24
  %v1508 = vpop.permute.xlu0 %1507
  %1509 = vrot.lane.b32.xlu0 %v1176, 24
  %v1510 = vpop.permute.xlu0 %1509
  %1511 = vrot.lane.b32.xlu0 %v1177, 24
  %v1512 = vpop.permute.xlu0 %1511
  %1513 = vrot.lane.b32.xlu0 %v1178, 24
  %v1514 = vpop.permute.xlu0 %1513
  %1535 = vrot.lane.b32.xlu0 %v1163, 28
  %v1536 = vpop.permute.xlu0 %1535
  %1537 = vrot.lane.b32.xlu0 %v1164, 28
  %v1538 = vpop.permute.xlu0 %1537
  %1539 = vrot.lane.b32.xlu0 %v1165, 28
  %v1540 = vpop.permute.xlu0 %1539
  %1541 = vrot.lane.b32.xlu0 %v1166, 28
  %v1542 = vpop.permute.xlu0 %1541
  %1543 = vrot.lane.b32.xlu0 %v1167, 28
  %v1544 = vpop.permute.xlu0 %1543
  %1545 = vrot.lane.b32.xlu0 %v1168, 28
  %v1546 = vpop.permute.xlu0 %1545
  %1547 = vrot.lane.b32.xlu0 %v1169, 28
  %v1548 = vpop.permute.xlu0 %1547
  %1549 = vrot.lane.b32.xlu0 %v1170, 28
  %v1550 = vpop.permute.xlu0 %1549
  %1551 = vrot.lane.b32.xlu0 %v1171, 28
  %v1552 = vpop.permute.xlu0 %1551
  %1553 = vrot.lane.b32.xlu0 %v1172, 28
  %v1554 = vpop.permute.xlu0 %1553
  %1555 = vrot.lane.b32.xlu0 %v1173, 28
  %v1556 = vpop.permute.xlu0 %1555
  %1557 = vrot.lane.b32.xlu0 %v1174, 28
  %v1558 = vpop.permute.xlu0 %1557
  %1559 = vrot.lane.b32.xlu0 %v1175, 28
  %v1560 = vpop.permute.xlu0 %1559
  %1561 = vrot.lane.b32.xlu0 %v1176, 28
  %v1562 = vpop.permute.xlu0 %1561
  %1563 = vrot.lane.b32.xlu0 %v1177, 28
  %v1564 = vpop.permute.xlu0 %1563
  %1565 = vrot.lane.b32.xlu0 %v1178, 28
  %v1566 = vpop.permute.xlu0 %1565
  %1567 = vrot.lane.b32.xlu0 %v1179, 28
  %v1568 = vpop.permute.xlu0 %1567
  %1569 = vrot.lane.b32.xlu0 %v1180, 28
  %v1570 = vpop.permute.xlu0 %1569
  %vm1589 = vcmask 31744
  %v1590 = vsel %vm1589, %v1149, %v1200
  %v1591 = vsel %vm1589, %v1150, %v1202
  %v1592 = vsel %vm1589, %v1151, %v1204
  %v1593 = vsel %vm1589, %v1152, %v1206
  %v1594 = vsel %vm1589, %v1153, %v1208
  %v1595 = vsel %vm1589, %v1154, %v1210
  %v1596 = vsel %vm1589, %v1155, %v1212
  %v1597 = vsel %vm1589, %v1156, %v1214
  %v1598 = vsel %vm1589, %v1157, %v1216
  %v1599 = vsel %vm1589, %v1158, %v1218
  %v1600 = vsel %vm1589, %v1159, %v1220
  %v1601 = vsel %vm1589, %v1160, %v1222
  %v1602 = vsel %vm1589, %v1161, %v1224
  %v1603 = vsel %vm1589, %v1162, %v1226
  %v1604 = vsel %vm1589, %v1163, %v1228
  %v1605 = vsel %vm1589, %v1164, %v1230
  %v1606 = vsel %vm1589, %v1165, %v1232
  %v1607 = vsel %vm1589, %v1166, %v1234
  %vm1608 = vcmask 64512
  %v1609 = vsel %vm1608, %v1590, %v1256
  %v1610 = vsel %vm1608, %v1591, %v1258
  %v1611 = vsel %vm1608, %v1592, %v1260
  %v1612 = vsel %vm1608, %v1593, %v1262
  %v1613 = vsel %vm1608, %v1594, %v1264
  %v1614 = vsel %vm1608, %v1595, %v1266
  %v1615 = vsel %vm1608, %v1596, %v1268
  %v1616 = vsel %vm1608, %v1597, %v1270
  %v1617 = vsel %vm1608, %v1598, %v1272
  %v1618 = vsel %vm1608, %v1599, %v1274
  %v1619 = vsel %vm1608, %v1600, %v1276
  %v1620 = vsel %vm1608, %v1601, %v1278
  %v1621 = vsel %vm1608, %v1602, %v1280
  %v1622 = vsel %vm1608, %v1603, %v1282
  %v1623 = vsel %vm1608, %v1604, %v1284
  %v1624 = vsel %vm1608, %v1605, %v1286
  %v1625 = vsel %vm1608, %v1606, %v1288
  %v1626 = vsel %vm1608, %v1607, %v1290
  %vm1627 = vcmask 97280
  %v1628 = vsel %vm1627, %v1609, %v1312
  %v1629 = vsel %vm1627, %v1610, %v1314
  %v1630 = vsel %vm1627, %v1611, %v1316
  %v1631 = vsel %vm1627, %v1612, %v1318
  %v1632 = vsel %vm1627, %v1613, %v1320
  %v1633 = vsel %vm1627, %v1614, %v1322
  %v1634 = vsel %vm1627, %v1615, %v1324
  %v1635 = vsel %vm1627, %v1616, %v1326
  %v1636 = vsel %vm1627, %v1617, %v1328
  %v1637 = vsel %vm1627, %v1618, %v1330
  %v1638 = vsel %vm1627, %v1619, %v1332
  %v1639 = vsel %vm1627, %v1620, %v1334
  %v1640 = vsel %vm1627, %v1621, %v1336
  %v1641 = vsel %vm1627, %v1622, %v1338
  %v1642 = vsel %vm1627, %v1623, %v1340
  %v1643 = vsel %vm1627, %v1624, %v1342
  %v1644 = vsel %vm1627, %v1625, %v1344
  %v1645 = vsel %vm1627, %v1626, %v1346
  %vm1646 = vcmask 130048
  %v1647 = vsel %vm1646, %v1628, %v1368
  %v1648 = vsel %vm1646, %v1629, %v1370
  %v1649 = vsel %vm1646, %v1630, %v1372
  %v1650 = vsel %vm1646, %v1631, %v1374
  %v1651 = vsel %vm1646, %v1632, %v1376
  %v1652 = vsel %vm1646, %v1633, %v1378
  %v1653 = vsel %vm1646, %v1634, %v1380
  %v1654 = vsel %vm1646, %v1635, %v1382
  %v1655 = vsel %vm1646, %v1636, %v1384
  %v1656 = vsel %vm1646, %v1637, %v1386
  %v1657 = vsel %vm1646, %v1638, %v1388
  %v1658 = vsel %vm1646, %v1639, %v1390
  %v1659 = vsel %vm1646, %v1640, %v1392
  %v1660 = vsel %vm1646, %v1641, %v1394
  %v1661 = vsel %vm1646, %v1642, %v1396
  %v1662 = vsel %vm1646, %v1643, %v1398
  %v1663 = vsel %vm1646, %v1644, %v1400
  %v1664 = vsel %vm1646, %v1645, %v1402
  %vm1665 = vcmask 162816
  %v1666 = vsel %vm1665, %v1647, %v1424
  %v1667 = vsel %vm1665, %v1648, %v1426
  %v1668 = vsel %vm1665, %v1649, %v1428
  %v1669 = vsel %vm1665, %v1650, %v1430
  %v1670 = vsel %vm1665, %v1651, %v1432
  %v1671 = vsel %vm1665, %v1652, %v1434
  %v1672 = vsel %vm1665, %v1653, %v1436
  %v1673 = vsel %vm1665, %v1654, %v1438
  %v1674 = vsel %vm1665, %v1655, %v1440
  %v1675 = vsel %vm1665, %v1656, %v1442
  %v1676 = vsel %vm1665, %v1657, %v1444
  %v1677 = vsel %vm1665, %v1658, %v1446
  %v1678 = vsel %vm1665, %v1659, %v1448
  %v1679 = vsel %vm1665, %v1660, %v1450
  %v1680 = vsel %vm1665, %v1661, %v1452
  %v1681 = vsel %vm1665, %v1662, %v1454
  %v1682 = vsel %vm1665, %v1663, %v1456
  %v1683 = vsel %vm1665, %v1664, %v1458
  %vm1684 = vcmask 195584
  %v1685 = vsel %vm1684, %v1666, %v1480
  %v1686 = vsel %vm1684, %v1667, %v1482
  %v1687 = vsel %vm1684, %v1668, %v1484
  %v1688 = vsel %vm1684, %v1669, %v1486
  %v1689 = vsel %vm1684, %v1670, %v1488
  %v1690 = vsel %vm1684, %v1671, %v1490
  %v1691 = vsel %vm1684, %v1672, %v1492
  %v1692 = vsel %vm1684, %v1673, %v1494
  %v1693 = vsel %vm1684, %v1674, %v1496
  %v1694 = vsel %vm1684, %v1675, %v1498
  %v1695 = vsel %vm1684, %v1676, %v1500
  %v1696 = vsel %vm1684, %v1677, %v1502
  %v1697 = vsel %vm1684, %v1678, %v1504
  %v1698 = vsel %vm1684, %v1679, %v1506
  %v1699 = vsel %vm1684, %v1680, %v1508
  %v1700 = vsel %vm1684, %v1681, %v1510
  %v1701 = vsel %vm1684, %v1682, %v1512
  %v1702 = vsel %vm1684, %v1683, %v1514
  %vm1703 = vcmask 228352
  %v1704 = vsel %vm1703, %v1685, %v1536
  %v1705 = vsel %vm1703, %v1686, %v1538
  %v1706 = vsel %vm1703, %v1687, %v1540
  %v1707 = vsel %vm1703, %v1688, %v1542
  %v1708 = vsel %vm1703, %v1689, %v1544
  %v1709 = vsel %vm1703, %v1690, %v1546
  %v1710 = vsel %vm1703, %v1691, %v1548
  %v1711 = vsel %vm1703, %v1692, %v1550
  %v1712 = vsel %vm1703, %v1693, %v1552
  %v1713 = vsel %vm1703, %v1694, %v1554
  %v1714 = vsel %vm1703, %v1695, %v1556
  %v1715 = vsel %vm1703, %v1696, %v1558
  %v1716 = vsel %vm1703, %v1697, %v1560
  %v1717 = vsel %vm1703, %v1698, %v1562
  %v1718 = vsel %vm1703, %v1699, %v1564
  %v1719 = vsel %vm1703, %v1700, %v1566
  %v1720 = vsel %vm1703, %v1701, %v1568
  %v1721 = vsel %vm1703, %v1702, %v1570
  %v1722 = vpack.c.bf16 %v1705, %v1704
  %v1723 = vpack.c.bf16 %v1707, %v1706
  %v1724 = vpack.c.bf16 %v1709, %v1708
  %v1725 = vpack.c.bf16 %v1711, %v1710
  %v1726 = vpack.c.bf16 %v1713, %v1712
  %v1727 = vpack.c.bf16 %v1715, %v1714
  %v1728 = vpack.c.bf16 %v1717, %v1716
  %v1729 = vpack.c.bf16 %v1719, %v1718
  %v1730 = vpack.c.bf16 %v1721, %v1720
  %v1731 = vld [vmem:[%s1] sm:$0xf]
  %v1732 = vld [vmem:[%s1 + $0x4] sm:$0xf]
  %v1733 = vld [vmem:[%s1 + $0x8] sm:$0xf]
  %v1734 = vld [vmem:[%s1 + $0xc] sm:$0xf]
  %v1739 = vunpack.c.l.b16 %v1731
  %v1740 = vunpack.c.l.b16 %v1732
  %v1741 = vunpack.c.l.b16 %v1733
  %v1742 = vunpack.c.l.b16 %v1734
  %v1743 = vpack.c.b16 %v1740, %v1739
  %v1744 = vpack.c.b16 %v1742, %v1741
  %vm1747 = vcmask 261120
  %v1749 = vsel %vm1747, %v1722, 0
  %v1752 = vsel %vm1747, %v1723, 0
  %v1755 = vsel %vm1747, %v1724, 0
  %v1758 = vsel %vm1747, %v1725, 0
  %v1761 = vsel %vm1747, %v1726, 0
  %v1764 = vsel %vm1747, %v1727, 0
  %v1767 = vsel %vm1747, %v1728, 0
  %v1770 = vsel %vm1747, %v1729, 0
  %v1773 = vsel %vm1747, %v1730, 0
  %1775 = vmatpush.bf16.msra.mxu0 0
  %1776 = vmatpush.bf16.msra.mxu0 0
  %1777 = vmatpush.bf16.msra.mxu0 0
  %1778 = vmatpush.bf16.msra.mxu0 0
  %1779 = vmatpush.bf16.msra.mxu0 0
  %1780 = vmatpush.bf16.msra.mxu0 0
  %1781 = vmatpush.bf16.msra.mxu0 %v1744
  %1782 = vmatpush.bf16.msra.mxu0 %v1743
  %1783 = vmatmul.bf16.gmra.mxu0 %v1749
  %v1784 = vpop.f32.mrf.mxu0
  %v1785 = vadd.f32 0.0, %v1784
  %v1786 = vpop.f32.mrf.mxu0
  %v1787 = vadd.f32 0.0, %v1786
  %1788 = vmatmul.bf16.gmra.mxu0 %v1752
  %v1789 = vpop.f32.mrf.mxu0
  %v1790 = vadd.f32 0.0, %v1789
  %v1791 = vpop.f32.mrf.mxu0
  %v1792 = vadd.f32 0.0, %v1791
  %1793 = vmatmul.bf16.gmra.mxu0 %v1755
  %v1794 = vpop.f32.mrf.mxu0
  %v1795 = vadd.f32 0.0, %v1794
  %v1796 = vpop.f32.mrf.mxu0
  %v1797 = vadd.f32 0.0, %v1796
  %1798 = vmatmul.bf16.gmra.mxu0 %v1758
  %v1799 = vpop.f32.mrf.mxu0
  %v1800 = vadd.f32 0.0, %v1799
  %v1801 = vpop.f32.mrf.mxu0
  %v1802 = vadd.f32 0.0, %v1801
  %1803 = vmatmul.bf16.gmra.mxu0 %v1761
  %v1804 = vpop.f32.mrf.mxu0
  %v1805 = vadd.f32 0.0, %v1804
  %v1806 = vpop.f32.mrf.mxu0
  %v1807 = vadd.f32 0.0, %v1806
  %1808 = vmatmul.bf16.gmra.mxu0 %v1764
  %v1809 = vpop.f32.mrf.mxu0
  %v1810 = vadd.f32 0.0, %v1809
  %v1811 = vpop.f32.mrf.mxu0
  %v1812 = vadd.f32 0.0, %v1811
  %1813 = vmatmul.bf16.gmra.mxu0 %v1767
  %v1814 = vpop.f32.mrf.mxu0
  %v1815 = vadd.f32 0.0, %v1814
  %v1816 = vpop.f32.mrf.mxu0
  %v1817 = vadd.f32 0.0, %v1816
  %1818 = vmatmul.bf16.gmra.mxu0 %v1770
  %v1819 = vpop.f32.mrf.mxu0
  %v1820 = vadd.f32 0.0, %v1819
  %v1821 = vpop.f32.mrf.mxu0
  %v1822 = vadd.f32 0.0, %v1821
  %1823 = vmatmul.bf16.gmra.mxu0 %v1773
  %v1824 = vpop.f32.mrf.mxu0
  %v1825 = vadd.f32 0.0, %v1824
  %v1826 = vpop.f32.mrf.mxu0
  %v1827 = vadd.f32 0.0, %v1826
  %1828 = vdwg.mxu0
  %vm1829 = vcmask 523264
  %1830 = vst.msk [vmem:[#allocation3] sm:$0xff] %vm1829, %v1785
  %1831 = vst.msk [vmem:[#allocation3 + $0x8] sm:$0xff] %vm1829, %v1787
  %1832 = vst.msk [vmem:[#allocation3 + $0x10] sm:$0xff] %vm1829, %v1790
  %1833 = vst.msk [vmem:[#allocation3 + $0x18] sm:$0xff] %vm1829, %v1792
  %1834 = vst.msk [vmem:[#allocation3 + $0x20] sm:$0xff] %vm1829, %v1795
  %1835 = vst.msk [vmem:[#allocation3 + $0x28] sm:$0xff] %vm1829, %v1797
  %1836 = vst.msk [vmem:[#allocation3 + $0x30] sm:$0xff] %vm1829, %v1800
  %1837 = vst.msk [vmem:[#allocation3 + $0x38] sm:$0xff] %vm1829, %v1802
  %1838 = vst.msk [vmem:[#allocation3 + $0x40] sm:$0xff] %vm1829, %v1805
  %1839 = vst.msk [vmem:[#allocation3 + $0x48] sm:$0xff] %vm1829, %v1807
  %1840 = vst.msk [vmem:[#allocation3 + $0x50] sm:$0xff] %vm1829, %v1810
  %1841 = vst.msk [vmem:[#allocation3 + $0x58] sm:$0xff] %vm1829, %v1812
  %1842 = vst.msk [vmem:[#allocation3 + $0x60] sm:$0xff] %vm1829, %v1815
  %1843 = vst.msk [vmem:[#allocation3 + $0x68] sm:$0xff] %vm1829, %v1817
  %1844 = vst.msk [vmem:[#allocation3 + $0x70] sm:$0xff] %vm1829, %v1820
  %1845 = vst.msk [vmem:[#allocation3 + $0x78] sm:$0xff] %vm1829, %v1822
  %1846 = vst.msk [vmem:[#allocation3 + $0x80] sm:$0xff] %vm1829, %v1825
  %1847 = vst.msk [vmem:[#allocation3 + $0x88] sm:$0xff] %vm1829, %v1827
  %v1848 = vld [vmem:[%s2] sm:$0xf]
  %v1849 = vld [vmem:[%s2 + $0x4] sm:$0xf]
  %v1850 = vld [vmem:[%s2 + $0x8] sm:$0xf]
  %v1851 = vld [vmem:[%s2 + $0xc] sm:$0xf]
  %v1856 = vunpack.c.l.b16 %v1848
  %v1857 = vunpack.c.l.b16 %v1849
  %v1858 = vunpack.c.l.b16 %v1850
  %v1859 = vunpack.c.l.b16 %v1851
  %v1860 = vpack.c.b16 %v1857, %v1856
  %v1861 = vpack.c.b16 %v1859, %v1858
  %1864 = vmatpush.bf16.msra.mxu0 0
  %1865 = vmatpush.bf16.msra.mxu0 0
  %1866 = vmatpush.bf16.msra.mxu0 0
  %1867 = vmatpush.bf16.msra.mxu0 0
  %1868 = vmatpush.bf16.msra.mxu0 0
  %1869 = vmatpush.bf16.msra.mxu0 0
  %1870 = vmatpush.bf16.msra.mxu0 %v1861
  %1871 = vmatpush.bf16.msra.mxu0 %v1860
  %1872 = vmatmul.bf16.gmra.mxu0 %v1749
  %v1873 = vpop.f32.mrf.mxu0
  %v1874 = vadd.f32 0.0, %v1873
  %v1875 = vpop.f32.mrf.mxu0
  %v1876 = vadd.f32 0.0, %v1875
  %1877 = vmatmul.bf16.gmra.mxu0 %v1752
  %v1878 = vpop.f32.mrf.mxu0
  %v1879 = vadd.f32 0.0, %v1878
  %v1880 = vpop.f32.mrf.mxu0
  %v1881 = vadd.f32 0.0, %v1880
  %1882 = vmatmul.bf16.gmra.mxu0 %v1755
  %v1883 = vpop.f32.mrf.mxu0
  %v1884 = vadd.f32 0.0, %v1883
  %v1885 = vpop.f32.mrf.mxu0
  %v1886 = vadd.f32 0.0, %v1885
  %1887 = vmatmul.bf16.gmra.mxu0 %v1758
  %v1888 = vpop.f32.mrf.mxu0
  %v1889 = vadd.f32 0.0, %v1888
  %v1890 = vpop.f32.mrf.mxu0
  %v1891 = vadd.f32 0.0, %v1890
  %1892 = vmatmul.bf16.gmra.mxu0 %v1761
  %v1893 = vpop.f32.mrf.mxu0
  %v1894 = vadd.f32 0.0, %v1893
  %v1895 = vpop.f32.mrf.mxu0
  %v1896 = vadd.f32 0.0, %v1895
  %1897 = vmatmul.bf16.gmra.mxu0 %v1764
  %v1898 = vpop.f32.mrf.mxu0
  %v1899 = vadd.f32 0.0, %v1898
  %v1900 = vpop.f32.mrf.mxu0
  %v1901 = vadd.f32 0.0, %v1900
  %1902 = vmatmul.bf16.gmra.mxu0 %v1767
  %v1903 = vpop.f32.mrf.mxu0
  %v1904 = vadd.f32 0.0, %v1903
  %v1905 = vpop.f32.mrf.mxu0
  %v1906 = vadd.f32 0.0, %v1905
  %1907 = vmatmul.bf16.gmra.mxu0 %v1770
  %v1908 = vpop.f32.mrf.mxu0
  %v1909 = vadd.f32 0.0, %v1908
  %v1910 = vpop.f32.mrf.mxu0
  %v1911 = vadd.f32 0.0, %v1910
  %1912 = vmatmul.bf16.gmra.mxu0 %v1773
  %v1913 = vpop.f32.mrf.mxu0
  %v1914 = vadd.f32 0.0, %v1913
  %v1915 = vpop.f32.mrf.mxu0
  %v1916 = vadd.f32 0.0, %v1915
  %1917 = vdwg.mxu0
  %1918 = vst.msk [vmem:[#allocation4] sm:$0xff] %vm1829, %v1874
  %1919 = vst.msk [vmem:[#allocation4 + $0x8] sm:$0xff] %vm1829, %v1876
  %1920 = vst.msk [vmem:[#allocation4 + $0x10] sm:$0xff] %vm1829, %v1879
  %1921 = vst.msk [vmem:[#allocation4 + $0x18] sm:$0xff] %vm1829, %v1881
  %1922 = vst.msk [vmem:[#allocation4 + $0x20] sm:$0xff] %vm1829, %v1884
  %1923 = vst.msk [vmem:[#allocation4 + $0x28] sm:$0xff] %vm1829, %v1886
  %1924 = vst.msk [vmem:[#allocation4 + $0x30] sm:$0xff] %vm1829, %v1889
  %1925 = vst.msk [vmem:[#allocation4 + $0x38] sm:$0xff] %vm1829, %v1891
  %1926 = vst.msk [vmem:[#allocation4 + $0x40] sm:$0xff] %vm1829, %v1894
  %1927 = vst.msk [vmem:[#allocation4 + $0x48] sm:$0xff] %vm1829, %v1896
  %1928 = vst.msk [vmem:[#allocation4 + $0x50] sm:$0xff] %vm1829, %v1899
  %1929 = vst.msk [vmem:[#allocation4 + $0x58] sm:$0xff] %vm1829, %v1901
  %1930 = vst.msk [vmem:[#allocation4 + $0x60] sm:$0xff] %vm1829, %v1904
  %1931 = vst.msk [vmem:[#allocation4 + $0x68] sm:$0xff] %vm1829, %v1906
  %1932 = vst.msk [vmem:[#allocation4 + $0x70] sm:$0xff] %vm1829, %v1909
  %1933 = vst.msk [vmem:[#allocation4 + $0x78] sm:$0xff] %vm1829, %v1911
  %1934 = vst.msk [vmem:[#allocation4 + $0x80] sm:$0xff] %vm1829, %v1914
  %1935 = vst.msk [vmem:[#allocation4 + $0x88] sm:$0xff] %vm1829, %v1916
  %v1936 = vld [vmem:[%s3] sm:$0xf]
  %v1937 = vld [vmem:[%s4] sm:$0xf]
  loop: start=0, step=1, limit=9
  $region22: #{dprnn_block_forward.7} parent=0 // loop_pre_header
    _
  $region23: #{dprnn_block_forward.7} parent=0 // loop_header
    %s1939 = sphi 0, %s1943
    %p1940 = scmp.ge.s32.totalorder %s1939, 9
    %v1944 = vphi 0.0, %v2090
    %v1945 = vphi 0.0, %v2091
    %v1946 = vphi 0.0, %v2273
    %v1947 = vphi 0.0, %v2274
  $region24: #{dprnn_block_forward.7} parent=0 // loop_header_branch
    %1942 = sbr.rel (%p1940) target = $region28
  $region25: #{dprnn_block_forward.7} parent=0 // loop_body
    %s1948 = smul.u32 %s1939, 16
    %s1949 = scalar_lea.vmem [#allocation3], %s1948
    %v1950 = vld [vmem:[%s1949] sm:$0xff]
    %v1951 = vld [vmem:[%s1949 + $0x8] sm:$0xff]
    %v1952 = vperm.slane %v1936, 0
    %1955 = vrot.lane.b32.xlu0 %v1944, 112
    %v1956 = vpop.permute.xlu0 %1955
    %1957 = vrot.lane.b32.xlu0 %v1945, 112
    %v1958 = vpop.permute.xlu0 %1957
    %v1961 = vmul.f32 %v1952, %v1956
    %v1962 = vmul.f32 %v1952, %v1958
    %1965 = vrot.lane.b32.xlu0 %v1961, 16
    %v1966 = vpop.permute.xlu0 %1965
    %1967 = vrot.lane.b32.xlu0 %v1962, 16
    %v1968 = vpop.permute.xlu0 %1967
    %v1971 = vadd.f32 %v1950, %v1966
    %v1972 = vadd.f32 %v1951, %v1968
    %v1973 = vperm.slane %v1937, 0
    %1975 = vrot.lane.b32.xlu0 %v1973, 16
    %v1976 = vpop.permute.xlu0 %1975
    %v1978 = vadd.f32 %v1971, %v1976
    %v1979 = vadd.f32 %v1972, %v1976
    %v1980 = vxor.u32 %v1978, 2147483648
    %v1981 = vxor.u32 %v1979, 2147483648
    %v1982 = vmul.f32 %v1980, 1.442695
    %v1983 = vpow.pop %v1982
    %v1984 = vmul.f32 %v1981, 1.442695
    %v1985 = vpow.pop %v1984
    %v1986 = vadd.f32 %v1983, 1.0
    %v1987 = vadd.f32 %v1985, 1.0
    %v1988 = vrcp.pop %v1986
    %v1989 = vmul.f32 %v1986, %v1988
    %v1990 = vsub.f32 1.0, %v1989
    %v1991 = vmul.f32 %v1988, %v1990
    %v1992 = vadd.f32 %v1988, %v1991
    %vm1993 = vweird.f32 %v1986
    %vm1994 = vweird.f32 %v1988
    %vm1995 = vmor %vm1993, %vm1994
    %v1996 = vsel %vm1995, %v1988, %v1992
    %v1997 = vand.u32 2147483647, %v1986
    %vm1998 = vcmp.eq.f32.partialorder %v1997, 8.507059e+37
    %v1999 = vand.u32 %v1986, 2147483648
    %v2000 = vor.u32 1.1754944e-38, %v1999
    %v2001 = vsel %vm1998, %v2000, %v1996
    %v2002 = vmul.f32 1.0, %v2001
    %v2003 = vrcp.pop %v1987
    %v2004 = vmul.f32 %v1987, %v2003
    %v2005 = vsub.f32 1.0, %v2004
    %v2006 = vmul.f32 %v2003, %v2005
    %v2007 = vadd.f32 %v2003, %v2006
    %vm2008 = vweird.f32 %v1987
    %vm2009 = vweird.f32 %v2003
    %vm2010 = vmor %vm2008, %vm2009
    %v2011 = vsel %vm2010, %v2003, %v2007
    %v2012 = vand.u32 2147483647, %v1987
    %vm2013 = vcmp.eq.f32.partialorder %v2012, 8.507059e+37
    %v2014 = vand.u32 %v1987, 2147483648
    %v2015 = vor.u32 1.1754944e-38, %v2014
    %v2016 = vsel %vm2013, %v2015, %v2011
    %v2017 = vmul.f32 1.0, %v2016
    %v2018 = vperm.slane %v1936, 1
    %v2019 = vmul.f32 %v2018, %v1956
    %v2020 = vmul.f32 %v2018, %v1958
    %2023 = vrot.lane.b32.xlu0 %v2019, 32
    %v2024 = vpop.permute.xlu0 %2023
    %2025 = vrot.lane.b32.xlu0 %v2020, 32
    %v2026 = vpop.permute.xlu0 %2025
    %v2029 = vadd.f32 %v1950, %v2024
    %v2030 = vadd.f32 %v1951, %v2026
    %v2031 = vperm.slane %v1937, 1
    %2033 = vrot.lane.b32.xlu0 %v2031, 32
    %v2034 = vpop.permute.xlu0 %2033
    %v2036 = vadd.f32 %v2029, %v2034
    %v2037 = vadd.f32 %v2030, %v2034
    %v2038 = vxor.u32 %v2036, 2147483648
    %v2039 = vxor.u32 %v2037, 2147483648
    %v2040 = vmul.f32 %v2038, 1.442695
    %v2041 = vpow.pop %v2040
    %v2042 = vmul.f32 %v2039, 1.442695
    %v2043 = vpow.pop %v2042
    %v2044 = vadd.f32 %v2041, 1.0
    %v2045 = vadd.f32 %v2043, 1.0
    %v2046 = vrcp.pop %v2044
    %v2047 = vmul.f32 %v2044, %v2046
    %v2048 = vsub.f32 1.0, %v2047
    %v2049 = vmul.f32 %v2046, %v2048
    %v2050 = vadd.f32 %v2046, %v2049
    %vm2051 = vweird.f32 %v2044
    %vm2052 = vweird.f32 %v2046
    %vm2053 = vmor %vm2051, %vm2052
    %v2054 = vsel %vm2053, %v2046, %v2050
    %v2055 = vand.u32 2147483647, %v2044
    %vm2056 = vcmp.eq.f32.partialorder %v2055, 8.507059e+37
    %v2057 = vand.u32 %v2044, 2147483648
    %v2058 = vor.u32 1.1754944e-38, %v2057
    %v2059 = vsel %vm2056, %v2058, %v2054
    %v2060 = vmul.f32 1.0, %v2059
    %v2061 = vrcp.pop %v2045
    %v2062 = vmul.f32 %v2045, %v2061
    %v2063 = vsub.f32 1.0, %v2062
    %v2064 = vmul.f32 %v2061, %v2063
    %v2065 = vadd.f32 %v2061, %v2064
    %vm2066 = vweird.f32 %v2045
    %vm2067 = vweird.f32 %v2061
    %vm2068 = vmor %vm2066, %vm2067
    %v2069 = vsel %vm2068, %v2061, %v2065
    %v2070 = vand.u32 2147483647, %v2045
    %vm2071 = vcmp.eq.f32.partialorder %v2070, 8.507059e+37
    %v2072 = vand.u32 %v2045, 2147483648
    %v2073 = vor.u32 1.1754944e-38, %v2072
    %v2074 = vsel %vm2071, %v2073, %v2069
    %v2075 = vmul.f32 1.0, %v2074
    %v2076 = vmul.f32 %v2002, %v1944
    %v2077 = vmul.f32 %v2017, %v1945
    %v2078 = vsub.f32 1.0, %v2002
    %v2079 = vsub.f32 1.0, %v2017
    %2082 = vrot.lane.b32.xlu0 %v1950, 16
    %v2083 = vpop.permute.xlu0 %2082
    %2084 = vrot.lane.b32.xlu0 %v1951, 16
    %v2085 = vpop.permute.xlu0 %2084
    %v2088 = vmul.f32 %v2078, %v2083
    %v2089 = vmul.f32 %v2079, %v2085
    %v2090 = vadd.f32 %v2076, %v2088
    %v2091 = vadd.f32 %v2077, %v2089
    %2094 = vrot.lane.b32.xlu0 %v2090, 16
    %v2095 = vpop.permute.xlu0 %2094
    %2096 = vrot.lane.b32.xlu0 %v2091, 16
    %v2097 = vpop.permute.xlu0 %2096
    %v2100 = vmul.f32 %v2060, %v2095
    %v2101 = vmul.f32 %v2075, %v2097
    %v2102 = vsub.f32 1.0, %v2060
    %v2103 = vsub.f32 1.0, %v2075
    %2104 = vrot.lane.b32.xlu0 %v1950, 112
    %v2105 = vpop.permute.xlu0 %2104
    %2106 = vrot.lane.b32.xlu0 %v1951, 112
    %v2107 = vpop.permute.xlu0 %2106
    %v2110 = vmul.f32 %v2102, %v2105
    %v2111 = vmul.f32 %v2103, %v2107
    %v2112 = vadd.f32 %v2100, %v2110
    %v2113 = vadd.f32 %v2101, %v2111
    %v2114 = vpack.c.bf16 %v2112, %v2112
    %v2115 = vpack.c.bf16 %v2113, %v2113
    %2118 = vrot.lane.b32.xlu0 %v2114, 96
    %v2119 = vpop.permute.xlu0 %2118
    %2120 = vrot.lane.b32.xlu0 %v2115, 96
    %v2121 = vpop.permute.xlu0 %2120
    %s2124 = smul.u32 %s1939, 2
    %s2125 = smul.addr %s2124, 4
    %s2126 = scalar_lea.vmem %s5, %s2125
    %vm2127 = vcmask 125952
    %2128 = vst.msk [vmem:[%s2126] sm:$0xf] %vm2127, %v2119
    %2129 = vst.msk [vmem:[%s2126 + $0x4] sm:$0xf] %vm2127, %v2121
    %s2130 = ssub.s32 8, %s1939
    %s2131 = smul.u32 %s2130, 16
    %s2132 = scalar_lea.vmem [#allocation4], %s2131
    %v2133 = vld [vmem:[%s2132] sm:$0xff]
    %v2134 = vld [vmem:[%s2132 + $0x8] sm:$0xff]
    %v2135 = vperm.slane %v1936, 2
    %2138 = vrot.lane.b32.xlu0 %v1946, 112
    %v2139 = vpop.permute.xlu0 %2138
    %2140 = vrot.lane.b32.xlu0 %v1947, 112
    %v2141 = vpop.permute.xlu0 %2140
    %v2144 = vmul.f32 %v2135, %v2139
    %v2145 = vmul.f32 %v2135, %v2141
    %2148 = vrot.lane.b32.xlu0 %v2144, 16
    %v2149 = vpop.permute.xlu0 %2148
    %2150 = vrot.lane.b32.xlu0 %v2145, 16
    %v2151 = vpop.permute.xlu0 %2150
    %v2154 = vadd.f32 %v2133, %v2149
    %v2155 = vadd.f32 %v2134, %v2151
    %v2156 = vperm.slane %v1937, 2
    %2158 = vrot.lane.b32.xlu0 %v2156, 16
    %v2159 = vpop.permute.xlu0 %2158
    %v2161 = vadd.f32 %v2154, %v2159
    %v2162 = vadd.f32 %v2155, %v2159
    %v2163 = vxor.u32 %v2161, 2147483648
    %v2164 = vxor.u32 %v2162, 2147483648
    %v2165 = vmul.f32 %v2163, 1.442695
    %v2166 = vpow.pop %v2165
    %v2167 = vmul.f32 %v2164, 1.442695
    %v2168 = vpow.pop %v2167
    %v2169 = vadd.f32 %v2166, 1.0
    %v2170 = vadd.f32 %v2168, 1.0
    %v2171 = vrcp.pop %v2169
    %v2172 = vmul.f32 %v2169, %v2171
    %v2173 = vsub.f32 1.0, %v2172
    %v2174 = vmul.f32 %v2171, %v2173
    %v2175 = vadd.f32 %v2171, %v2174
    %vm2176 = vweird.f32 %v2169
    %vm2177 = vweird.f32 %v2171
    %vm2178 = vmor %vm2176, %vm2177
    %v2179 = vsel %vm2178, %v2171, %v2175
    %v2180 = vand.u32 2147483647, %v2169
    %vm2181 = vcmp.eq.f32.partialorder %v2180, 8.507059e+37
    %v2182 = vand.u32 %v2169, 2147483648
    %v2183 = vor.u32 1.1754944e-38, %v2182
    %v2184 = vsel %vm2181, %v2183, %v2179
    %v2185 = vmul.f32 1.0, %v2184
    %v2186 = vrcp.pop %v2170
    %v2187 = vmul.f32 %v2170, %v2186
    %v2188 = vsub.f32 1.0, %v2187
    %v2189 = vmul.f32 %v2186, %v2188
    %v2190 = vadd.f32 %v2186, %v2189
    %vm2191 = vweird.f32 %v2170
    %vm2192 = vweird.f32 %v2186
    %vm2193 = vmor %vm2191, %vm2192
    %v2194 = vsel %vm2193, %v2186, %v2190
    %v2195 = vand.u32 2147483647, %v2170
    %vm2196 = vcmp.eq.f32.partialorder %v2195, 8.507059e+37
    %v2197 = vand.u32 %v2170, 2147483648
    %v2198 = vor.u32 1.1754944e-38, %v2197
    %v2199 = vsel %vm2196, %v2198, %v2194
    %v2200 = vmul.f32 1.0, %v2199
    %v2201 = vperm.slane %v1936, 3
    %v2202 = vmul.f32 %v2201, %v2139
    %v2203 = vmul.f32 %v2201, %v2141
    %2206 = vrot.lane.b32.xlu0 %v2202, 32
    %v2207 = vpop.permute.xlu0 %2206
    %2208 = vrot.lane.b32.xlu0 %v2203, 32
    %v2209 = vpop.permute.xlu0 %2208
    %v2212 = vadd.f32 %v2133, %v2207
    %v2213 = vadd.f32 %v2134, %v2209
    %v2214 = vperm.slane %v1937, 3
    %2216 = vrot.lane.b32.xlu0 %v2214, 32
    %v2217 = vpop.permute.xlu0 %2216
    %v2219 = vadd.f32 %v2212, %v2217
    %v2220 = vadd.f32 %v2213, %v2217
    %v2221 = vxor.u32 %v2219, 2147483648
    %v2222 = vxor.u32 %v2220, 2147483648
    %v2223 = vmul.f32 %v2221, 1.442695
    %v2224 = vpow.pop %v2223
    %v2225 = vmul.f32 %v2222, 1.442695
    %v2226 = vpow.pop %v2225
    %v2227 = vadd.f32 %v2224, 1.0
    %v2228 = vadd.f32 %v2226, 1.0
    %v2229 = vrcp.pop %v2227
    %v2230 = vmul.f32 %v2227, %v2229
    %v2231 = vsub.f32 1.0, %v2230
    %v2232 = vmul.f32 %v2229, %v2231
    %v2233 = vadd.f32 %v2229, %v2232
    %vm2234 = vweird.f32 %v2227
    %vm2235 = vweird.f32 %v2229
    %vm2236 = vmor %vm2234, %vm2235
    %v2237 = vsel %vm2236, %v2229, %v2233
    %v2238 = vand.u32 2147483647, %v2227
    %vm2239 = vcmp.eq.f32.partialorder %v2238, 8.507059e+37
    %v2240 = vand.u32 %v2227, 2147483648
    %v2241 = vor.u32 1.1754944e-38, %v2240
    %v2242 = vsel %vm2239, %v2241, %v2237
    %v2243 = vmul.f32 1.0, %v2242
    %v2244 = vrcp.pop %v2228
    %v2245 = vmul.f32 %v2228, %v2244
    %v2246 = vsub.f32 1.0, %v2245
    %v2247 = vmul.f32 %v2244, %v2246
    %v2248 = vadd.f32 %v2244, %v2247
    %vm2249 = vweird.f32 %v2228
    %vm2250 = vweird.f32 %v2244
    %vm2251 = vmor %vm2249, %vm2250
    %v2252 = vsel %vm2251, %v2244, %v2248
    %v2253 = vand.u32 2147483647, %v2228
    %vm2254 = vcmp.eq.f32.partialorder %v2253, 8.507059e+37
    %v2255 = vand.u32 %v2228, 2147483648
    %v2256 = vor.u32 1.1754944e-38, %v2255
    %v2257 = vsel %vm2254, %v2256, %v2252
    %v2258 = vmul.f32 1.0, %v2257
    %v2259 = vmul.f32 %v2185, %v1946
    %v2260 = vmul.f32 %v2200, %v1947
    %v2261 = vsub.f32 1.0, %v2185
    %v2262 = vsub.f32 1.0, %v2200
    %2265 = vrot.lane.b32.xlu0 %v2133, 16
    %v2266 = vpop.permute.xlu0 %2265
    %2267 = vrot.lane.b32.xlu0 %v2134, 16
    %v2268 = vpop.permute.xlu0 %2267
    %v2271 = vmul.f32 %v2261, %v2266
    %v2272 = vmul.f32 %v2262, %v2268
    %v2273 = vadd.f32 %v2259, %v2271
    %v2274 = vadd.f32 %v2260, %v2272
    %2277 = vrot.lane.b32.xlu0 %v2273, 16
    %v2278 = vpop.permute.xlu0 %2277
    %2279 = vrot.lane.b32.xlu0 %v2274, 16
    %v2280 = vpop.permute.xlu0 %2279
    %v2283 = vmul.f32 %v2243, %v2278
    %v2284 = vmul.f32 %v2258, %v2280
    %v2285 = vsub.f32 1.0, %v2243
    %v2286 = vsub.f32 1.0, %v2258
    %2287 = vrot.lane.b32.xlu0 %v2133, 112
    %v2288 = vpop.permute.xlu0 %2287
    %2289 = vrot.lane.b32.xlu0 %v2134, 112
    %v2290 = vpop.permute.xlu0 %2289
    %v2293 = vmul.f32 %v2285, %v2288
    %v2294 = vmul.f32 %v2286, %v2290
    %v2295 = vadd.f32 %v2283, %v2293
    %v2296 = vadd.f32 %v2284, %v2294
    %v2297 = vpack.c.bf16 %v2295, %v2295
    %v2298 = vpack.c.bf16 %v2296, %v2296
    %2301 = vrot.lane.b32.xlu0 %v2297, 96
    %v2302 = vpop.permute.xlu0 %2301
    %2303 = vrot.lane.b32.xlu0 %v2298, 96
    %v2304 = vpop.permute.xlu0 %2303
    %s2307 = smul.u32 %s2130, 2
    %s2308 = smul.addr %s2307, 4
    %s2309 = scalar_lea.vmem %s6, %s2308
    %2310 = vst.msk [vmem:[%s2309] sm:$0xf] %vm2127, %v2302
    %2311 = vst.msk [vmem:[%s2309 + $0x4] sm:$0xf] %vm2127, %v2304
  $region26: #{dprnn_block_forward.7} parent=0 // loop_footer
    %s1943 = sadd.s32 1, %s1939
  $region27: #{dprnn_block_forward.7} parent=0 // loop_footer_branch
    %1938 = sbr.rel target = $region23
  $region28: #{dprnn_block_forward.7} parent=0 // loop_exit
    _
  // Predicated region
  $region29: #{dprnn_block_forward.7} parent=0 // pred_check
    _
  $region30: #{dprnn_block_forward.7} parent=0 // pred_check_branch
    %2313 = sbr.rel (0) target = $region32
  $region31: #{dprnn_block_forward.7} parent=0 // pred_region
    _
  $region32: #{dprnn_block_forward.7} parent=0 // pred_fallthru
    _
  // Predicated region
  $region33: #{dprnn_block_forward.7} parent=0 // pred_check
    _
  $region34: #{dprnn_block_forward.7} parent=0 // pred_check_branch
    %2315 = sbr.rel (0) target = $region36
  $region35: #{dprnn_block_forward.7} parent=0 // pred_region
    _
  $region36: #{dprnn_block_forward.7} parent=0 // pred_fallthru
    _
  // Predicated region
  $region37: #{dprnn_block_forward.7} parent=0 // pred_check
    _
  $region38: #{dprnn_block_forward.7} parent=0 // pred_check_branch
    %2317 = sbr.rel (0) target = $region40
  $region39: #{dprnn_block_forward.7} parent=0 // pred_region
    _
  $region40: #{dprnn_block_forward.7} parent=0 // pred_fallthru
    _
  // Predicated region
  $region41: #{dprnn_block_forward.7} parent=0 // pred_check
    _
  $region42: #{dprnn_block_forward.7} parent=0 // pred_check_branch
    %2319 = sbr.rel (0) target = $region44
  $region43: #{dprnn_block_forward.7} parent=0 // pred_region
    _
  $region44: #{dprnn_block_forward.7} parent=0 // pred_fallthru
    _

</llo_original>
